<compile_context>
chip_gen: v6e
topology: v6e:2x2x1
jax: 0.10.0
libtpu: 0.0.40
codegen_flags: <defaults>
</compile_context>

<pallas_src>
import functools
import math

import jax
import jax.numpy as jnp
from jax.experimental import pallas as pl
from jax.experimental.pallas import tpu as pltpu

ACT_DTYPE = jnp.bfloat16     # intermediate activations stored in HBM
GN_GROUPS = 32
GN_EPS = 1e-6                # matches reference Normalize(eps=1e-06)


# ----------------------------------------------------------------------------
# shared in-kernel helpers (operate on VMEM values, not refs)
# ----------------------------------------------------------------------------

def _gn_normalize(x, gamma, beta, gm, gmT, ngroups, eps):
    """GroupNorm(32) on x (N, C); gm: (C, G) indicator, gmT: (G, C)."""
    n_per_group = x.shape[0] * (x.shape[1] // ngroups)
    inv_n = 1.0 / n_per_group
    csum = jnp.sum(x, axis=0, keepdims=True)                                 # (1, C)
    mean_g = jnp.dot(csum, gm, preferred_element_type=jnp.float32) * inv_n   # (1, G)
    mean_c = jnp.dot(mean_g, gmT, preferred_element_type=jnp.float32)        # (1, C)
    xc = x - mean_c
    csq = jnp.sum(xc * xc, axis=0, keepdims=True)                            # (1, C)
    var_g = jnp.dot(csq, gm, preferred_element_type=jnp.float32) * inv_n     # (1, G)
    inv_g = jax.lax.rsqrt(var_g + eps)
    inv_c = jnp.dot(inv_g, gmT, preferred_element_type=jnp.float32)          # (1, C)
    return xc * inv_c * gamma + beta


_GM_CACHE = {}


def _group_matrices(C, G=GN_GROUPS):
    """Cached (C,G) group-indicator matrix and its transpose."""
    if C not in _GM_CACHE:
        gm = (jnp.arange(C)[:, None] // (C // G) == jnp.arange(G)[None, :]
              ).astype(jnp.float32)
        _GM_CACHE[C] = (gm, jnp.transpose(gm))
    return _GM_CACHE[C]


# ----------------------------------------------------------------------------
# Pallas kernels
# ----------------------------------------------------------------------------

def _conv3x3_kernel(*refs, apply_gn, has_res, ngroups, eps):
    """[GroupNorm+SiLU ->] 3x3 stride-1 pad-1 conv [-> + residual], one batch element.

    refs (in order): x (1,H,W,Cin),
                     [gamma (1,Cin), beta (1,Cin), gm (Cin,G), gmT (G,Cin)],
                     w (3, 3*Cin, Cout) bf16, b (1,Cout) f32,
                     [res (1,H,W,Cout)],
                     o (1,H,W,Cout)
    """
    i = 0
    x_ref = refs[i]; i += 1
    if apply_gn:
        gamma_ref, beta_ref, gm_ref, gmT_ref = refs[i:i + 4]; i += 4
    w_ref = refs[i]; i += 1
    b_ref = refs[i]; i += 1
    if has_res:
        res_ref = refs[i]; i += 1
    o_ref = refs[i]

    H, W, Cout = o_ref.shape[1], o_ref.shape[2], o_ref.shape[3]
    Cin = x_ref.shape[3]

    x = x_ref[0].astype(jnp.float32)                       # (H, W, Cin)
    if apply_gn:
        xn = _gn_normalize(x.reshape(H * W, Cin), gamma_ref[...], beta_ref[...],
                           gm_ref[...], gmT_ref[...], ngroups, eps)
        xn = xn * jax.nn.sigmoid(xn)                       # fused SiLU nonlinearity
        x = xn.reshape(H, W, Cin)
    xb = x.astype(jnp.bfloat16)

    # zero halo built in VMEM AFTER norm/swish (matches torch conv zero padding)
    zr = jnp.zeros((1, W, Cin), jnp.bfloat16)
    xb = jnp.concatenate([zr, xb, zr], axis=0)             # (H+2, W, Cin)
    zc = jnp.zeros((H + 2, 1, Cin), jnp.bfloat16)
    xb = jnp.concatenate([zc, xb, zc], axis=1)             # (H+2, W+2, Cin)

    acc = jnp.zeros((H * W, Cout), jnp.float32)
    for dy in range(3):
        rows = xb[dy:dy + H]                               # (H, W+2, Cin)
        patch = jnp.concatenate(
            [rows[:, 0:W], rows[:, 1:W + 1], rows[:, 2:W + 2]], axis=-1)  # (H, W, 3Cin)
        acc = acc + jnp.dot(patch.reshape(H * W, 3 * Cin), w_ref[dy],
                            preferred_element_type=jnp.float32)
    out = (acc + b_ref[...]).reshape(H, W, Cout)
    if has_res:
        out = out + res_ref[0].astype(jnp.float32)         # fused skip connection
    o_ref[0] = out.astype(o_ref.dtype)


def _downsample_kernel(x00_ref, x01_ref, x10_ref, x11_ref, w_ref, b_ref, o_ref):
    """3x3 stride-2 conv (torch pad (0,1,0,1)) from 4 even/odd parity views.

    x??_ref: (1, Ho+1, Wo+1, Cin); w_ref: (3, 3*Cin, Cout) bf16; o_ref: (1, Ho, Wo, Cout)
    """
    Ho, Wo, Cout = o_ref.shape[1], o_ref.shape[2], o_ref.shape[3]
    Cin = x00_ref.shape[3]
    views = ((x00_ref, x01_ref), (x10_ref, x11_ref))
    acc = jnp.zeros((Ho * Wo, Cout), jnp.float32)
    for dy in range(3):
        slabs = []
        for dx in range(3):
            r = views[dy % 2][dx % 2]
            slabs.append(
                r[0, dy // 2:dy // 2 + Ho, dx // 2:dx // 2 + Wo, :].astype(jnp.bfloat16))
        patch = jnp.concatenate(slabs, axis=-1).reshape(Ho * Wo, 3 * Cin)
        acc = acc + jnp.dot(patch, w_ref[dy], preferred_element_type=jnp.float32)
    o_ref[0] = ((acc + b_ref[...]).reshape(Ho, Wo, Cout)).astype(o_ref.dtype)


def _matmul_bias_kernel(x_ref, w_ref, b_ref, o_ref):
    """o = x @ w + b.  x_ref: (1, tn, K), w_ref: (K, C) bf16, b_ref: (1, C)."""
    o_ref[0] = (jnp.dot(x_ref[0].astype(jnp.bfloat16), w_ref[...],
                        preferred_element_type=jnp.float32) + b_ref[...]
                ).astype(o_ref.dtype)


def _attn_block_kernel(x_ref, gamma_ref, beta_ref, gm_ref, gmT_ref,
                       wq_ref, bq_ref, wk_ref, bk_ref, wv_ref, bv_ref,
                       wp_ref, bp_ref, o_ref, *, ngroups, eps, scale):
    """Entire AttnBlock for one batch element: GN -> q/k/v -> softmax attn ->
    proj_out -> + residual.  x_ref/o_ref: (1, N, C); weights (C, C) bf16.
    TODO(synk): KV-tiled (flash-style) variant for N >= 2048 to bound VMEM on v7x.
    """
    x = x_ref[0].astype(jnp.float32)                                  # (N, C)
    h = _gn_normalize(x, gamma_ref[...], beta_ref[...],
                      gm_ref[...], gmT_ref[...], ngroups, eps)
    hb = h.astype(jnp.bfloat16)
    q = (jnp.dot(hb, wq_ref[...], preferred_element_type=jnp.float32)
         + bq_ref[...]) * scale                                       # scale folded into q
    k = jnp.dot(hb, wk_ref[...], preferred_element_type=jnp.float32) + bk_ref[...]
    v = jnp.dot(hb, wv_ref[...], preferred_element_type=jnp.float32) + bv_ref[...]
    # q @ k^T without an HBM transpose ("NT" dot_general orientation).
    s = jax.lax.dot_general(q.astype(jnp.bfloat16), k.astype(jnp.bfloat16),
                            (((1,), (1,)), ((), ())),
                            preferred_element_type=jnp.float32)       # (N, N)
    s = s - jnp.max(s, axis=-1, keepdims=True)
    p = jnp.exp(s)
    inv = pl.reciprocal(jnp.sum(p, axis=-1, keepdims=True), approx=True)
    pb = (p * inv).astype(jnp.bfloat16)                               # bf16 probs for PV
    o = jnp.dot(pb, v.astype(jnp.bfloat16), preferred_element_type=jnp.float32)
    out = x + jnp.dot(o.astype(jnp.bfloat16), wp_ref[...],
                      preferred_element_type=jnp.float32) + bp_ref[...]
    o_ref[0] = out.astype(o_ref.dtype)


def _combine_kernel(sel_ref, hc_ref, hm_ref, hf_ref, o_ref):
    """h = select(sel) from {coarse(up4), medium(up2), fine} sources (already at fine res)."""
    sel = sel_ref[0]                                                  # (H, W, 1) int32
    hc = hc_ref[0].astype(jnp.float32)
    hm = hm_ref[0].astype(jnp.float32)
    hf = hf_ref[0].astype(jnp.float32)
    o_ref[0] = (jnp.where(sel == 0, hc, 0.0)
                + jnp.where(sel == 1, hm, 0.0)
                + jnp.where(sel == 2, hf, 0.0))


# ----------------------------------------------------------------------------
# Pallas-call wrappers (per-op)
# ----------------------------------------------------------------------------

def conv3x3_op(x, p, gn=None, residual=None):
    """x: (B,H,W,Cin) -> (B,H,W,Cout) 3x3 stride-1 pad-1 conv.
    If `gn` is given, GroupNorm(32)+SiLU of the input is fused in-kernel.
    If `residual` is given it is added to the conv output (fused skip)."""
    B, H, W, Cin = x.shape
    Cout = p['w'].shape[-1]
    apply_gn = gn is not None
    has_res = residual is not None

    in_specs = [pl.BlockSpec((1, H, W, Cin), lambda i: (i, 0, 0, 0))]
    args = [x]
    if apply_gn:
        gm, gmT = _group_matrices(Cin)
        in_specs += [pl.BlockSpec((1, Cin), lambda i: (0, 0)),
                     pl.BlockSpec((1, Cin), lambda i: (0, 0)),
                     pl.BlockSpec((Cin, GN_GROUPS), lambda i: (0, 0)),
                     pl.BlockSpec((GN_GROUPS, Cin), lambda i: (0, 0))]
        args += [gn['gamma'], gn['beta'], gm, gmT]
    in_specs += [pl.BlockSpec((3, 3 * Cin, Cout), lambda i: (0, 0, 0)),
                 pl.BlockSpec((1, Cout), lambda i: (0, 0))]
    args += [p['w'], p['b']]
    if has_res:
        in_specs.append(pl.BlockSpec((1, H, W, Cout), lambda i: (i, 0, 0, 0)))
        args.append(residual)

    return pl.pallas_call(
        functools.partial(_conv3x3_kernel, apply_gn=apply_gn, has_res=has_res,
                          ngroups=GN_GROUPS, eps=GN_EPS),
        out_shape=jax.ShapeDtypeStruct((B, H, W, Cout), ACT_DTYPE),
        grid=(B,),
        in_specs=in_specs,
        out_specs=pl.BlockSpec((1, H, W, Cout), lambda i: (i, 0, 0, 0)),
        compiler_params=pltpu.CompilerParams(dimension_semantics=("parallel",)),
    )(*args)


def conv1x1_op(x, p):
    """1x1 conv (nin_shortcut): per-pixel matmul + bias."""
    B, H, W, Cin = x.shape
    Cout = p['w'].shape[-1]
    N = H * W
    tn = N
    while tn % 2 == 0 and tn > 4096:
        tn //= 2
    out = pl.pallas_call(
        _matmul_bias_kernel,
        out_shape=jax.ShapeDtypeStruct((B, N, Cout), ACT_DTYPE),
        grid=(B, N // tn),
        in_specs=[pl.BlockSpec((1, tn, Cin), lambda i, j: (i, j, 0)),
                  pl.BlockSpec((Cin, Cout), lambda i, j: (0, 0)),
                  pl.BlockSpec((1, Cout), lambda i, j: (0, 0))],
        out_specs=pl.BlockSpec((1, tn, Cout), lambda i, j: (i, j, 0)),
        compiler_params=pltpu.CompilerParams(
            dimension_semantics=("parallel", "parallel")),
    )(x.reshape(B, N, Cin), p['w'], p['b'])
    return out.reshape(B, H, W, Cout)


def downsample_op(x, p):
    """3x3 stride-2 conv with torch pad (0,1,0,1).
    TODO(synk): move the parity split / pad into the kernel (strided VMEM loads);
    tensors here are small so it is kept as cheap XLA slicing."""
    B, H, W, Cin = x.shape
    Cout = p['w'].shape[-1]
    Ho, Wo = H // 2, W // 2
    xp = jnp.pad(x, ((0, 0), (0, 2), (0, 2), (0, 0)))   # extra zero row/col never read
    parts = [xp[:, dy::2, dx::2, :] for dy in range(2) for dx in range(2)]
    return pl.pallas_call(
        _downsample_kernel,
        out_shape=jax.ShapeDtypeStruct((B, Ho, Wo, Cout), ACT_DTYPE),
        grid=(B,),
        in_specs=[pl.BlockSpec((1, Ho + 1, Wo + 1, Cin), lambda i: (i, 0, 0, 0))] * 4
                 + [pl.BlockSpec((3, 3 * Cin, Cout), lambda i: (0, 0, 0)),
                    pl.BlockSpec((1, Cout), lambda i: (0, 0))],
        out_specs=pl.BlockSpec((1, Ho, Wo, Cout), lambda i: (i, 0, 0, 0)),
        compiler_params=pltpu.CompilerParams(dimension_semantics=("parallel",)),
    )(*parts, p['w'], p['b'])


def attn_block_op(x, p, num_groups=GN_GROUPS, eps=GN_EPS):
    """Fully fused AttnBlock (norm + qkv + attention + proj + residual)."""
    B, H, W, C = x.shape
    N = H * W
    gm, gmT = _group_matrices(C)
    scale = 1.0 / math.sqrt(C)
    cc = lambda: pl.BlockSpec((C, C), lambda i: (0, 0))
    c1 = lambda: pl.BlockSpec((1, C), lambda i: (0, 0))
    out = pl.pallas_call(
        functools.partial(_attn_block_kernel, ngroups=num_groups, eps=eps, scale=scale),
        out_shape=jax.ShapeDtypeStruct((B, N, C), ACT_DTYPE),
        grid=(B,),
        in_specs=[
            pl.BlockSpec((1, N, C), lambda i: (i, 0, 0)),
            c1(), c1(),
            pl.BlockSpec((C, num_groups), lambda i: (0, 0)),
            pl.BlockSpec((num_groups, C), lambda i: (0, 0)),
            cc(), c1(), cc(), c1(), cc(), c1(), cc(), c1(),
        ],
        out_specs=pl.BlockSpec((1, N, C), lambda i: (i, 0, 0)),
        compiler_params=pltpu.CompilerParams(dimension_semantics=("parallel",)),
    )(x.reshape(B, N, C),
      p['norm']['gamma'], p['norm']['beta'], gm, gmT,
      p['q']['w'], p['q']['b'],
      p['k']['w'], p['k']['b'],
      p['v']['w'], p['v']['b'],
      p['proj_out']['w'], p['proj_out']['b'])
    return out.reshape(B, H, W, C)


def combine_op(h_coarse_up, h_medium_up, h_fine, sel):
    """Final selector combine at fine resolution (sel: (B,H,W,1) int32)."""
    B, H, W, C = h_fine.shape
    spec = lambda c: pl.BlockSpec((1, H, W, c), lambda i: (i, 0, 0, 0))
    return pl.pallas_call(
        _combine_kernel,
        out_shape=jax.ShapeDtypeStruct((B, H, W, C), jnp.float32),
        grid=(B,),
        in_specs=[spec(1), spec(C), spec(C), spec(C)],
        out_specs=spec(C),
        compiler_params=pltpu.CompilerParams(dimension_semantics=("parallel",)),
    )(sel, h_coarse_up, h_medium_up, h_fine)


# ----------------------------------------------------------------------------
# Module-level building blocks (glue calling the Pallas ops)
# ----------------------------------------------------------------------------

def resnet_block_op(x, p):
    # temb is None and dropout == 0.0 in this Encoder (temb_ch == 0).
    h = conv3x3_op(x, p['conv1'], gn=p['norm1'])             # GN+SiLU fused into conv1
    xs = conv1x1_op(x, p['nin_shortcut']) if 'nin_shortcut' in p else x
    return conv3x3_op(h, p['conv2'], gn=p['norm2'], residual=xs)  # GN+SiLU + skip fused


def simple_router(x_entropy_p16, x_entropy_p8):
    # TODO(synk): the real router is built via instantiate_from_config(router_config)
    # which is not provided; this deterministic entropy-threshold stand-in reproduces
    # only the output interface (mask[0..2], gate, fine_ratio, mode).
    B, Hc, Wc = x_entropy_p16.shape
    e8 = x_entropy_p8.reshape(B, Hc, 2, Wc, 2).mean(axis=(2, 4))
    e = 0.5 * (x_entropy_p16 + e8)
    t1 = jnp.quantile(e, 1.0 / 3.0)
    t2 = jnp.quantile(e, 2.0 / 3.0)
    idx = (e > t1).astype(jnp.int32) + (e > t2).astype(jnp.int32)   # 0 coarse,1 med,2 fine
    gate = jax.nn.one_hot(idx, 3, dtype=jnp.float32)                # (B, Hc, Wc, 3)
    up2 = lambda t: jnp.repeat(jnp.repeat(t, 2, axis=1), 2, axis=2)
    up4 = lambda t: jnp.repeat(jnp.repeat(t, 4, axis=1), 4, axis=2)
    mask0 = (idx == 0)[..., None]
    mask1 = up2((idx == 1)[..., None])
    mask2 = up4((idx == 2)[..., None])
    fine_ratio = jnp.mean((idx == 2).astype(jnp.float32))
    return (mask0, mask1, mask2), gate, fine_ratio, 'dynamic'


def encoder_forward(params, x, x_entropy_p16, x_entropy_p8, cfg):
    ch_mult = cfg['ch_mult']
    num_resolutions = len(ch_mult)
    num_res_blocks = cfg['num_res_blocks']

    hs = [conv3x3_op(x, params['conv_in'])]
    h = hs[-1]
    h_fine = None
    h_medium = None
    for i_level in range(num_resolutions):
        for i_block in range(num_res_blocks):
            h = resnet_block_op(hs[-1], params['down'][i_level]['block'][i_block])
            if len(params['down'][i_level]['attn']) > 0:
                h = attn_block_op(h, params['down'][i_level]['attn'][i_block])
            hs.append(h)
        if i_level != num_resolutions - 1:
            hs.append(downsample_op(hs[-1], params['down'][i_level]['downsample']))
        if i_level == num_resolutions - 3:
            h_fine = h
        if i_level == num_resolutions - 2:
            h_medium = h

    def mid_stack(hc, mid_p, norm_p, conv_p):
        hc = resnet_block_op(hc, mid_p['block_1'])
        hc = attn_block_op(hc, mid_p['attn_1'])
        hc = resnet_block_op(hc, mid_p['block_2'])
        return conv3x3_op(hc, conv_p, gn=norm_p)    # norm_out + SiLU fused into conv_out

    h_coarse = mid_stack(hs[-1], params['mid_coarse'],
                         params['norm_out_coarse'], params['conv_out_coarse'])
    h_medium = mid_stack(h_medium, params['mid'],
                         params['norm_out'], params['conv_out'])
    h_fine = mid_stack(h_fine, params['mid_fine'],
                       params['norm_out_fine'], params['conv_out_fine'])

    masks, gate, fine_ratio, mode = simple_router(x_entropy_p16, x_entropy_p8)
    indices = jnp.argmax(gate, axis=-1)   # == gate.permute(0,3,1,2).argmax(dim=1)

    # nearest upsample (tiny tensors, kept in XLA) + in-kernel selector combine.
    up2 = lambda t: jnp.repeat(jnp.repeat(t, 2, axis=1), 2, axis=2)
    up4 = lambda t: jnp.repeat(jnp.repeat(t, 4, axis=1), 4, axis=2)
    sel = up4(indices[..., None]).astype(jnp.int32)           # (B, Hf, Wf, 1)
    h_out = combine_op(up4(h_coarse), up2(h_medium), h_fine, sel)

    return {'h': h_out, 'indices': indices, 'mask': masks,
            'fine_ratio': fine_ratio, 'compression_mode': mode}


# ----------------------------------------------------------------------------
# Deterministic parameter construction (synthetic init, mirrors __init__ shapes;
# weights are packed ONCE into the matmul-ready bf16 layouts used by the kernels)
# ----------------------------------------------------------------------------

def build_params(cfg, key):
    counter = [0]

    def next_key():
        counter[0] += 1
        return jax.random.fold_in(key, counter[0])

    def conv3_p(cin, cout):
        w = jax.random.normal(next_key(), (3, 3, cin, cout), jnp.float32)
        w = w * (1.0 / math.sqrt(9 * cin))
        # packed: taps fused along the contraction dim -> (3, 3*cin, cout) bf16
        return {'w': w.reshape(3, 3 * cin, cout).astype(jnp.bfloat16),
                'b': jnp.zeros((1, cout), jnp.float32)}

    def conv1_p(cin, cout):
        w = jax.random.normal(next_key(), (cin, cout), jnp.float32)
        w = w * (1.0 / math.sqrt(cin))
        return {'w': w.astype(jnp.bfloat16), 'b': jnp.zeros((1, cout), jnp.float32)}

    def norm_p(c):
        return {'gamma': jnp.ones((1, c), jnp.float32),
                'beta': jnp.zeros((1, c), jnp.float32)}

    def res_p(cin, cout):
        p = {'norm1': norm_p(cin), 'conv1': conv3_p(cin, cout),
             'norm2': norm_p(cout), 'conv2': conv3_p(cout, cout)}
        if cin != cout:
            p['nin_shortcut'] = conv1_p(cin, cout)
        return p

    def attn_p(c):
        return {'norm': norm_p(c), 'q': conv1_p(c, c), 'k': conv1_p(c, c),
                'v': conv1_p(c, c), 'proj_out': conv1_p(c, c)}

    ch = cfg['ch']
    ch_mult = cfg['ch_mult']
    in_ch_mult = (1,) + tuple(ch_mult)
    curr_res = cfg['resolution']

    params = {'conv_in': conv3_p(cfg['in_channels'], ch)}
    down = []
    block_in = ch
    for i_level in range(len(ch_mult)):
        block_in = ch * in_ch_mult[i_level]
        block_out = ch * ch_mult[i_level]
        blocks, attns = [], []
        for _ in range(cfg['num_res_blocks']):
            blocks.append(res_p(block_in, block_out))
            block_in = block_out
            if curr_res in cfg['attn_resolutions']:
                attns.append(attn_p(block_in))
        lvl = {'block': blocks, 'attn': attns}
        if i_level != len(ch_mult) - 1:
            lvl['downsample'] = conv3_p(block_in, block_in)
            curr_res //= 2
        down.append(lvl)
    params['down'] = down

    zc = 2 * cfg['z_channels'] if cfg['double_z'] else cfg['z_channels']

    def mid_p(c):
        return {'block_1': res_p(c, c), 'attn_1': attn_p(c), 'block_2': res_p(c, c)}

    params['mid_fine'] = mid_p(block_in // 2)
    params['norm_out_fine'] = norm_p(block_in // 2)
    params['conv_out_fine'] = conv3_p(block_in // 2, zc)

    params['mid'] = mid_p(block_in)
    params['norm_out'] = norm_p(block_in)
    params['conv_out'] = conv3_p(block_in, zc)

    params['mid_coarse'] = mid_p(block_in)
    params['norm_out_coarse'] = norm_p(block_in)
    params['conv_out_coarse'] = conv3_p(block_in, zc)
    return params


# ----------------------------------------------------------------------------

if __name__ == "__main__":
    # Small but structurally consistent config:
    #   channel counts divisible by 32 (GroupNorm(32)),
    #   ch_mult[-1] == ch_mult[-2] and ch_mult[-3] == ch_mult[-1] // 2
    #   so that the mid / mid_fine channel counts line up with h_medium / h_fine.
    cfg = dict(ch=32, ch_mult=(1, 2, 4, 4), num_res_blocks=1, attn_resolutions=(),
               in_channels=3, resolution=32, z_channels=4, double_z=True,
               dropout=0.0)

    key = jax.random.PRNGKey(0)
    params = build_params(cfg, jax.random.fold_in(key, 1))

    kx, ke16, ke8 = jax.random.split(jax.random.fold_in(key, 2), 3)
    B = 2
    # layout: NHWC input (PyTorch reference would be NCHW (2, 3, 32, 32))
    x = jax.random.normal(kx, (B, cfg['resolution'], cfg['resolution'],
                               cfg['in_channels']), jnp.float32)
    # entropy maps at the coarse (x/8) and medium (x/4) latent grids
    x_entropy_p16 = jax.random.uniform(ke16, (B, 4, 4), jnp.float32)
    x_entropy_p8 = jax.random.uniform(ke8, (B, 8, 8), jnp.float32)

    out = encoder_forward(params, x, x_entropy_p16, x_entropy_p8, cfg)
    jax.block_until_ready(out['h'])
    assert out['h'].shape == (B, 16, 16, 2 * cfg['z_channels'])
    assert out['h'].dtype == jnp.float32
    print("KERNEL_OK")
</pallas_src>

<mosaic_0001>
module attributes {stable_mosaic.version = 11 : i64} {
  func.func @_conv3x3_kernel(%arg0: i32, %arg1: memref<1x32x32x3xf32, #tpu.memory_space<vmem>>, %arg2: memref<3x9x32xbf16, #tpu.memory_space<vmem>>, %arg3: memref<1x32xf32, #tpu.memory_space<vmem>>, %arg4: memref<1x32x32x32xbf16, #tpu.memory_space<vmem>>) attributes {dimension_semantics = [#tpu.dimension_semantics<parallel>], iteration_bounds = array<i64: 2>, scalar_prefetch = 0 : i64, scratch_operands = 0 : i64, tpu.core_type = #tpu.core_type<tc>, window_params = [{transform_indices = @transform_0, window_bounds = array<i64: 1, 32, 32, 3>}, {pipeline_mode = #tpu.pipeline_mode<synchronous>, transform_indices = @transform_1, window_bounds = array<i64: 3, 9, 32>}, {pipeline_mode = #tpu.pipeline_mode<synchronous>, transform_indices = @transform_2, window_bounds = array<i64: 1, 32>}, {transform_indices = @transform_3, window_bounds = array<i64: 1, 32, 32, 32>}]} {
    %c0 = arith.constant 0 : index
    %c0_0 = arith.constant 0 : index
    %c0_1 = arith.constant 0 : index
    %c0_2 = arith.constant 0 : index
    %0 = vector.load %arg1[%c0, %c0_0, %c0_1, %c0_2] : memref<1x32x32x3xf32, #tpu.memory_space<vmem>>, vector<1x32x32x3xf32>
    %1 = vector.shape_cast %0 : vector<1x32x32x3xf32> to vector<32x32x3xf32>
    %2 = arith.truncf %1 : vector<32x32x3xf32> to vector<32x32x3xbf16>
    %cst = arith.constant 0.000000e+00 : bf16
    %3 = vector.broadcast %cst : bf16 to vector<1x32x3xbf16>
    %4 = tpu.concatenate %3, %2, %3 in 0 : vector<1x32x3xbf16>, vector<32x32x3xbf16>, vector<1x32x3xbf16> -> vector<34x32x3xbf16>
    %cst_3 = arith.constant 0.000000e+00 : bf16
    %5 = vector.broadcast %cst_3 : bf16 to vector<34x1x3xbf16>
    %6 = tpu.concatenate %5, %4, %5 in 1 : vector<34x1x3xbf16>, vector<34x32x3xbf16>, vector<34x1x3xbf16> -> vector<34x34x3xbf16>
    %cst_4 = arith.constant 0.000000e+00 : f32
    %7 = vector.broadcast %cst_4 : f32 to vector<1024x32xf32>
    %8 = vector.extract_strided_slice %6 {offsets = [0, 0, 0], sizes = [32, 34, 3], strides = [1, 1, 1]} : vector<34x34x3xbf16> to vector<32x34x3xbf16>
    %9 = vector.extract_strided_slice %8 {offsets = [0, 0, 0], sizes = [32, 32, 3], strides = [1, 1, 1]} : vector<32x34x3xbf16> to vector<32x32x3xbf16>
    %10 = vector.extract_strided_slice %8 {offsets = [0, 1, 0], sizes = [32, 32, 3], strides = [1, 1, 1]} : vector<32x34x3xbf16> to vector<32x32x3xbf16>
    %11 = vector.extract_strided_slice %8 {offsets = [0, 2, 0], sizes = [32, 32, 3], strides = [1, 1, 1]} : vector<32x34x3xbf16> to vector<32x32x3xbf16>
    %12 = tpu.concatenate %9, %10, %11 in 2 : vector<32x32x3xbf16>, vector<32x32x3xbf16>, vector<32x32x3xbf16> -> vector<32x32x9xbf16>
    %13 = vector.shape_cast %12 : vector<32x32x9xbf16> to vector<1024x9xbf16>
    %c0_5 = arith.constant 0 : index
    %c0_6 = arith.constant 0 : index
    %c0_7 = arith.constant 0 : index
    %14 = vector.load %arg2[%c0_5, %c0_6, %c0_7] : memref<3x9x32xbf16, #tpu.memory_space<vmem>>, vector<1x9x32xbf16>
    %15 = vector.shape_cast %14 : vector<1x9x32xbf16> to vector<9x32xbf16>
    %cst_8 = arith.constant dense<0.000000e+00> : vector<1024x32xf32>
    %16 = tpu.matmul %13, %15, %cst_8 {dimension_numbers = #tpu.dot_dimension_numbers<[1], [0], [0], [1], [0, 0, 1, 1], [], []>} : vector<1024x9xbf16>, vector<9x32xbf16>, vector<1024x32xf32> -> vector<1024x32xf32>
    %17 = arith.addf %7, %16 : vector<1024x32xf32>
    %18 = vector.extract_strided_slice %6 {offsets = [1, 0, 0], sizes = [32, 34, 3], strides = [1, 1, 1]} : vector<34x34x3xbf16> to vector<32x34x3xbf16>
    %19 = vector.extract_strided_slice %18 {offsets = [0, 0, 0], sizes = [32, 32, 3], strides = [1, 1, 1]} : vector<32x34x3xbf16> to vector<32x32x3xbf16>
    %20 = vector.extract_strided_slice %18 {offsets = [0, 1, 0], sizes = [32, 32, 3], strides = [1, 1, 1]} : vector<32x34x3xbf16> to vector<32x32x3xbf16>
    %21 = vector.extract_strided_slice %18 {offsets = [0, 2, 0], sizes = [32, 32, 3], strides = [1, 1, 1]} : vector<32x34x3xbf16> to vector<32x32x3xbf16>
    %22 = tpu.concatenate %19, %20, %21 in 2 : vector<32x32x3xbf16>, vector<32x32x3xbf16>, vector<32x32x3xbf16> -> vector<32x32x9xbf16>
    %23 = vector.shape_cast %22 : vector<32x32x9xbf16> to vector<1024x9xbf16>
    %c1 = arith.constant 1 : index
    %c0_9 = arith.constant 0 : index
    %c0_10 = arith.constant 0 : index
    %24 = vector.load %arg2[%c1, %c0_9, %c0_10] : memref<3x9x32xbf16, #tpu.memory_space<vmem>>, vector<1x9x32xbf16>
    %25 = vector.shape_cast %24 : vector<1x9x32xbf16> to vector<9x32xbf16>
    %cst_11 = arith.constant dense<0.000000e+00> : vector<1024x32xf32>
    %26 = tpu.matmul %23, %25, %cst_11 {dimension_numbers = #tpu.dot_dimension_numbers<[1], [0], [0], [1], [0, 0, 1, 1], [], []>} : vector<1024x9xbf16>, vector<9x32xbf16>, vector<1024x32xf32> -> vector<1024x32xf32>
    %27 = arith.addf %17, %26 : vector<1024x32xf32>
    %28 = vector.extract_strided_slice %6 {offsets = [2, 0, 0], sizes = [32, 34, 3], strides = [1, 1, 1]} : vector<34x34x3xbf16> to vector<32x34x3xbf16>
    %29 = vector.extract_strided_slice %28 {offsets = [0, 0, 0], sizes = [32, 32, 3], strides = [1, 1, 1]} : vector<32x34x3xbf16> to vector<32x32x3xbf16>
    %30 = vector.extract_strided_slice %28 {offsets = [0, 1, 0], sizes = [32, 32, 3], strides = [1, 1, 1]} : vector<32x34x3xbf16> to vector<32x32x3xbf16>
    %31 = vector.extract_strided_slice %28 {offsets = [0, 2, 0], sizes = [32, 32, 3], strides = [1, 1, 1]} : vector<32x34x3xbf16> to vector<32x32x3xbf16>
    %32 = tpu.concatenate %29, %30, %31 in 2 : vector<32x32x3xbf16>, vector<32x32x3xbf16>, vector<32x32x3xbf16> -> vector<32x32x9xbf16>
    %33 = vector.shape_cast %32 : vector<32x32x9xbf16> to vector<1024x9xbf16>
    %c2 = arith.constant 2 : index
    %c0_12 = arith.constant 0 : index
    %c0_13 = arith.constant 0 : index
    %34 = vector.load %arg2[%c2, %c0_12, %c0_13] : memref<3x9x32xbf16, #tpu.memory_space<vmem>>, vector<1x9x32xbf16>
    %35 = vector.shape_cast %34 : vector<1x9x32xbf16> to vector<9x32xbf16>
    %cst_14 = arith.constant dense<0.000000e+00> : vector<1024x32xf32>
    %36 = tpu.matmul %33, %35, %cst_14 {dimension_numbers = #tpu.dot_dimension_numbers<[1], [0], [0], [1], [0, 0, 1, 1], [], []>} : vector<1024x9xbf16>, vector<9x32xbf16>, vector<1024x32xf32> -> vector<1024x32xf32>
    %37 = arith.addf %27, %36 : vector<1024x32xf32>
    %c0_15 = arith.constant 0 : index
    %c0_16 = arith.constant 0 : index
    %38 = vector.load %arg3[%c0_15, %c0_16] : memref<1x32xf32, #tpu.memory_space<vmem>>, vector<1x32xf32>
    %39 = vector.broadcast %38 : vector<1x32xf32> to vector<1024x32xf32>
    %40 = arith.addf %37, %39 : vector<1024x32xf32>
    %41 = vector.shape_cast %40 : vector<1024x32xf32> to vector<32x32x32xf32>
    %42 = arith.truncf %41 : vector<32x32x32xf32> to vector<32x32x32xbf16>
    %c0_17 = arith.constant 0 : index
    %c0_18 = arith.constant 0 : index
    %c0_19 = arith.constant 0 : index
    %c0_20 = arith.constant 0 : index
    %43 = vector.load %arg4[%c0_17, %c0_18, %c0_19, %c0_20] : memref<1x32x32x32xbf16, #tpu.memory_space<vmem>>, vector<1x32x32x32xbf16>
    %44 = vector.shape_cast %43 : vector<1x32x32x32xbf16> to vector<32x32x32xbf16>
    %45 = vector.shape_cast %42 : vector<32x32x32xbf16> to vector<1x32x32x32xbf16>
    tpu.vector_store %arg4[%c0_17, %c0_18, %c0_19, %c0_20], %45 {strides = array<i32>} : memref<1x32x32x32xbf16, #tpu.memory_space<vmem>>, vector<1x32x32x32xbf16>,
    return
  }
  func.func @transform_0(%arg0: i32) -> (i32, i32, i32, i32) {
    %c0_i32 = arith.constant 0 : i32
    %c0_i32_0 = arith.constant 0 : i32
    %c0_i32_1 = arith.constant 0 : i32
    %c0_i32_2 = arith.constant 0 : i32
    return %arg0, %c0_i32, %c0_i32_0, %c0_i32_1 : i32, i32, i32, i32
  }
  func.func @transform_1(%arg0: i32) -> (i32, i32, i32) {
    %c0_i32 = arith.constant 0 : i32
    %c0_i32_0 = arith.constant 0 : i32
    %c0_i32_1 = arith.constant 0 : i32
    %c0_i32_2 = arith.constant 0 : i32
    return %c0_i32, %c0_i32_0, %c0_i32_1 : i32, i32, i32
  }
  func.func @transform_2(%arg0: i32) -> (i32, i32) {
    %c0_i32 = arith.constant 0 : i32
    %c0_i32_0 = arith.constant 0 : i32
    %c0_i32_1 = arith.constant 0 : i32
    return %c0_i32, %c0_i32_0 : i32, i32
  }
  func.func @transform_3(%arg0: i32) -> (i32, i32, i32, i32) {
    %c0_i32 = arith.constant 0 : i32
    %c0_i32_0 = arith.constant 0 : i32
    %c0_i32_1 = arith.constant 0 : i32
    %c0_i32_2 = arith.constant 0 : i32
    return %arg0, %c0_i32, %c0_i32_0, %c0_i32_1 : i32, i32, i32, i32
  }
}

</mosaic_0001>

<llo_original>
// kernel: tpu_custom_call.1
$region0: #{tpu_custom_call.1}
  #allocation0 [shape = 'u32[]', space=smem, size = 0x4, offset = 0x4, fixed_abs, tag = 'smem constant byte address 0x4 - core index']
  #allocation1 [shape = 'u32[144,128]{1,0:T(1,128)}', space=vmem, size = 0x12000, scoped, tag = 'internal scratch']
  %s0 = inlined_call_operand.vmem [shape: f32[2,32,32,3], index: 0, kind: input, shape index: {}]
  %s1 = inlined_call_operand.vmem [shape: bf16[3,9,32], index: 1, kind: input, shape index: {}]
  %s2 = inlined_call_operand.vmem [shape: f32[1,32], index: 2, kind: input, shape index: {}]
  %s3 = inlined_call_operand.hbm [shape: bf16[2,32,32,32], index: 3, kind: output, shape index: {}]
  %s4 = sld [smem:[#allocation0]]
  $region45: #{tpu_custom_call.1} parent=0
    _
  %s6 = ssub.s32 1, %s4
  %s7 = scalar_select 0, %s6, %s4
  $region1: #{tpu_custom_call.1} parent=0
    #allocation2 [shape = 'u8[524288]{0}', space=vmem, size = 0x80000, scoped, tag = 'output window, operand 0']
    #allocation3 [shape = 's32[2]{0}', space=sflag, size = 0x8, scoped, tag = 'scoped memory for tpu_custom_call.1']
    %8 = vsyncpa [#allocation3], 0
    %s9 = scalar_lea.sflag [#allocation3], 1
    %10 = vsyncpa %s9, 0
    loop: start=0, step=1, limit=4
    $region2: #{tpu_custom_call.1} parent=1 // loop_pre_header
      _
    $region3: #{tpu_custom_call.1} parent=1 // loop_header
      %s12 = sphi 0, %s16
      %p13 = scmp.ge.s32.totalorder %s12, 4
      %s22 = sphi 0, %s24
      %s25 = sphi 0, %s22
      %s26 = sphi 0, %s25
      %s42 = sphi 0, %s26
      %s46 = sphi 0, %s46
      %s48 = sphi 0, %s46
      %s49 = sphi 0, %s48
      %s63 = sphi 0, %s49
      %s67 = sphi 0, %s67
      %s69 = sphi 0, %s67
      %s70 = sphi 0, %s69
      %s84 = sphi 0, %s70
      %s90 = sphi 0, %s92
      %s93 = sphi 0, %s90
      %s94 = sphi 0, %s93
      %s110 = sphi 0, %s94
    $region4: #{tpu_custom_call.1} parent=1 // loop_header_branch
      %15 = sbr.rel (%p13) target = $region8
    $region5: #{tpu_custom_call.1} parent=1 // loop_body
      %s17 = ssub.s32 %s12, 1
      %s18 = ssub.s32 %s12, 2
      %s19 = sadd.s32 %s12, 1
      %s20 = ssub.s32 %s12, %s19
      %p21 = scmp.eq.s32.totalorder %s20, 0
      %s23 = sadd.s32 %s22, 1
      %s24 = scalar_select %p21, %s22, %s23
      %p27 = pneg %p21
      %p28 = scmp.eq.s32.totalorder %s12, 1
      %p29 = por %p27, %p28
      %p30 = scmp.ne.s32.totalorder %s22, %s25
      %p31 = scmp.eq.s32.totalorder %s12, 0
      %p32 = por %p30, %p31
      %p33 = scmp.ne.s32.totalorder %s22, %s25
      %p34 = scmp.eq.s32.totalorder %s17, 1
      %p35 = por %p33, %p34
      %p36 = scmp.ne.s32.totalorder %s25, %s26
      %p37 = scmp.eq.s32.totalorder %s17, 0
      %p38 = por %p36, %p37
      %p39 = scmp.ne.s32.totalorder %s25, %s26
      %p40 = scmp.eq.s32.totalorder %s18, 1
      %p41 = por %p39, %p40
      %p43 = scmp.ne.s32.totalorder %s26, %s42
      %p44 = scmp.eq.s32.totalorder %s18, 0
      %p45 = por %p43, %p44
      %s47 = sadd.s32 %s46, 1
      %p50 = scmp.eq.s32.totalorder %s12, 1
      %p51 = scmp.ne.s32.totalorder %s46, %s48
      %p52 = scmp.eq.s32.totalorder %s12, 0
      %p53 = por %p51, %p52
      %p54 = scmp.ne.s32.totalorder %s46, %s48
      %p55 = scmp.eq.s32.totalorder %s17, 1
      %p56 = por %p54, %p55
      %p57 = scmp.ne.s32.totalorder %s48, %s49
      %p58 = scmp.eq.s32.totalorder %s17, 0
      %p59 = por %p57, %p58
      %p60 = scmp.ne.s32.totalorder %s48, %s49
      %p61 = scmp.eq.s32.totalorder %s18, 1
      %p62 = por %p60, %p61
      %p64 = scmp.ne.s32.totalorder %s49, %s63
      %p65 = scmp.eq.s32.totalorder %s18, 0
      %p66 = por %p64, %p65
      %s68 = sadd.s32 %s67, 1
      %p71 = scmp.eq.s32.totalorder %s12, 1
      %p72 = scmp.ne.s32.totalorder %s67, %s69
      %p73 = scmp.eq.s32.totalorder %s12, 0
      %p74 = por %p72, %p73
      %p75 = scmp.ne.s32.totalorder %s67, %s69
      %p76 = scmp.eq.s32.totalorder %s17, 1
      %p77 = por %p75, %p76
      %p78 = scmp.ne.s32.totalorder %s69, %s70
      %p79 = scmp.eq.s32.totalorder %s17, 0
      %p80 = por %p78, %p79
      %p81 = scmp.ne.s32.totalorder %s69, %s70
      %p82 = scmp.eq.s32.totalorder %s18, 1
      %p83 = por %p81, %p82
      %p85 = scmp.ne.s32.totalorder %s70, %s84
      %p86 = scmp.eq.s32.totalorder %s18, 0
      %p87 = por %p85, %p86
      %s88 = ssub.s32 %s12, %s19
      %p89 = scmp.eq.s32.totalorder %s88, 0
      %s91 = sadd.s32 %s90, 1
      %s92 = scalar_select %p89, %s90, %s91
      %p95 = pneg %p89
      %p96 = scmp.eq.s32.totalorder %s12, 1
      %p97 = por %p95, %p96
      %p98 = scmp.ne.s32.totalorder %s90, %s93
      %p99 = scmp.eq.s32.totalorder %s12, 0
      %p100 = por %p98, %p99
      %p101 = scmp.ne.s32.totalorder %s90, %s93
      %p102 = scmp.eq.s32.totalorder %s17, 1
      %p103 = por %p101, %p102
      %p104 = scmp.ne.s32.totalorder %s93, %s94
      %p105 = scmp.eq.s32.totalorder %s17, 0
      %p106 = por %p104, %p105
      %p107 = scmp.ne.s32.totalorder %s93, %s94
      %p108 = scmp.eq.s32.totalorder %s18, 1
      %p109 = por %p107, %p108
      %p111 = scmp.ne.s32.totalorder %s94, %s110
      %p112 = scmp.eq.s32.totalorder %s18, 0
      %p113 = por %p111, %p112
      %p114 = scmp.le.s32.totalorder 1, %s12
      %p115 = scmp.lt.s32.totalorder %s12, 3
      %p116 = pnand %p114, %p115
      %p117 = pneg %p116
      // Predicated region
      $region9: #{tpu_custom_call.1} parent=5 // pred_check
        _
      $region10: #{tpu_custom_call.1} parent=5 // pred_check_branch
        %119 = sbr.rel (%p116) target = $region12
      $region11: #{tpu_custom_call.1} parent=5 // pred_region
        %s120 = ssub.s32 %s12, 1
        // Predicated region
        $region13: #{tpu_custom_call.1} parent=11 // pred_check
          %p121 = pneg %p59
        $region14: #{tpu_custom_call.1} parent=11 // pred_check_branch
          %123 = sbr.rel (%p121) target = $region16
        $region15: #{tpu_custom_call.1} parent=11 // pred_region
          _
        $region16: #{tpu_custom_call.1} parent=11 // pred_fallthru
          _
        // Predicated region
        $region17: #{tpu_custom_call.1} parent=11 // pred_check
          %p124 = pneg %p80
        $region18: #{tpu_custom_call.1} parent=11 // pred_check_branch
          %126 = sbr.rel (%p124) target = $region20
        $region19: #{tpu_custom_call.1} parent=11 // pred_region
          _
        $region20: #{tpu_custom_call.1} parent=11 // pred_fallthru
          _
      $region12: #{tpu_custom_call.1} parent=5 // pred_fallthru
        _
      %p127 = scmp.lt.s32.totalorder %s12, 2
      // Predicated region
      $region21: #{tpu_custom_call.1} parent=5 // pred_check
        %p128 = pneg %p127
      $region22: #{tpu_custom_call.1} parent=5 // pred_check_branch
        %130 = sbr.rel (%p128) target = $region24
      $region23: #{tpu_custom_call.1} parent=5 // pred_region
        // Predicated region
        $region25: #{tpu_custom_call.1} parent=23 // pred_check
          %p131 = pneg %p32
        $region26: #{tpu_custom_call.1} parent=23 // pred_check_branch
          %133 = sbr.rel (%p131) target = $region28
        $region27: #{tpu_custom_call.1} parent=23 // pred_region
          %p134 = scmp.lt.s32.totalorder %s12, 1
          %s135 = scalar_select %p134, %s12, 1
          %s136 = smul.addr %s135, 128
          %s137 = smul.addr %s136, 8
          %s138 = scalar_lea.vmem %s0, %s137
        $region28: #{tpu_custom_call.1} parent=23 // pred_fallthru
          _
      $region24: #{tpu_custom_call.1} parent=5 // pred_fallthru
        _
      %p139 = scmp.le.s32.totalorder 1, %s12
      %p140 = scmp.lt.s32.totalorder %s12, 3
      %p141 = pnand %p139, %p140
      %p142 = pneg %p141
      // Predicated region
      $region29: #{tpu_custom_call.1} parent=5 // pred_check
        _
      $region30: #{tpu_custom_call.1} parent=5 // pred_check_branch
        %144 = sbr.rel (%p141) target = $region32
      $region31: #{tpu_custom_call.1} parent=5 // pred_region
        %s145 = ssub.s32 %s12, 1
        %p146 = scmp.lt.s32.totalorder %s17, 1
        %s147 = scalar_select %p146, %s17, 1
        %s148 = smul.addr %s147, 128
        %s149 = smul.addr %s148, 8
        %s150 = scalar_lea.vmem %s0, %s149
        %p151 = pneg %p38
        %p152 = pneg %p35
        %p153 = pneg %p59
        %p154 = pneg %p56
        %p155 = pneg %p80
        %p156 = pneg %p77
        %p157 = pneg %p106
        %p158 = pneg %p103
        %s159 = sand.u32 %s93, 1
        %s160 = scalar_lea.sflag [#allocation3], %s159
        %s161 = sand.u32 %s93, 1
        %s162 = smul.addr %s161, 512
        %s163 = scalar_lea.vmem [#allocation2], %s162
        %p164 = scmp.lt.s32.totalorder %s17, 1
        %s165 = scalar_select %p164, %s17, 1
        %s166 = smul.addr %s165, 128
        %s167 = smul.addr %s166, 8
        %s168 = scalar_lea.vmem %s0, %s167
        %v170 = vld [vmem:[%s168] sm:$0xff]
        %v171 = vld [vmem:[%s168 + $0x8] sm:$0xff]
        %v172 = vld [vmem:[%s168 + $0x10] sm:$0xff]
        %v173 = vld [vmem:[%s168 + $0x18] sm:$0xff]
        %v174 = vld [vmem:[%s168 + $0x20] sm:$0xff]
        %v175 = vld [vmem:[%s168 + $0x28] sm:$0xff]
        %v176 = vld [vmem:[%s168 + $0x30] sm:$0xff]
        %v177 = vld [vmem:[%s168 + $0x38] sm:$0xff]
        %v178 = vld [vmem:[%s168 + $0x40] sm:$0xff]
        %v179 = vld [vmem:[%s168 + $0x48] sm:$0xff]
        %v180 = vld [vmem:[%s168 + $0x50] sm:$0xff]
        %v181 = vld [vmem:[%s168 + $0x58] sm:$0xff]
        %v182 = vld [vmem:[%s168 + $0x60] sm:$0xff]
        %v183 = vld [vmem:[%s168 + $0x68] sm:$0xff]
        %v184 = vld [vmem:[%s168 + $0x70] sm:$0xff]
        %v185 = vld [vmem:[%s168 + $0x78] sm:$0xff]
        %v186 = vld [vmem:[%s168 + $0x80] sm:$0xff]
        %v187 = vld [vmem:[%s168 + $0x88] sm:$0xff]
        %v188 = vld [vmem:[%s168 + $0x90] sm:$0xff]
        %v189 = vld [vmem:[%s168 + $0x98] sm:$0xff]
        %v190 = vld [vmem:[%s168 + $0xa0] sm:$0xff]
        %v191 = vld [vmem:[%s168 + $0xa8] sm:$0xff]
        %v192 = vld [vmem:[%s168 + $0xb0] sm:$0xff]
        %v193 = vld [vmem:[%s168 + $0xb8] sm:$0xff]
        %v194 = vld [vmem:[%s168 + $0xc0] sm:$0xff]
        %v195 = vld [vmem:[%s168 + $0xc8] sm:$0xff]
        %v196 = vld [vmem:[%s168 + $0xd0] sm:$0xff]
        %v197 = vld [vmem:[%s168 + $0xd8] sm:$0xff]
        %v198 = vld [vmem:[%s168 + $0xe0] sm:$0xff]
        %v199 = vld [vmem:[%s168 + $0xe8] sm:$0xff]
        %v200 = vld [vmem:[%s168 + $0xf0] sm:$0xff]
        %v201 = vld [vmem:[%s168 + $0xf8] sm:$0xff]
        %v202 = vld [vmem:[%s168 + $0x100] sm:$0xff]
        %v203 = vld [vmem:[%s168 + $0x108] sm:$0xff]
        %v204 = vld [vmem:[%s168 + $0x110] sm:$0xff]
        %v205 = vld [vmem:[%s168 + $0x118] sm:$0xff]
        %v206 = vld [vmem:[%s168 + $0x120] sm:$0xff]
        %v207 = vld [vmem:[%s168 + $0x128] sm:$0xff]
        %v208 = vld [vmem:[%s168 + $0x130] sm:$0xff]
        %v209 = vld [vmem:[%s168 + $0x138] sm:$0xff]
        %v210 = vld [vmem:[%s168 + $0x140] sm:$0xff]
        %v211 = vld [vmem:[%s168 + $0x148] sm:$0xff]
        %v212 = vld [vmem:[%s168 + $0x150] sm:$0xff]
        %v213 = vld [vmem:[%s168 + $0x158] sm:$0xff]
        %v214 = vld [vmem:[%s168 + $0x160] sm:$0xff]
        %v215 = vld [vmem:[%s168 + $0x168] sm:$0xff]
        %v216 = vld [vmem:[%s168 + $0x170] sm:$0xff]
        %v217 = vld [vmem:[%s168 + $0x178] sm:$0xff]
        %v218 = vld [vmem:[%s168 + $0x180] sm:$0xff]
        %v219 = vld [vmem:[%s168 + $0x188] sm:$0xff]
        %v220 = vld [vmem:[%s168 + $0x190] sm:$0xff]
        %v221 = vld [vmem:[%s168 + $0x198] sm:$0xff]
        %v222 = vld [vmem:[%s168 + $0x1a0] sm:$0xff]
        %v223 = vld [vmem:[%s168 + $0x1a8] sm:$0xff]
        %v224 = vld [vmem:[%s168 + $0x1b0] sm:$0xff]
        %v225 = vld [vmem:[%s168 + $0x1b8] sm:$0xff]
        %v226 = vld [vmem:[%s168 + $0x1c0] sm:$0xff]
        %v227 = vld [vmem:[%s168 + $0x1c8] sm:$0xff]
        %v228 = vld [vmem:[%s168 + $0x1d0] sm:$0xff]
        %v229 = vld [vmem:[%s168 + $0x1d8] sm:$0xff]
        %v230 = vld [vmem:[%s168 + $0x1e0] sm:$0xff]
        %v231 = vld [vmem:[%s168 + $0x1e8] sm:$0xff]
        %v232 = vld [vmem:[%s168 + $0x1f0] sm:$0xff]
        %v233 = vld [vmem:[%s168 + $0x1f8] sm:$0xff]
        %v234 = vld [vmem:[%s168 + $0x200] sm:$0xff]
        %v235 = vld [vmem:[%s168 + $0x208] sm:$0xff]
        %v236 = vld [vmem:[%s168 + $0x210] sm:$0xff]
        %v237 = vld [vmem:[%s168 + $0x218] sm:$0xff]
        %v238 = vld [vmem:[%s168 + $0x220] sm:$0xff]
        %v239 = vld [vmem:[%s168 + $0x228] sm:$0xff]
        %v240 = vld [vmem:[%s168 + $0x230] sm:$0xff]
        %v241 = vld [vmem:[%s168 + $0x238] sm:$0xff]
        %v242 = vld [vmem:[%s168 + $0x240] sm:$0xff]
        %v243 = vld [vmem:[%s168 + $0x248] sm:$0xff]
        %v244 = vld [vmem:[%s168 + $0x250] sm:$0xff]
        %v245 = vld [vmem:[%s168 + $0x258] sm:$0xff]
        %v246 = vld [vmem:[%s168 + $0x260] sm:$0xff]
        %v247 = vld [vmem:[%s168 + $0x268] sm:$0xff]
        %v248 = vld [vmem:[%s168 + $0x270] sm:$0xff]
        %v249 = vld [vmem:[%s168 + $0x278] sm:$0xff]
        %v250 = vld [vmem:[%s168 + $0x280] sm:$0xff]
        %v251 = vld [vmem:[%s168 + $0x288] sm:$0xff]
        %v252 = vld [vmem:[%s168 + $0x290] sm:$0xff]
        %v253 = vld [vmem:[%s168 + $0x298] sm:$0xff]
        %v254 = vld [vmem:[%s168 + $0x2a0] sm:$0xff]
        %v255 = vld [vmem:[%s168 + $0x2a8] sm:$0xff]
        %v256 = vld [vmem:[%s168 + $0x2b0] sm:$0xff]
        %v257 = vld [vmem:[%s168 + $0x2b8] sm:$0xff]
        %v258 = vld [vmem:[%s168 + $0x2c0] sm:$0xff]
        %v259 = vld [vmem:[%s168 + $0x2c8] sm:$0xff]
        %v260 = vld [vmem:[%s168 + $0x2d0] sm:$0xff]
        %v261 = vld [vmem:[%s168 + $0x2d8] sm:$0xff]
        %v262 = vld [vmem:[%s168 + $0x2e0] sm:$0xff]
        %v263 = vld [vmem:[%s168 + $0x2e8] sm:$0xff]
        %v264 = vld [vmem:[%s168 + $0x2f0] sm:$0xff]
        %v265 = vld [vmem:[%s168 + $0x2f8] sm:$0xff]
        %v266 = vld [vmem:[%s168 + $0x300] sm:$0xff]
        %v267 = vld [vmem:[%s168 + $0x308] sm:$0xff]
        %v268 = vld [vmem:[%s168 + $0x310] sm:$0xff]
        %v269 = vld [vmem:[%s168 + $0x318] sm:$0xff]
        %v270 = vld [vmem:[%s168 + $0x320] sm:$0xff]
        %v271 = vld [vmem:[%s168 + $0x328] sm:$0xff]
        %v272 = vld [vmem:[%s168 + $0x330] sm:$0xff]
        %v273 = vld [vmem:[%s168 + $0x338] sm:$0xff]
        %v274 = vld [vmem:[%s168 + $0x340] sm:$0xff]
        %v275 = vld [vmem:[%s168 + $0x348] sm:$0xff]
        %v276 = vld [vmem:[%s168 + $0x350] sm:$0xff]
        %v277 = vld [vmem:[%s168 + $0x358] sm:$0xff]
        %v278 = vld [vmem:[%s168 + $0x360] sm:$0xff]
        %v279 = vld [vmem:[%s168 + $0x368] sm:$0xff]
        %v280 = vld [vmem:[%s168 + $0x370] sm:$0xff]
        %v281 = vld [vmem:[%s168 + $0x378] sm:$0xff]
        %v282 = vld [vmem:[%s168 + $0x380] sm:$0xff]
        %v283 = vld [vmem:[%s168 + $0x388] sm:$0xff]
        %v284 = vld [vmem:[%s168 + $0x390] sm:$0xff]
        %v285 = vld [vmem:[%s168 + $0x398] sm:$0xff]
        %v286 = vld [vmem:[%s168 + $0x3a0] sm:$0xff]
        %v287 = vld [vmem:[%s168 + $0x3a8] sm:$0xff]
        %v288 = vld [vmem:[%s168 + $0x3b0] sm:$0xff]
        %v289 = vld [vmem:[%s168 + $0x3b8] sm:$0xff]
        %v290 = vld [vmem:[%s168 + $0x3c0] sm:$0xff]
        %v291 = vld [vmem:[%s168 + $0x3c8] sm:$0xff]
        %v292 = vld [vmem:[%s168 + $0x3d0] sm:$0xff]
        %v293 = vld [vmem:[%s168 + $0x3d8] sm:$0xff]
        %v294 = vld [vmem:[%s168 + $0x3e0] sm:$0xff]
        %v295 = vld [vmem:[%s168 + $0x3e8] sm:$0xff]
        %v296 = vld [vmem:[%s168 + $0x3f0] sm:$0xff]
        %v297 = vld [vmem:[%s168 + $0x3f8] sm:$0xff]
        %v298 = vpack.c.bf16 %v171, %v170
        %v299 = vpack.c.bf16 %v173, %v172
        %v300 = vpack.c.bf16 %v175, %v174
        %v301 = vpack.c.bf16 %v177, %v176
        %v302 = vpack.c.bf16 %v179, %v178
        %v303 = vpack.c.bf16 %v181, %v180
        %v304 = vpack.c.bf16 %v183, %v182
        %v305 = vpack.c.bf16 %v185, %v184
        %v306 = vpack.c.bf16 %v187, %v186
        %v307 = vpack.c.bf16 %v189, %v188
        %v308 = vpack.c.bf16 %v191, %v190
        %v309 = vpack.c.bf16 %v193, %v192
        %v310 = vpack.c.bf16 %v195, %v194
        %v311 = vpack.c.bf16 %v197, %v196
        %v312 = vpack.c.bf16 %v199, %v198
        %v313 = vpack.c.bf16 %v201, %v200
        %v314 = vpack.c.bf16 %v203, %v202
        %v315 = vpack.c.bf16 %v205, %v204
        %v316 = vpack.c.bf16 %v207, %v206
        %v317 = vpack.c.bf16 %v209, %v208
        %v318 = vpack.c.bf16 %v211, %v210
        %v319 = vpack.c.bf16 %v213, %v212
        %v320 = vpack.c.bf16 %v215, %v214
        %v321 = vpack.c.bf16 %v217, %v216
        %v322 = vpack.c.bf16 %v219, %v218
        %v323 = vpack.c.bf16 %v221, %v220
        %v324 = vpack.c.bf16 %v223, %v222
        %v325 = vpack.c.bf16 %v225, %v224
        %v326 = vpack.c.bf16 %v227, %v226
        %v327 = vpack.c.bf16 %v229, %v228
        %v328 = vpack.c.bf16 %v231, %v230
        %v329 = vpack.c.bf16 %v233, %v232
        %v330 = vpack.c.bf16 %v235, %v234
        %v331 = vpack.c.bf16 %v237, %v236
        %v332 = vpack.c.bf16 %v239, %v238
        %v333 = vpack.c.bf16 %v241, %v240
        %v334 = vpack.c.bf16 %v243, %v242
        %v335 = vpack.c.bf16 %v245, %v244
        %v336 = vpack.c.bf16 %v247, %v246
        %v337 = vpack.c.bf16 %v249, %v248
        %v338 = vpack.c.bf16 %v251, %v250
        %v339 = vpack.c.bf16 %v253, %v252
        %v340 = vpack.c.bf16 %v255, %v254
        %v341 = vpack.c.bf16 %v257, %v256
        %v342 = vpack.c.bf16 %v259, %v258
        %v343 = vpack.c.bf16 %v261, %v260
        %v344 = vpack.c.bf16 %v263, %v262
        %v345 = vpack.c.bf16 %v265, %v264
        %v346 = vpack.c.bf16 %v267, %v266
        %v347 = vpack.c.bf16 %v269, %v268
        %v348 = vpack.c.bf16 %v271, %v270
        %v349 = vpack.c.bf16 %v273, %v272
        %v350 = vpack.c.bf16 %v275, %v274
        %v351 = vpack.c.bf16 %v277, %v276
        %v352 = vpack.c.bf16 %v279, %v278
        %v353 = vpack.c.bf16 %v281, %v280
        %v354 = vpack.c.bf16 %v283, %v282
        %v355 = vpack.c.bf16 %v285, %v284
        %v356 = vpack.c.bf16 %v287, %v286
        %v357 = vpack.c.bf16 %v289, %v288
        %v358 = vpack.c.bf16 %v291, %v290
        %v359 = vpack.c.bf16 %v293, %v292
        %v360 = vpack.c.bf16 %v295, %v294
        %v361 = vpack.c.bf16 %v297, %v296
        %vm362 = vsmask.f32 256
        %v364 = vshrl.u32 0, 16
        %v366 = vrot.slane %v364, 7
        %v367 = vshll.u32 0, 16
        %v369 = vor.u32 %v366, %v367
        %v370 = vsel %vm362, %v366, %v369
        %v372 = vshrl.u32 %v298, 16
        %v374 = vrot.slane %v372, 7
        %v375 = vshll.u32 %v298, 16
        %v377 = vor.u32 %v374, %v375
        %v379 = vshrl.u32 %v299, 16
        %v381 = vrot.slane %v379, 7
        %v382 = vshll.u32 %v299, 16
        %v384 = vor.u32 %v381, %v382
        %v385 = vsel %vm362, %v374, %v384
        %v387 = vshrl.u32 %v300, 16
        %v389 = vrot.slane %v387, 7
        %v390 = vshll.u32 %v300, 16
        %v392 = vor.u32 %v389, %v390
        %v394 = vshrl.u32 %v301, 16
        %v396 = vrot.slane %v394, 7
        %v397 = vshll.u32 %v301, 16
        %v399 = vor.u32 %v396, %v397
        %v400 = vsel %vm362, %v389, %v399
        %v402 = vshrl.u32 %v302, 16
        %v404 = vrot.slane %v402, 7
        %v405 = vshll.u32 %v302, 16
        %v407 = vor.u32 %v404, %v405
        %v409 = vshrl.u32 %v303, 16
        %v411 = vrot.slane %v409, 7
        %v412 = vshll.u32 %v303, 16
        %v414 = vor.u32 %v411, %v412
        %v415 = vsel %vm362, %v404, %v414
        %v417 = vshrl.u32 %v304, 16
        %v419 = vrot.slane %v417, 7
        %v420 = vshll.u32 %v304, 16
        %v422 = vor.u32 %v419, %v420
        %v424 = vshrl.u32 %v305, 16
        %v426 = vrot.slane %v424, 7
        %v427 = vshll.u32 %v305, 16
        %v429 = vor.u32 %v426, %v427
        %v430 = vsel %vm362, %v419, %v429
        %v432 = vshrl.u32 %v306, 16
        %v434 = vrot.slane %v432, 7
        %v435 = vshll.u32 %v306, 16
        %v437 = vor.u32 %v434, %v435
        %v439 = vshrl.u32 %v307, 16
        %v441 = vrot.slane %v439, 7
        %v442 = vshll.u32 %v307, 16
        %v444 = vor.u32 %v441, %v442
        %v445 = vsel %vm362, %v434, %v444
        %v447 = vshrl.u32 %v308, 16
        %v449 = vrot.slane %v447, 7
        %v450 = vshll.u32 %v308, 16
        %v452 = vor.u32 %v449, %v450
        %v454 = vshrl.u32 %v309, 16
        %v456 = vrot.slane %v454, 7
        %v457 = vshll.u32 %v309, 16
        %v459 = vor.u32 %v456, %v457
        %v460 = vsel %vm362, %v449, %v459
        %v462 = vshrl.u32 %v310, 16
        %v464 = vrot.slane %v462, 7
        %v465 = vshll.u32 %v310, 16
        %v467 = vor.u32 %v464, %v465
        %v469 = vshrl.u32 %v311, 16
        %v471 = vrot.slane %v469, 7
        %v472 = vshll.u32 %v311, 16
        %v474 = vor.u32 %v471, %v472
        %v475 = vsel %vm362, %v464, %v474
        %v477 = vshrl.u32 %v312, 16
        %v479 = vrot.slane %v477, 7
        %v480 = vshll.u32 %v312, 16
        %v482 = vor.u32 %v479, %v480
        %v484 = vshrl.u32 %v313, 16
        %v486 = vrot.slane %v484, 7
        %v487 = vshll.u32 %v313, 16
        %v489 = vor.u32 %v486, %v487
        %v490 = vsel %vm362, %v479, %v489
        %v492 = vshrl.u32 %v314, 16
        %v494 = vrot.slane %v492, 7
        %v495 = vshll.u32 %v314, 16
        %v497 = vor.u32 %v494, %v495
        %v499 = vshrl.u32 %v315, 16
        %v501 = vrot.slane %v499, 7
        %v502 = vshll.u32 %v315, 16
        %v504 = vor.u32 %v501, %v502
        %v505 = vsel %vm362, %v494, %v504
        %v507 = vshrl.u32 %v316, 16
        %v509 = vrot.slane %v507, 7
        %v510 = vshll.u32 %v316, 16
        %v512 = vor.u32 %v509, %v510
        %v514 = vshrl.u32 %v317, 16
        %v516 = vrot.slane %v514, 7
        %v517 = vshll.u32 %v317, 16
        %v519 = vor.u32 %v516, %v517
        %v520 = vsel %vm362, %v509, %v519
        %v522 = vshrl.u32 %v318, 16
        %v524 = vrot.slane %v522, 7
        %v525 = vshll.u32 %v318, 16
        %v527 = vor.u32 %v524, %v525
        %v529 = vshrl.u32 %v319, 16
        %v531 = vrot.slane %v529, 7
        %v532 = vshll.u32 %v319, 16
        %v534 = vor.u32 %v531, %v532
        %v535 = vsel %vm362, %v524, %v534
        %v537 = vshrl.u32 %v320, 16
        %v539 = vrot.slane %v537, 7
        %v540 = vshll.u32 %v320, 16
        %v542 = vor.u32 %v539, %v540
        %v544 = vshrl.u32 %v321, 16
        %v546 = vrot.slane %v544, 7
        %v547 = vshll.u32 %v321, 16
        %v549 = vor.u32 %v546, %v547
        %v550 = vsel %vm362, %v539, %v549
        %v552 = vshrl.u32 %v322, 16
        %v554 = vrot.slane %v552, 7
        %v555 = vshll.u32 %v322, 16
        %v557 = vor.u32 %v554, %v555
        %v559 = vshrl.u32 %v323, 16
        %v561 = vrot.slane %v559, 7
        %v562 = vshll.u32 %v323, 16
        %v564 = vor.u32 %v561, %v562
        %v565 = vsel %vm362, %v554, %v564
        %v567 = vshrl.u32 %v324, 16
        %v569 = vrot.slane %v567, 7
        %v570 = vshll.u32 %v324, 16
        %v572 = vor.u32 %v569, %v570
        %v574 = vshrl.u32 %v325, 16
        %v576 = vrot.slane %v574, 7
        %v577 = vshll.u32 %v325, 16
        %v579 = vor.u32 %v576, %v577
        %v580 = vsel %vm362, %v569, %v579
        %v582 = vshrl.u32 %v326, 16
        %v584 = vrot.slane %v582, 7
        %v585 = vshll.u32 %v326, 16
        %v587 = vor.u32 %v584, %v585
        %v589 = vshrl.u32 %v327, 16
        %v591 = vrot.slane %v589, 7
        %v592 = vshll.u32 %v327, 16
        %v594 = vor.u32 %v591, %v592
        %v595 = vsel %vm362, %v584, %v594
        %v597 = vshrl.u32 %v328, 16
        %v599 = vrot.slane %v597, 7
        %v600 = vshll.u32 %v328, 16
        %v602 = vor.u32 %v599, %v600
        %v604 = vshrl.u32 %v329, 16
        %v606 = vrot.slane %v604, 7
        %v607 = vshll.u32 %v329, 16
        %v609 = vor.u32 %v606, %v607
        %v610 = vsel %vm362, %v599, %v609
        %v612 = vshrl.u32 %v330, 16
        %v614 = vrot.slane %v612, 7
        %v615 = vshll.u32 %v330, 16
        %v617 = vor.u32 %v614, %v615
        %v619 = vshrl.u32 %v331, 16
        %v621 = vrot.slane %v619, 7
        %v622 = vshll.u32 %v331, 16
        %v624 = vor.u32 %v621, %v622
        %v625 = vsel %vm362, %v614, %v624
        %v627 = vshrl.u32 %v332, 16
        %v629 = vrot.slane %v627, 7
        %v630 = vshll.u32 %v332, 16
        %v632 = vor.u32 %v629, %v630
        %v634 = vshrl.u32 %v333, 16
        %v636 = vrot.slane %v634, 7
        %v637 = vshll.u32 %v333, 16
        %v639 = vor.u32 %v636, %v637
        %v640 = vsel %vm362, %v629, %v639
        %v642 = vshrl.u32 %v334, 16
        %v644 = vrot.slane %v642, 7
        %v645 = vshll.u32 %v334, 16
        %v647 = vor.u32 %v644, %v645
        %v649 = vshrl.u32 %v335, 16
        %v651 = vrot.slane %v649, 7
        %v652 = vshll.u32 %v335, 16
        %v654 = vor.u32 %v651, %v652
        %v655 = vsel %vm362, %v644, %v654
        %v657 = vshrl.u32 %v336, 16
        %v659 = vrot.slane %v657, 7
        %v660 = vshll.u32 %v336, 16
        %v662 = vor.u32 %v659, %v660
        %v664 = vshrl.u32 %v337, 16
        %v666 = vrot.slane %v664, 7
        %v667 = vshll.u32 %v337, 16
        %v669 = vor.u32 %v666, %v667
        %v670 = vsel %vm362, %v659, %v669
        %v672 = vshrl.u32 %v338, 16
        %v674 = vrot.slane %v672, 7
        %v675 = vshll.u32 %v338, 16
        %v677 = vor.u32 %v674, %v675
        %v679 = vshrl.u32 %v339, 16
        %v681 = vrot.slane %v679, 7
        %v682 = vshll.u32 %v339, 16
        %v684 = vor.u32 %v681, %v682
        %v685 = vsel %vm362, %v674, %v684
        %v687 = vshrl.u32 %v340, 16
        %v689 = vrot.slane %v687, 7
        %v690 = vshll.u32 %v340, 16
        %v692 = vor.u32 %v689, %v690
        %v694 = vshrl.u32 %v341, 16
        %v696 = vrot.slane %v694, 7
        %v697 = vshll.u32 %v341, 16
        %v699 = vor.u32 %v696, %v697
        %v700 = vsel %vm362, %v689, %v699
        %v702 = vshrl.u32 %v342, 16
        %v704 = vrot.slane %v702, 7
        %v705 = vshll.u32 %v342, 16
        %v707 = vor.u32 %v704, %v705
        %v709 = vshrl.u32 %v343, 16
        %v711 = vrot.slane %v709, 7
        %v712 = vshll.u32 %v343, 16
        %v714 = vor.u32 %v711, %v712
        %v715 = vsel %vm362, %v704, %v714
        %v717 = vshrl.u32 %v344, 16
        %v719 = vrot.slane %v717, 7
        %v720 = vshll.u32 %v344, 16
        %v722 = vor.u32 %v719, %v720
        %v724 = vshrl.u32 %v345, 16
        %v726 = vrot.slane %v724, 7
        %v727 = vshll.u32 %v345, 16
        %v729 = vor.u32 %v726, %v727
        %v730 = vsel %vm362, %v719, %v729
        %v732 = vshrl.u32 %v346, 16
        %v734 = vrot.slane %v732, 7
        %v735 = vshll.u32 %v346, 16
        %v737 = vor.u32 %v734, %v735
        %v739 = vshrl.u32 %v347, 16
        %v741 = vrot.slane %v739, 7
        %v742 = vshll.u32 %v347, 16
        %v744 = vor.u32 %v741, %v742
        %v745 = vsel %vm362, %v734, %v744
        %v747 = vshrl.u32 %v348, 16
        %v749 = vrot.slane %v747, 7
        %v750 = vshll.u32 %v348, 16
        %v752 = vor.u32 %v749, %v750
        %v754 = vshrl.u32 %v349, 16
        %v756 = vrot.slane %v754, 7
        %v757 = vshll.u32 %v349, 16
        %v759 = vor.u32 %v756, %v757
        %v760 = vsel %vm362, %v749, %v759
        %v762 = vshrl.u32 %v350, 16
        %v764 = vrot.slane %v762, 7
        %v765 = vshll.u32 %v350, 16
        %v767 = vor.u32 %v764, %v765
        %v769 = vshrl.u32 %v351, 16
        %v771 = vrot.slane %v769, 7
        %v772 = vshll.u32 %v351, 16
        %v774 = vor.u32 %v771, %v772
        %v775 = vsel %vm362, %v764, %v774
        %v777 = vshrl.u32 %v352, 16
        %v779 = vrot.slane %v777, 7
        %v780 = vshll.u32 %v352, 16
        %v782 = vor.u32 %v779, %v780
        %v784 = vshrl.u32 %v353, 16
        %v786 = vrot.slane %v784, 7
        %v787 = vshll.u32 %v353, 16
        %v789 = vor.u32 %v786, %v787
        %v790 = vsel %vm362, %v779, %v789
        %v792 = vshrl.u32 %v354, 16
        %v794 = vrot.slane %v792, 7
        %v795 = vshll.u32 %v354, 16
        %v797 = vor.u32 %v794, %v795
        %v799 = vshrl.u32 %v355, 16
        %v801 = vrot.slane %v799, 7
        %v802 = vshll.u32 %v355, 16
        %v804 = vor.u32 %v801, %v802
        %v805 = vsel %vm362, %v794, %v804
        %v807 = vshrl.u32 %v356, 16
        %v809 = vrot.slane %v807, 7
        %v810 = vshll.u32 %v356, 16
        %v812 = vor.u32 %v809, %v810
        %v814 = vshrl.u32 %v357, 16
        %v816 = vrot.slane %v814, 7
        %v817 = vshll.u32 %v357, 16
        %v819 = vor.u32 %v816, %v817
        %v820 = vsel %vm362, %v809, %v819
        %v822 = vshrl.u32 %v358, 16
        %v824 = vrot.slane %v822, 7
        %v825 = vshll.u32 %v358, 16
        %v827 = vor.u32 %v824, %v825
        %v829 = vshrl.u32 %v359, 16
        %v831 = vrot.slane %v829, 7
        %v832 = vshll.u32 %v359, 16
        %v834 = vor.u32 %v831, %v832
        %v835 = vsel %vm362, %v824, %v834
        %v837 = vshrl.u32 %v360, 16
        %v839 = vrot.slane %v837, 7
        %v840 = vshll.u32 %v360, 16
        %v842 = vor.u32 %v839, %v840
        %v844 = vshrl.u32 %v361, 16
        %v846 = vrot.slane %v844, 7
        %v847 = vshll.u32 %v361, 16
        %v849 = vor.u32 %v846, %v847
        %v850 = vsel %vm362, %v839, %v849
        %vm917 = vcmask 1040384
        %vm918 = vmand %vm917, %vm362
        %v919 = vsel %vm918, 0, %v369
        %v920 = vsel %vm918, 0, %v377
        %v921 = vsel %vm918, 0, %v392
        %v922 = vsel %vm918, 0, %v407
        %v923 = vsel %vm918, 0, %v422
        %v924 = vsel %vm918, 0, %v437
        %v925 = vsel %vm918, 0, %v452
        %v926 = vsel %vm918, 0, %v467
        %v927 = vsel %vm918, 0, %v482
        %v928 = vsel %vm918, 0, %v497
        %v929 = vsel %vm918, 0, %v512
        %v930 = vsel %vm918, 0, %v527
        %v931 = vsel %vm918, 0, %v542
        %v932 = vsel %vm918, 0, %v557
        %v933 = vsel %vm918, 0, %v572
        %v934 = vsel %vm918, 0, %v587
        %v935 = vsel %vm918, 0, %v602
        %v936 = vsel %vm918, 0, %v617
        %v937 = vsel %vm918, 0, %v632
        %v938 = vsel %vm918, 0, %v647
        %v939 = vsel %vm918, 0, %v662
        %v940 = vsel %vm918, 0, %v677
        %v941 = vsel %vm918, 0, %v692
        %v942 = vsel %vm918, 0, %v707
        %v943 = vsel %vm918, 0, %v722
        %v944 = vsel %vm918, 0, %v737
        %v945 = vsel %vm918, 0, %v752
        %v946 = vsel %vm918, 0, %v767
        %v947 = vsel %vm918, 0, %v782
        %v948 = vsel %vm918, 0, %v797
        %v949 = vsel %vm918, 0, %v812
        %v950 = vsel %vm918, 0, %v827
        %v951 = vsel %vm918, 0, %v842
        %v952 = vsel %vm918, %v366, 0
        %v953 = vsel %vm918, %v381, 0
        %v954 = vsel %vm918, %v396, 0
        %v955 = vsel %vm918, %v411, 0
        %v956 = vsel %vm918, %v426, 0
        %v957 = vsel %vm918, %v441, 0
        %v958 = vsel %vm918, %v456, 0
        %v959 = vsel %vm918, %v471, 0
        %v960 = vsel %vm918, %v486, 0
        %v961 = vsel %vm918, %v501, 0
        %v962 = vsel %vm918, %v516, 0
        %v963 = vsel %vm918, %v531, 0
        %v964 = vsel %vm918, %v546, 0
        %v965 = vsel %vm918, %v561, 0
        %v966 = vsel %vm918, %v576, 0
        %v967 = vsel %vm918, %v591, 0
        %v968 = vsel %vm918, %v606, 0
        %v969 = vsel %vm918, %v621, 0
        %v970 = vsel %vm918, %v636, 0
        %v971 = vsel %vm918, %v651, 0
        %v972 = vsel %vm918, %v666, 0
        %v973 = vsel %vm918, %v681, 0
        %v974 = vsel %vm918, %v696, 0
        %v975 = vsel %vm918, %v711, 0
        %v976 = vsel %vm918, %v726, 0
        %v977 = vsel %vm918, %v741, 0
        %v978 = vsel %vm918, %v756, 0
        %v979 = vsel %vm918, %v771, 0
        %v980 = vsel %vm918, %v786, 0
        %v981 = vsel %vm918, %v801, 0
        %v982 = vsel %vm918, %v816, 0
        %v983 = vsel %vm918, %v831, 0
        %v984 = vsel %vm918, %v846, 0
        %vm985 = vsmask.f32 7424
        %v987 = vshrl.u32 %v919, 16
        %v989 = vshll.u32 %v919, 16
        %v991 = vrot.slane %v989, 1
        %v992 = vor.u32 %v987, %v991
        %v994 = vshll.u32 %v370, 16
        %v996 = vrot.slane %v994, 1
        %v997 = vsel %vm985, %v992, %v996
        %v998 = vshrl.u32 %v370, 16
        %v1000 = vor.u32 %v998, %v996
        %v1002 = vshll.u32 %v952, 16
        %v1004 = vrot.slane %v1002, 1
        %v1005 = vsel %vm985, %v1000, %v1004
        %v1007 = vshrl.u32 %v920, 16
        %v1009 = vshll.u32 %v920, 16
        %v1011 = vrot.slane %v1009, 1
        %v1012 = vor.u32 %v1007, %v1011
        %v1014 = vshll.u32 %v385, 16
        %v1016 = vrot.slane %v1014, 1
        %v1017 = vsel %vm985, %v1012, %v1016
        %v1018 = vshrl.u32 %v385, 16
        %v1020 = vor.u32 %v1018, %v1016
        %v1022 = vshll.u32 %v953, 16
        %v1024 = vrot.slane %v1022, 1
        %v1025 = vsel %vm985, %v1020, %v1024
        %v1027 = vshrl.u32 %v921, 16
        %v1029 = vshll.u32 %v921, 16
        %v1031 = vrot.slane %v1029, 1
        %v1032 = vor.u32 %v1027, %v1031
        %v1034 = vshll.u32 %v400, 16
        %v1036 = vrot.slane %v1034, 1
        %v1037 = vsel %vm985, %v1032, %v1036
        %v1038 = vshrl.u32 %v400, 16
        %v1040 = vor.u32 %v1038, %v1036
        %v1042 = vshll.u32 %v954, 16
        %v1044 = vrot.slane %v1042, 1
        %v1045 = vsel %vm985, %v1040, %v1044
        %v1047 = vshrl.u32 %v922, 16
        %v1049 = vshll.u32 %v922, 16
        %v1051 = vrot.slane %v1049, 1
        %v1052 = vor.u32 %v1047, %v1051
        %v1054 = vshll.u32 %v415, 16
        %v1056 = vrot.slane %v1054, 1
        %v1057 = vsel %vm985, %v1052, %v1056
        %v1058 = vshrl.u32 %v415, 16
        %v1060 = vor.u32 %v1058, %v1056
        %v1062 = vshll.u32 %v955, 16
        %v1064 = vrot.slane %v1062, 1
        %v1065 = vsel %vm985, %v1060, %v1064
        %v1067 = vshrl.u32 %v923, 16
        %v1069 = vshll.u32 %v923, 16
        %v1071 = vrot.slane %v1069, 1
        %v1072 = vor.u32 %v1067, %v1071
        %v1074 = vshll.u32 %v430, 16
        %v1076 = vrot.slane %v1074, 1
        %v1077 = vsel %vm985, %v1072, %v1076
        %v1078 = vshrl.u32 %v430, 16
        %v1080 = vor.u32 %v1078, %v1076
        %v1082 = vshll.u32 %v956, 16
        %v1084 = vrot.slane %v1082, 1
        %v1085 = vsel %vm985, %v1080, %v1084
        %v1087 = vshrl.u32 %v924, 16
        %v1089 = vshll.u32 %v924, 16
        %v1091 = vrot.slane %v1089, 1
        %v1092 = vor.u32 %v1087, %v1091
        %v1094 = vshll.u32 %v445, 16
        %v1096 = vrot.slane %v1094, 1
        %v1097 = vsel %vm985, %v1092, %v1096
        %v1098 = vshrl.u32 %v445, 16
        %v1100 = vor.u32 %v1098, %v1096
        %v1102 = vshll.u32 %v957, 16
        %v1104 = vrot.slane %v1102, 1
        %v1105 = vsel %vm985, %v1100, %v1104
        %v1107 = vshrl.u32 %v925, 16
        %v1109 = vshll.u32 %v925, 16
        %v1111 = vrot.slane %v1109, 1
        %v1112 = vor.u32 %v1107, %v1111
        %v1114 = vshll.u32 %v460, 16
        %v1116 = vrot.slane %v1114, 1
        %v1117 = vsel %vm985, %v1112, %v1116
        %v1118 = vshrl.u32 %v460, 16
        %v1120 = vor.u32 %v1118, %v1116
        %v1122 = vshll.u32 %v958, 16
        %v1124 = vrot.slane %v1122, 1
        %v1125 = vsel %vm985, %v1120, %v1124
        %v1127 = vshrl.u32 %v926, 16
        %v1129 = vshll.u32 %v926, 16
        %v1131 = vrot.slane %v1129, 1
        %v1132 = vor.u32 %v1127, %v1131
        %v1134 = vshll.u32 %v475, 16
        %v1136 = vrot.slane %v1134, 1
        %v1137 = vsel %vm985, %v1132, %v1136
        %v1138 = vshrl.u32 %v475, 16
        %v1140 = vor.u32 %v1138, %v1136
        %v1142 = vshll.u32 %v959, 16
        %v1144 = vrot.slane %v1142, 1
        %v1145 = vsel %vm985, %v1140, %v1144
        %v1147 = vshrl.u32 %v927, 16
        %v1149 = vshll.u32 %v927, 16
        %v1151 = vrot.slane %v1149, 1
        %v1152 = vor.u32 %v1147, %v1151
        %v1154 = vshll.u32 %v490, 16
        %v1156 = vrot.slane %v1154, 1
        %v1157 = vsel %vm985, %v1152, %v1156
        %v1158 = vshrl.u32 %v490, 16
        %v1160 = vor.u32 %v1158, %v1156
        %v1162 = vshll.u32 %v960, 16
        %v1164 = vrot.slane %v1162, 1
        %v1165 = vsel %vm985, %v1160, %v1164
        %v1167 = vshrl.u32 %v928, 16
        %v1169 = vshll.u32 %v928, 16
        %v1171 = vrot.slane %v1169, 1
        %v1172 = vor.u32 %v1167, %v1171
        %v1174 = vshll.u32 %v505, 16
        %v1176 = vrot.slane %v1174, 1
        %v1177 = vsel %vm985, %v1172, %v1176
        %v1178 = vshrl.u32 %v505, 16
        %v1180 = vor.u32 %v1178, %v1176
        %v1182 = vshll.u32 %v961, 16
        %v1184 = vrot.slane %v1182, 1
        %v1185 = vsel %vm985, %v1180, %v1184
        %v1187 = vshrl.u32 %v929, 16
        %v1189 = vshll.u32 %v929, 16
        %v1191 = vrot.slane %v1189, 1
        %v1192 = vor.u32 %v1187, %v1191
        %v1194 = vshll.u32 %v520, 16
        %v1196 = vrot.slane %v1194, 1
        %v1197 = vsel %vm985, %v1192, %v1196
        %v1198 = vshrl.u32 %v520, 16
        %v1200 = vor.u32 %v1198, %v1196
        %v1202 = vshll.u32 %v962, 16
        %v1204 = vrot.slane %v1202, 1
        %v1205 = vsel %vm985, %v1200, %v1204
        %v1207 = vshrl.u32 %v930, 16
        %v1209 = vshll.u32 %v930, 16
        %v1211 = vrot.slane %v1209, 1
        %v1212 = vor.u32 %v1207, %v1211
        %v1214 = vshll.u32 %v535, 16
        %v1216 = vrot.slane %v1214, 1
        %v1217 = vsel %vm985, %v1212, %v1216
        %v1218 = vshrl.u32 %v535, 16
        %v1220 = vor.u32 %v1218, %v1216
        %v1222 = vshll.u32 %v963, 16
        %v1224 = vrot.slane %v1222, 1
        %v1225 = vsel %vm985, %v1220, %v1224
        %v1227 = vshrl.u32 %v931, 16
        %v1229 = vshll.u32 %v931, 16
        %v1231 = vrot.slane %v1229, 1
        %v1232 = vor.u32 %v1227, %v1231
        %v1234 = vshll.u32 %v550, 16
        %v1236 = vrot.slane %v1234, 1
        %v1237 = vsel %vm985, %v1232, %v1236
        %v1238 = vshrl.u32 %v550, 16
        %v1240 = vor.u32 %v1238, %v1236
        %v1242 = vshll.u32 %v964, 16
        %v1244 = vrot.slane %v1242, 1
        %v1245 = vsel %vm985, %v1240, %v1244
        %v1247 = vshrl.u32 %v932, 16
        %v1249 = vshll.u32 %v932, 16
        %v1251 = vrot.slane %v1249, 1
        %v1252 = vor.u32 %v1247, %v1251
        %v1254 = vshll.u32 %v565, 16
        %v1256 = vrot.slane %v1254, 1
        %v1257 = vsel %vm985, %v1252, %v1256
        %v1258 = vshrl.u32 %v565, 16
        %v1260 = vor.u32 %v1258, %v1256
        %v1262 = vshll.u32 %v965, 16
        %v1264 = vrot.slane %v1262, 1
        %v1265 = vsel %vm985, %v1260, %v1264
        %v1267 = vshrl.u32 %v933, 16
        %v1269 = vshll.u32 %v933, 16
        %v1271 = vrot.slane %v1269, 1
        %v1272 = vor.u32 %v1267, %v1271
        %v1274 = vshll.u32 %v580, 16
        %v1276 = vrot.slane %v1274, 1
        %v1277 = vsel %vm985, %v1272, %v1276
        %v1278 = vshrl.u32 %v580, 16
        %v1280 = vor.u32 %v1278, %v1276
        %v1282 = vshll.u32 %v966, 16
        %v1284 = vrot.slane %v1282, 1
        %v1285 = vsel %vm985, %v1280, %v1284
        %v1287 = vshrl.u32 %v934, 16
        %v1289 = vshll.u32 %v934, 16
        %v1291 = vrot.slane %v1289, 1
        %v1292 = vor.u32 %v1287, %v1291
        %v1294 = vshll.u32 %v595, 16
        %v1296 = vrot.slane %v1294, 1
        %v1297 = vsel %vm985, %v1292, %v1296
        %v1298 = vshrl.u32 %v595, 16
        %v1300 = vor.u32 %v1298, %v1296
        %v1302 = vshll.u32 %v967, 16
        %v1304 = vrot.slane %v1302, 1
        %v1305 = vsel %vm985, %v1300, %v1304
        %v1307 = vshrl.u32 %v935, 16
        %v1309 = vshll.u32 %v935, 16
        %v1311 = vrot.slane %v1309, 1
        %v1312 = vor.u32 %v1307, %v1311
        %v1314 = vshll.u32 %v610, 16
        %v1316 = vrot.slane %v1314, 1
        %v1317 = vsel %vm985, %v1312, %v1316
        %v1318 = vshrl.u32 %v610, 16
        %v1320 = vor.u32 %v1318, %v1316
        %v1322 = vshll.u32 %v968, 16
        %v1324 = vrot.slane %v1322, 1
        %v1325 = vsel %vm985, %v1320, %v1324
        %v1327 = vshrl.u32 %v936, 16
        %v1329 = vshll.u32 %v936, 16
        %v1331 = vrot.slane %v1329, 1
        %v1332 = vor.u32 %v1327, %v1331
        %v1334 = vshll.u32 %v625, 16
        %v1336 = vrot.slane %v1334, 1
        %v1337 = vsel %vm985, %v1332, %v1336
        %v1338 = vshrl.u32 %v625, 16
        %v1340 = vor.u32 %v1338, %v1336
        %v1342 = vshll.u32 %v969, 16
        %v1344 = vrot.slane %v1342, 1
        %v1345 = vsel %vm985, %v1340, %v1344
        %v1347 = vshrl.u32 %v937, 16
        %v1349 = vshll.u32 %v937, 16
        %v1351 = vrot.slane %v1349, 1
        %v1352 = vor.u32 %v1347, %v1351
        %v1354 = vshll.u32 %v640, 16
        %v1356 = vrot.slane %v1354, 1
        %v1357 = vsel %vm985, %v1352, %v1356
        %v1358 = vshrl.u32 %v640, 16
        %v1360 = vor.u32 %v1358, %v1356
        %v1362 = vshll.u32 %v970, 16
        %v1364 = vrot.slane %v1362, 1
        %v1365 = vsel %vm985, %v1360, %v1364
        %v1367 = vshrl.u32 %v938, 16
        %v1369 = vshll.u32 %v938, 16
        %v1371 = vrot.slane %v1369, 1
        %v1372 = vor.u32 %v1367, %v1371
        %v1374 = vshll.u32 %v655, 16
        %v1376 = vrot.slane %v1374, 1
        %v1377 = vsel %vm985, %v1372, %v1376
        %v1378 = vshrl.u32 %v655, 16
        %v1380 = vor.u32 %v1378, %v1376
        %v1382 = vshll.u32 %v971, 16
        %v1384 = vrot.slane %v1382, 1
        %v1385 = vsel %vm985, %v1380, %v1384
        %v1387 = vshrl.u32 %v939, 16
        %v1389 = vshll.u32 %v939, 16
        %v1391 = vrot.slane %v1389, 1
        %v1392 = vor.u32 %v1387, %v1391
        %v1394 = vshll.u32 %v670, 16
        %v1396 = vrot.slane %v1394, 1
        %v1397 = vsel %vm985, %v1392, %v1396
        %v1398 = vshrl.u32 %v670, 16
        %v1400 = vor.u32 %v1398, %v1396
        %v1402 = vshll.u32 %v972, 16
        %v1404 = vrot.slane %v1402, 1
        %v1405 = vsel %vm985, %v1400, %v1404
        %v1407 = vshrl.u32 %v940, 16
        %v1409 = vshll.u32 %v940, 16
        %v1411 = vrot.slane %v1409, 1
        %v1412 = vor.u32 %v1407, %v1411
        %v1414 = vshll.u32 %v685, 16
        %v1416 = vrot.slane %v1414, 1
        %v1417 = vsel %vm985, %v1412, %v1416
        %v1418 = vshrl.u32 %v685, 16
        %v1420 = vor.u32 %v1418, %v1416
        %v1422 = vshll.u32 %v973, 16
        %v1424 = vrot.slane %v1422, 1
        %v1425 = vsel %vm985, %v1420, %v1424
        %v1427 = vshrl.u32 %v941, 16
        %v1429 = vshll.u32 %v941, 16
        %v1431 = vrot.slane %v1429, 1
        %v1432 = vor.u32 %v1427, %v1431
        %v1434 = vshll.u32 %v700, 16
        %v1436 = vrot.slane %v1434, 1
        %v1437 = vsel %vm985, %v1432, %v1436
        %v1438 = vshrl.u32 %v700, 16
        %v1440 = vor.u32 %v1438, %v1436
        %v1442 = vshll.u32 %v974, 16
        %v1444 = vrot.slane %v1442, 1
        %v1445 = vsel %vm985, %v1440, %v1444
        %v1447 = vshrl.u32 %v942, 16
        %v1449 = vshll.u32 %v942, 16
        %v1451 = vrot.slane %v1449, 1
        %v1452 = vor.u32 %v1447, %v1451
        %v1454 = vshll.u32 %v715, 16
        %v1456 = vrot.slane %v1454, 1
        %v1457 = vsel %vm985, %v1452, %v1456
        %v1458 = vshrl.u32 %v715, 16
        %v1460 = vor.u32 %v1458, %v1456
        %v1462 = vshll.u32 %v975, 16
        %v1464 = vrot.slane %v1462, 1
        %v1465 = vsel %vm985, %v1460, %v1464
        %v1467 = vshrl.u32 %v943, 16
        %v1469 = vshll.u32 %v943, 16
        %v1471 = vrot.slane %v1469, 1
        %v1472 = vor.u32 %v1467, %v1471
        %v1474 = vshll.u32 %v730, 16
        %v1476 = vrot.slane %v1474, 1
        %v1477 = vsel %vm985, %v1472, %v1476
        %v1478 = vshrl.u32 %v730, 16
        %v1480 = vor.u32 %v1478, %v1476
        %v1482 = vshll.u32 %v976, 16
        %v1484 = vrot.slane %v1482, 1
        %v1485 = vsel %vm985, %v1480, %v1484
        %v1487 = vshrl.u32 %v944, 16
        %v1489 = vshll.u32 %v944, 16
        %v1491 = vrot.slane %v1489, 1
        %v1492 = vor.u32 %v1487, %v1491
        %v1494 = vshll.u32 %v745, 16
        %v1496 = vrot.slane %v1494, 1
        %v1497 = vsel %vm985, %v1492, %v1496
        %v1498 = vshrl.u32 %v745, 16
        %v1500 = vor.u32 %v1498, %v1496
        %v1502 = vshll.u32 %v977, 16
        %v1504 = vrot.slane %v1502, 1
        %v1505 = vsel %vm985, %v1500, %v1504
        %v1507 = vshrl.u32 %v945, 16
        %v1509 = vshll.u32 %v945, 16
        %v1511 = vrot.slane %v1509, 1
        %v1512 = vor.u32 %v1507, %v1511
        %v1514 = vshll.u32 %v760, 16
        %v1516 = vrot.slane %v1514, 1
        %v1517 = vsel %vm985, %v1512, %v1516
        %v1518 = vshrl.u32 %v760, 16
        %v1520 = vor.u32 %v1518, %v1516
        %v1522 = vshll.u32 %v978, 16
        %v1524 = vrot.slane %v1522, 1
        %v1525 = vsel %vm985, %v1520, %v1524
        %v1527 = vshrl.u32 %v946, 16
        %v1529 = vshll.u32 %v946, 16
        %v1531 = vrot.slane %v1529, 1
        %v1532 = vor.u32 %v1527, %v1531
        %v1534 = vshll.u32 %v775, 16
        %v1536 = vrot.slane %v1534, 1
        %v1537 = vsel %vm985, %v1532, %v1536
        %v1538 = vshrl.u32 %v775, 16
        %v1540 = vor.u32 %v1538, %v1536
        %v1542 = vshll.u32 %v979, 16
        %v1544 = vrot.slane %v1542, 1
        %v1545 = vsel %vm985, %v1540, %v1544
        %v1547 = vshrl.u32 %v947, 16
        %v1549 = vshll.u32 %v947, 16
        %v1551 = vrot.slane %v1549, 1
        %v1552 = vor.u32 %v1547, %v1551
        %v1554 = vshll.u32 %v790, 16
        %v1556 = vrot.slane %v1554, 1
        %v1557 = vsel %vm985, %v1552, %v1556
        %v1558 = vshrl.u32 %v790, 16
        %v1560 = vor.u32 %v1558, %v1556
        %v1562 = vshll.u32 %v980, 16
        %v1564 = vrot.slane %v1562, 1
        %v1565 = vsel %vm985, %v1560, %v1564
        %v1567 = vshrl.u32 %v948, 16
        %v1569 = vshll.u32 %v948, 16
        %v1571 = vrot.slane %v1569, 1
        %v1572 = vor.u32 %v1567, %v1571
        %v1574 = vshll.u32 %v805, 16
        %v1576 = vrot.slane %v1574, 1
        %v1577 = vsel %vm985, %v1572, %v1576
        %v1578 = vshrl.u32 %v805, 16
        %v1580 = vor.u32 %v1578, %v1576
        %v1582 = vshll.u32 %v981, 16
        %v1584 = vrot.slane %v1582, 1
        %v1585 = vsel %vm985, %v1580, %v1584
        %v1587 = vshrl.u32 %v949, 16
        %v1589 = vshll.u32 %v949, 16
        %v1591 = vrot.slane %v1589, 1
        %v1592 = vor.u32 %v1587, %v1591
        %v1594 = vshll.u32 %v820, 16
        %v1596 = vrot.slane %v1594, 1
        %v1597 = vsel %vm985, %v1592, %v1596
        %v1598 = vshrl.u32 %v820, 16
        %v1600 = vor.u32 %v1598, %v1596
        %v1602 = vshll.u32 %v982, 16
        %v1604 = vrot.slane %v1602, 1
        %v1605 = vsel %vm985, %v1600, %v1604
        %v1607 = vshrl.u32 %v950, 16
        %v1609 = vshll.u32 %v950, 16
        %v1611 = vrot.slane %v1609, 1
        %v1612 = vor.u32 %v1607, %v1611
        %v1614 = vshll.u32 %v835, 16
        %v1616 = vrot.slane %v1614, 1
        %v1617 = vsel %vm985, %v1612, %v1616
        %v1618 = vshrl.u32 %v835, 16
        %v1620 = vor.u32 %v1618, %v1616
        %v1622 = vshll.u32 %v983, 16
        %v1624 = vrot.slane %v1622, 1
        %v1625 = vsel %vm985, %v1620, %v1624
        %1626 = vrot.lane.b32.xlu0 %v997, 3
        %v1627 = vpop.permute.xlu0 %1626
        %1628 = vrot.lane.b32.xlu0 %v1005, 3
        %v1629 = vpop.permute.xlu0 %1628
        %1630 = vrot.lane.b32.xlu0 %v1017, 3
        %v1631 = vpop.permute.xlu0 %1630
        %1632 = vrot.lane.b32.xlu0 %v1025, 3
        %v1633 = vpop.permute.xlu0 %1632
        %1634 = vrot.lane.b32.xlu0 %v1037, 3
        %v1635 = vpop.permute.xlu0 %1634
        %1636 = vrot.lane.b32.xlu0 %v1045, 3
        %v1637 = vpop.permute.xlu0 %1636
        %1638 = vrot.lane.b32.xlu0 %v1057, 3
        %v1639 = vpop.permute.xlu0 %1638
        %1640 = vrot.lane.b32.xlu0 %v1065, 3
        %v1641 = vpop.permute.xlu0 %1640
        %1642 = vrot.lane.b32.xlu0 %v1077, 3
        %v1643 = vpop.permute.xlu0 %1642
        %1644 = vrot.lane.b32.xlu0 %v1085, 3
        %v1645 = vpop.permute.xlu0 %1644
        %1646 = vrot.lane.b32.xlu0 %v1097, 3
        %v1647 = vpop.permute.xlu0 %1646
        %1648 = vrot.lane.b32.xlu0 %v1105, 3
        %v1649 = vpop.permute.xlu0 %1648
        %1650 = vrot.lane.b32.xlu0 %v1117, 3
        %v1651 = vpop.permute.xlu0 %1650
        %1652 = vrot.lane.b32.xlu0 %v1125, 3
        %v1653 = vpop.permute.xlu0 %1652
        %1654 = vrot.lane.b32.xlu0 %v1137, 3
        %v1655 = vpop.permute.xlu0 %1654
        %1656 = vrot.lane.b32.xlu0 %v1145, 3
        %v1657 = vpop.permute.xlu0 %1656
        %1658 = vrot.lane.b32.xlu0 %v1157, 3
        %v1659 = vpop.permute.xlu0 %1658
        %1660 = vrot.lane.b32.xlu0 %v1165, 3
        %v1661 = vpop.permute.xlu0 %1660
        %1662 = vrot.lane.b32.xlu0 %v1177, 3
        %v1663 = vpop.permute.xlu0 %1662
        %1664 = vrot.lane.b32.xlu0 %v1185, 3
        %v1665 = vpop.permute.xlu0 %1664
        %1666 = vrot.lane.b32.xlu0 %v1197, 3
        %v1667 = vpop.permute.xlu0 %1666
        %1668 = vrot.lane.b32.xlu0 %v1205, 3
        %v1669 = vpop.permute.xlu0 %1668
        %1670 = vrot.lane.b32.xlu0 %v1217, 3
        %v1671 = vpop.permute.xlu0 %1670
        %1672 = vrot.lane.b32.xlu0 %v1225, 3
        %v1673 = vpop.permute.xlu0 %1672
        %1674 = vrot.lane.b32.xlu0 %v1237, 3
        %v1675 = vpop.permute.xlu0 %1674
        %1676 = vrot.lane.b32.xlu0 %v1245, 3
        %v1677 = vpop.permute.xlu0 %1676
        %1678 = vrot.lane.b32.xlu0 %v1257, 3
        %v1679 = vpop.permute.xlu0 %1678
        %1680 = vrot.lane.b32.xlu0 %v1265, 3
        %v1681 = vpop.permute.xlu0 %1680
        %1682 = vrot.lane.b32.xlu0 %v1277, 3
        %v1683 = vpop.permute.xlu0 %1682
        %1684 = vrot.lane.b32.xlu0 %v1285, 3
        %v1685 = vpop.permute.xlu0 %1684
        %1686 = vrot.lane.b32.xlu0 %v1297, 3
        %v1687 = vpop.permute.xlu0 %1686
        %1688 = vrot.lane.b32.xlu0 %v1305, 3
        %v1689 = vpop.permute.xlu0 %1688
        %1690 = vrot.lane.b32.xlu0 %v1317, 3
        %v1691 = vpop.permute.xlu0 %1690
        %1692 = vrot.lane.b32.xlu0 %v1325, 3
        %v1693 = vpop.permute.xlu0 %1692
        %1694 = vrot.lane.b32.xlu0 %v1337, 3
        %v1695 = vpop.permute.xlu0 %1694
        %1696 = vrot.lane.b32.xlu0 %v1345, 3
        %v1697 = vpop.permute.xlu0 %1696
        %1698 = vrot.lane.b32.xlu0 %v1357, 3
        %v1699 = vpop.permute.xlu0 %1698
        %1700 = vrot.lane.b32.xlu0 %v1365, 3
        %v1701 = vpop.permute.xlu0 %1700
        %1702 = vrot.lane.b32.xlu0 %v1377, 3
        %v1703 = vpop.permute.xlu0 %1702
        %1704 = vrot.lane.b32.xlu0 %v1385, 3
        %v1705 = vpop.permute.xlu0 %1704
        %1706 = vrot.lane.b32.xlu0 %v1397, 3
        %v1707 = vpop.permute.xlu0 %1706
        %1708 = vrot.lane.b32.xlu0 %v1405, 3
        %v1709 = vpop.permute.xlu0 %1708
        %1710 = vrot.lane.b32.xlu0 %v1417, 3
        %v1711 = vpop.permute.xlu0 %1710
        %1712 = vrot.lane.b32.xlu0 %v1425, 3
        %v1713 = vpop.permute.xlu0 %1712
        %1714 = vrot.lane.b32.xlu0 %v1437, 3
        %v1715 = vpop.permute.xlu0 %1714
        %1716 = vrot.lane.b32.xlu0 %v1445, 3
        %v1717 = vpop.permute.xlu0 %1716
        %1718 = vrot.lane.b32.xlu0 %v1457, 3
        %v1719 = vpop.permute.xlu0 %1718
        %1720 = vrot.lane.b32.xlu0 %v1465, 3
        %v1721 = vpop.permute.xlu0 %1720
        %1722 = vrot.lane.b32.xlu0 %v1477, 3
        %v1723 = vpop.permute.xlu0 %1722
        %1724 = vrot.lane.b32.xlu0 %v1485, 3
        %v1725 = vpop.permute.xlu0 %1724
        %1726 = vrot.lane.b32.xlu0 %v1497, 3
        %v1727 = vpop.permute.xlu0 %1726
        %1728 = vrot.lane.b32.xlu0 %v1505, 3
        %v1729 = vpop.permute.xlu0 %1728
        %1730 = vrot.lane.b32.xlu0 %v1517, 3
        %v1731 = vpop.permute.xlu0 %1730
        %1732 = vrot.lane.b32.xlu0 %v1525, 3
        %v1733 = vpop.permute.xlu0 %1732
        %1734 = vrot.lane.b32.xlu0 %v1537, 3
        %v1735 = vpop.permute.xlu0 %1734
        %1736 = vrot.lane.b32.xlu0 %v1545, 3
        %v1737 = vpop.permute.xlu0 %1736
        %1738 = vrot.lane.b32.xlu0 %v1557, 3
        %v1739 = vpop.permute.xlu0 %1738
        %1740 = vrot.lane.b32.xlu0 %v1565, 3
        %v1741 = vpop.permute.xlu0 %1740
        %1742 = vrot.lane.b32.xlu0 %v1577, 3
        %v1743 = vpop.permute.xlu0 %1742
        %1744 = vrot.lane.b32.xlu0 %v1585, 3
        %v1745 = vpop.permute.xlu0 %1744
        %1746 = vrot.lane.b32.xlu0 %v1597, 3
        %v1747 = vpop.permute.xlu0 %1746
        %1748 = vrot.lane.b32.xlu0 %v1605, 3
        %v1749 = vpop.permute.xlu0 %1748
        %1750 = vrot.lane.b32.xlu0 %v1617, 3
        %v1751 = vpop.permute.xlu0 %1750
        %1752 = vrot.lane.b32.xlu0 %v1625, 3
        %v1753 = vpop.permute.xlu0 %1752
        %vm1818 = vcmask 1046528
        %v1819 = vrot.slane %v919, 1
        %v1820 = vrot.slane %v370, 1
        %v1821 = vsel %vm1818, %v1819, %v1820
        %v1822 = vrot.slane %v952, 1
        %v1823 = vsel %vm1818, %v1820, %v1822
        %v1824 = vrot.slane %v920, 1
        %v1825 = vrot.slane %v385, 1
        %v1826 = vsel %vm1818, %v1824, %v1825
        %v1827 = vrot.slane %v953, 1
        %v1828 = vsel %vm1818, %v1825, %v1827
        %v1829 = vrot.slane %v921, 1
        %v1830 = vrot.slane %v400, 1
        %v1831 = vsel %vm1818, %v1829, %v1830
        %v1832 = vrot.slane %v954, 1
        %v1833 = vsel %vm1818, %v1830, %v1832
        %v1834 = vrot.slane %v922, 1
        %v1835 = vrot.slane %v415, 1
        %v1836 = vsel %vm1818, %v1834, %v1835
        %v1837 = vrot.slane %v955, 1
        %v1838 = vsel %vm1818, %v1835, %v1837
        %v1839 = vrot.slane %v923, 1
        %v1840 = vrot.slane %v430, 1
        %v1841 = vsel %vm1818, %v1839, %v1840
        %v1842 = vrot.slane %v956, 1
        %v1843 = vsel %vm1818, %v1840, %v1842
        %v1844 = vrot.slane %v924, 1
        %v1845 = vrot.slane %v445, 1
        %v1846 = vsel %vm1818, %v1844, %v1845
        %v1847 = vrot.slane %v957, 1
        %v1848 = vsel %vm1818, %v1845, %v1847
        %v1849 = vrot.slane %v925, 1
        %v1850 = vrot.slane %v460, 1
        %v1851 = vsel %vm1818, %v1849, %v1850
        %v1852 = vrot.slane %v958, 1
        %v1853 = vsel %vm1818, %v1850, %v1852
        %v1854 = vrot.slane %v926, 1
        %v1855 = vrot.slane %v475, 1
        %v1856 = vsel %vm1818, %v1854, %v1855
        %v1857 = vrot.slane %v959, 1
        %v1858 = vsel %vm1818, %v1855, %v1857
        %v1859 = vrot.slane %v927, 1
        %v1860 = vrot.slane %v490, 1
        %v1861 = vsel %vm1818, %v1859, %v1860
        %v1862 = vrot.slane %v960, 1
        %v1863 = vsel %vm1818, %v1860, %v1862
        %v1864 = vrot.slane %v928, 1
        %v1865 = vrot.slane %v505, 1
        %v1866 = vsel %vm1818, %v1864, %v1865
        %v1867 = vrot.slane %v961, 1
        %v1868 = vsel %vm1818, %v1865, %v1867
        %v1869 = vrot.slane %v929, 1
        %v1870 = vrot.slane %v520, 1
        %v1871 = vsel %vm1818, %v1869, %v1870
        %v1872 = vrot.slane %v962, 1
        %v1873 = vsel %vm1818, %v1870, %v1872
        %v1874 = vrot.slane %v930, 1
        %v1875 = vrot.slane %v535, 1
        %v1876 = vsel %vm1818, %v1874, %v1875
        %v1877 = vrot.slane %v963, 1
        %v1878 = vsel %vm1818, %v1875, %v1877
        %v1879 = vrot.slane %v931, 1
        %v1880 = vrot.slane %v550, 1
        %v1881 = vsel %vm1818, %v1879, %v1880
        %v1882 = vrot.slane %v964, 1
        %v1883 = vsel %vm1818, %v1880, %v1882
        %v1884 = vrot.slane %v932, 1
        %v1885 = vrot.slane %v565, 1
        %v1886 = vsel %vm1818, %v1884, %v1885
        %v1887 = vrot.slane %v965, 1
        %v1888 = vsel %vm1818, %v1885, %v1887
        %v1889 = vrot.slane %v933, 1
        %v1890 = vrot.slane %v580, 1
        %v1891 = vsel %vm1818, %v1889, %v1890
        %v1892 = vrot.slane %v966, 1
        %v1893 = vsel %vm1818, %v1890, %v1892
        %v1894 = vrot.slane %v934, 1
        %v1895 = vrot.slane %v595, 1
        %v1896 = vsel %vm1818, %v1894, %v1895
        %v1897 = vrot.slane %v967, 1
        %v1898 = vsel %vm1818, %v1895, %v1897
        %v1899 = vrot.slane %v935, 1
        %v1900 = vrot.slane %v610, 1
        %v1901 = vsel %vm1818, %v1899, %v1900
        %v1902 = vrot.slane %v968, 1
        %v1903 = vsel %vm1818, %v1900, %v1902
        %v1904 = vrot.slane %v936, 1
        %v1905 = vrot.slane %v625, 1
        %v1906 = vsel %vm1818, %v1904, %v1905
        %v1907 = vrot.slane %v969, 1
        %v1908 = vsel %vm1818, %v1905, %v1907
        %v1909 = vrot.slane %v937, 1
        %v1910 = vrot.slane %v640, 1
        %v1911 = vsel %vm1818, %v1909, %v1910
        %v1912 = vrot.slane %v970, 1
        %v1913 = vsel %vm1818, %v1910, %v1912
        %v1914 = vrot.slane %v938, 1
        %v1915 = vrot.slane %v655, 1
        %v1916 = vsel %vm1818, %v1914, %v1915
        %v1917 = vrot.slane %v971, 1
        %v1918 = vsel %vm1818, %v1915, %v1917
        %v1919 = vrot.slane %v939, 1
        %v1920 = vrot.slane %v670, 1
        %v1921 = vsel %vm1818, %v1919, %v1920
        %v1922 = vrot.slane %v972, 1
        %v1923 = vsel %vm1818, %v1920, %v1922
        %v1924 = vrot.slane %v940, 1
        %v1925 = vrot.slane %v685, 1
        %v1926 = vsel %vm1818, %v1924, %v1925
        %v1927 = vrot.slane %v973, 1
        %v1928 = vsel %vm1818, %v1925, %v1927
        %v1929 = vrot.slane %v941, 1
        %v1930 = vrot.slane %v700, 1
        %v1931 = vsel %vm1818, %v1929, %v1930
        %v1932 = vrot.slane %v974, 1
        %v1933 = vsel %vm1818, %v1930, %v1932
        %v1934 = vrot.slane %v942, 1
        %v1935 = vrot.slane %v715, 1
        %v1936 = vsel %vm1818, %v1934, %v1935
        %v1937 = vrot.slane %v975, 1
        %v1938 = vsel %vm1818, %v1935, %v1937
        %v1939 = vrot.slane %v943, 1
        %v1940 = vrot.slane %v730, 1
        %v1941 = vsel %vm1818, %v1939, %v1940
        %v1942 = vrot.slane %v976, 1
        %v1943 = vsel %vm1818, %v1940, %v1942
        %v1944 = vrot.slane %v944, 1
        %v1945 = vrot.slane %v745, 1
        %v1946 = vsel %vm1818, %v1944, %v1945
        %v1947 = vrot.slane %v977, 1
        %v1948 = vsel %vm1818, %v1945, %v1947
        %v1949 = vrot.slane %v945, 1
        %v1950 = vrot.slane %v760, 1
        %v1951 = vsel %vm1818, %v1949, %v1950
        %v1952 = vrot.slane %v978, 1
        %v1953 = vsel %vm1818, %v1950, %v1952
        %v1954 = vrot.slane %v946, 1
        %v1955 = vrot.slane %v775, 1
        %v1956 = vsel %vm1818, %v1954, %v1955
        %v1957 = vrot.slane %v979, 1
        %v1958 = vsel %vm1818, %v1955, %v1957
        %v1959 = vrot.slane %v947, 1
        %v1960 = vrot.slane %v790, 1
        %v1961 = vsel %vm1818, %v1959, %v1960
        %v1962 = vrot.slane %v980, 1
        %v1963 = vsel %vm1818, %v1960, %v1962
        %v1964 = vrot.slane %v948, 1
        %v1965 = vrot.slane %v805, 1
        %v1966 = vsel %vm1818, %v1964, %v1965
        %v1967 = vrot.slane %v981, 1
        %v1968 = vsel %vm1818, %v1965, %v1967
        %v1969 = vrot.slane %v949, 1
        %v1970 = vrot.slane %v820, 1
        %v1971 = vsel %vm1818, %v1969, %v1970
        %v1972 = vrot.slane %v982, 1
        %v1973 = vsel %vm1818, %v1970, %v1972
        %v1974 = vrot.slane %v950, 1
        %v1975 = vrot.slane %v835, 1
        %v1976 = vsel %vm1818, %v1974, %v1975
        %v1977 = vrot.slane %v983, 1
        %v1978 = vsel %vm1818, %v1975, %v1977
        %1979 = vrot.lane.b32.xlu0 %v1821, 6
        %v1980 = vpop.permute.xlu0 %1979
        %1981 = vrot.lane.b32.xlu0 %v1823, 6
        %v1982 = vpop.permute.xlu0 %1981
        %1983 = vrot.lane.b32.xlu0 %v1826, 6
        %v1984 = vpop.permute.xlu0 %1983
        %1985 = vrot.lane.b32.xlu0 %v1828, 6
        %v1986 = vpop.permute.xlu0 %1985
        %1987 = vrot.lane.b32.xlu0 %v1831, 6
        %v1988 = vpop.permute.xlu0 %1987
        %1989 = vrot.lane.b32.xlu0 %v1833, 6
        %v1990 = vpop.permute.xlu0 %1989
        %1991 = vrot.lane.b32.xlu0 %v1836, 6
        %v1992 = vpop.permute.xlu0 %1991
        %1993 = vrot.lane.b32.xlu0 %v1838, 6
        %v1994 = vpop.permute.xlu0 %1993
        %1995 = vrot.lane.b32.xlu0 %v1841, 6
        %v1996 = vpop.permute.xlu0 %1995
        %1997 = vrot.lane.b32.xlu0 %v1843, 6
        %v1998 = vpop.permute.xlu0 %1997
        %1999 = vrot.lane.b32.xlu0 %v1846, 6
        %v2000 = vpop.permute.xlu0 %1999
        %2001 = vrot.lane.b32.xlu0 %v1848, 6
        %v2002 = vpop.permute.xlu0 %2001
        %2003 = vrot.lane.b32.xlu0 %v1851, 6
        %v2004 = vpop.permute.xlu0 %2003
        %2005 = vrot.lane.b32.xlu0 %v1853, 6
        %v2006 = vpop.permute.xlu0 %2005
        %2007 = vrot.lane.b32.xlu0 %v1856, 6
        %v2008 = vpop.permute.xlu0 %2007
        %2009 = vrot.lane.b32.xlu0 %v1858, 6
        %v2010 = vpop.permute.xlu0 %2009
        %2011 = vrot.lane.b32.xlu0 %v1861, 6
        %v2012 = vpop.permute.xlu0 %2011
        %2013 = vrot.lane.b32.xlu0 %v1863, 6
        %v2014 = vpop.permute.xlu0 %2013
        %2015 = vrot.lane.b32.xlu0 %v1866, 6
        %v2016 = vpop.permute.xlu0 %2015
        %2017 = vrot.lane.b32.xlu0 %v1868, 6
        %v2018 = vpop.permute.xlu0 %2017
        %2019 = vrot.lane.b32.xlu0 %v1871, 6
        %v2020 = vpop.permute.xlu0 %2019
        %2021 = vrot.lane.b32.xlu0 %v1873, 6
        %v2022 = vpop.permute.xlu0 %2021
        %2023 = vrot.lane.b32.xlu0 %v1876, 6
        %v2024 = vpop.permute.xlu0 %2023
        %2025 = vrot.lane.b32.xlu0 %v1878, 6
        %v2026 = vpop.permute.xlu0 %2025
        %2027 = vrot.lane.b32.xlu0 %v1881, 6
        %v2028 = vpop.permute.xlu0 %2027
        %2029 = vrot.lane.b32.xlu0 %v1883, 6
        %v2030 = vpop.permute.xlu0 %2029
        %2031 = vrot.lane.b32.xlu0 %v1886, 6
        %v2032 = vpop.permute.xlu0 %2031
        %2033 = vrot.lane.b32.xlu0 %v1888, 6
        %v2034 = vpop.permute.xlu0 %2033
        %2035 = vrot.lane.b32.xlu0 %v1891, 6
        %v2036 = vpop.permute.xlu0 %2035
        %2037 = vrot.lane.b32.xlu0 %v1893, 6
        %v2038 = vpop.permute.xlu0 %2037
        %2039 = vrot.lane.b32.xlu0 %v1896, 6
        %v2040 = vpop.permute.xlu0 %2039
        %2041 = vrot.lane.b32.xlu0 %v1898, 6
        %v2042 = vpop.permute.xlu0 %2041
        %2043 = vrot.lane.b32.xlu0 %v1901, 6
        %v2044 = vpop.permute.xlu0 %2043
        %2045 = vrot.lane.b32.xlu0 %v1903, 6
        %v2046 = vpop.permute.xlu0 %2045
        %2047 = vrot.lane.b32.xlu0 %v1906, 6
        %v2048 = vpop.permute.xlu0 %2047
        %2049 = vrot.lane.b32.xlu0 %v1908, 6
        %v2050 = vpop.permute.xlu0 %2049
        %2051 = vrot.lane.b32.xlu0 %v1911, 6
        %v2052 = vpop.permute.xlu0 %2051
        %2053 = vrot.lane.b32.xlu0 %v1913, 6
        %v2054 = vpop.permute.xlu0 %2053
        %2055 = vrot.lane.b32.xlu0 %v1916, 6
        %v2056 = vpop.permute.xlu0 %2055
        %2057 = vrot.lane.b32.xlu0 %v1918, 6
        %v2058 = vpop.permute.xlu0 %2057
        %2059 = vrot.lane.b32.xlu0 %v1921, 6
        %v2060 = vpop.permute.xlu0 %2059
        %2061 = vrot.lane.b32.xlu0 %v1923, 6
        %v2062 = vpop.permute.xlu0 %2061
        %2063 = vrot.lane.b32.xlu0 %v1926, 6
        %v2064 = vpop.permute.xlu0 %2063
        %2065 = vrot.lane.b32.xlu0 %v1928, 6
        %v2066 = vpop.permute.xlu0 %2065
        %2067 = vrot.lane.b32.xlu0 %v1931, 6
        %v2068 = vpop.permute.xlu0 %2067
        %2069 = vrot.lane.b32.xlu0 %v1933, 6
        %v2070 = vpop.permute.xlu0 %2069
        %2071 = vrot.lane.b32.xlu0 %v1936, 6
        %v2072 = vpop.permute.xlu0 %2071
        %2073 = vrot.lane.b32.xlu0 %v1938, 6
        %v2074 = vpop.permute.xlu0 %2073
        %2075 = vrot.lane.b32.xlu0 %v1941, 6
        %v2076 = vpop.permute.xlu0 %2075
        %2077 = vrot.lane.b32.xlu0 %v1943, 6
        %v2078 = vpop.permute.xlu0 %2077
        %2079 = vrot.lane.b32.xlu0 %v1946, 6
        %v2080 = vpop.permute.xlu0 %2079
        %2081 = vrot.lane.b32.xlu0 %v1948, 6
        %v2082 = vpop.permute.xlu0 %2081
        %2083 = vrot.lane.b32.xlu0 %v1951, 6
        %v2084 = vpop.permute.xlu0 %2083
        %2085 = vrot.lane.b32.xlu0 %v1953, 6
        %v2086 = vpop.permute.xlu0 %2085
        %2087 = vrot.lane.b32.xlu0 %v1956, 6
        %v2088 = vpop.permute.xlu0 %2087
        %2089 = vrot.lane.b32.xlu0 %v1958, 6
        %v2090 = vpop.permute.xlu0 %2089
        %2091 = vrot.lane.b32.xlu0 %v1961, 6
        %v2092 = vpop.permute.xlu0 %2091
        %2093 = vrot.lane.b32.xlu0 %v1963, 6
        %v2094 = vpop.permute.xlu0 %2093
        %2095 = vrot.lane.b32.xlu0 %v1966, 6
        %v2096 = vpop.permute.xlu0 %2095
        %2097 = vrot.lane.b32.xlu0 %v1968, 6
        %v2098 = vpop.permute.xlu0 %2097
        %2099 = vrot.lane.b32.xlu0 %v1971, 6
        %v2100 = vpop.permute.xlu0 %2099
        %2101 = vrot.lane.b32.xlu0 %v1973, 6
        %v2102 = vpop.permute.xlu0 %2101
        %2103 = vrot.lane.b32.xlu0 %v1976, 6
        %v2104 = vpop.permute.xlu0 %2103
        %2105 = vrot.lane.b32.xlu0 %v1978, 6
        %v2106 = vpop.permute.xlu0 %2105
        %vm2107 = vcmask 23552
        %v2109 = vsel %vm2107, %v919, %v1627
        %v2111 = vsel %vm2107, %v370, %v1629
        %v2113 = vsel %vm2107, %v920, %v1631
        %v2115 = vsel %vm2107, %v385, %v1633
        %v2117 = vsel %vm2107, %v921, %v1635
        %v2119 = vsel %vm2107, %v400, %v1637
        %v2121 = vsel %vm2107, %v922, %v1639
        %v2123 = vsel %vm2107, %v415, %v1641
        %v2125 = vsel %vm2107, %v923, %v1643
        %v2127 = vsel %vm2107, %v430, %v1645
        %v2129 = vsel %vm2107, %v924, %v1647
        %v2131 = vsel %vm2107, %v445, %v1649
        %v2133 = vsel %vm2107, %v925, %v1651
        %v2135 = vsel %vm2107, %v460, %v1653
        %v2137 = vsel %vm2107, %v926, %v1655
        %v2139 = vsel %vm2107, %v475, %v1657
        %v2141 = vsel %vm2107, %v927, %v1659
        %v2143 = vsel %vm2107, %v490, %v1661
        %v2145 = vsel %vm2107, %v928, %v1663
        %v2147 = vsel %vm2107, %v505, %v1665
        %v2149 = vsel %vm2107, %v929, %v1667
        %v2151 = vsel %vm2107, %v520, %v1669
        %v2153 = vsel %vm2107, %v930, %v1671
        %v2155 = vsel %vm2107, %v535, %v1673
        %v2157 = vsel %vm2107, %v931, %v1675
        %v2159 = vsel %vm2107, %v550, %v1677
        %v2161 = vsel %vm2107, %v932, %v1679
        %v2163 = vsel %vm2107, %v565, %v1681
        %v2165 = vsel %vm2107, %v933, %v1683
        %v2167 = vsel %vm2107, %v580, %v1685
        %v2169 = vsel %vm2107, %v934, %v1687
        %v2171 = vsel %vm2107, %v595, %v1689
        %v2173 = vsel %vm2107, %v935, %v1691
        %v2175 = vsel %vm2107, %v610, %v1693
        %v2177 = vsel %vm2107, %v936, %v1695
        %v2179 = vsel %vm2107, %v625, %v1697
        %v2181 = vsel %vm2107, %v937, %v1699
        %v2183 = vsel %vm2107, %v640, %v1701
        %v2185 = vsel %vm2107, %v938, %v1703
        %v2187 = vsel %vm2107, %v655, %v1705
        %v2189 = vsel %vm2107, %v939, %v1707
        %v2191 = vsel %vm2107, %v670, %v1709
        %v2193 = vsel %vm2107, %v940, %v1711
        %v2195 = vsel %vm2107, %v685, %v1713
        %v2197 = vsel %vm2107, %v941, %v1715
        %v2199 = vsel %vm2107, %v700, %v1717
        %v2201 = vsel %vm2107, %v942, %v1719
        %v2203 = vsel %vm2107, %v715, %v1721
        %v2205 = vsel %vm2107, %v943, %v1723
        %v2207 = vsel %vm2107, %v730, %v1725
        %v2209 = vsel %vm2107, %v944, %v1727
        %v2211 = vsel %vm2107, %v745, %v1729
        %v2213 = vsel %vm2107, %v945, %v1731
        %v2215 = vsel %vm2107, %v760, %v1733
        %v2217 = vsel %vm2107, %v946, %v1735
        %v2219 = vsel %vm2107, %v775, %v1737
        %v2221 = vsel %vm2107, %v947, %v1739
        %v2223 = vsel %vm2107, %v790, %v1741
        %v2225 = vsel %vm2107, %v948, %v1743
        %v2227 = vsel %vm2107, %v805, %v1745
        %v2229 = vsel %vm2107, %v949, %v1747
        %v2231 = vsel %vm2107, %v820, %v1749
        %v2233 = vsel %vm2107, %v950, %v1751
        %v2235 = vsel %vm2107, %v835, %v1753
        %vm2236 = vcmask 48128
        %v2238 = vsel %vm2236, %v2109, %v1980
        %v2240 = vsel %vm2236, %v2111, %v1982
        %v2242 = vsel %vm2236, %v2113, %v1984
        %v2244 = vsel %vm2236, %v2115, %v1986
        %v2246 = vsel %vm2236, %v2117, %v1988
        %v2248 = vsel %vm2236, %v2119, %v1990
        %v2250 = vsel %vm2236, %v2121, %v1992
        %v2252 = vsel %vm2236, %v2123, %v1994
        %v2254 = vsel %vm2236, %v2125, %v1996
        %v2256 = vsel %vm2236, %v2127, %v1998
        %v2258 = vsel %vm2236, %v2129, %v2000
        %v2260 = vsel %vm2236, %v2131, %v2002
        %v2262 = vsel %vm2236, %v2133, %v2004
        %v2264 = vsel %vm2236, %v2135, %v2006
        %v2266 = vsel %vm2236, %v2137, %v2008
        %v2268 = vsel %vm2236, %v2139, %v2010
        %v2270 = vsel %vm2236, %v2141, %v2012
        %v2272 = vsel %vm2236, %v2143, %v2014
        %v2274 = vsel %vm2236, %v2145, %v2016
        %v2276 = vsel %vm2236, %v2147, %v2018
        %v2278 = vsel %vm2236, %v2149, %v2020
        %v2280 = vsel %vm2236, %v2151, %v2022
        %v2282 = vsel %vm2236, %v2153, %v2024
        %v2284 = vsel %vm2236, %v2155, %v2026
        %v2286 = vsel %vm2236, %v2157, %v2028
        %v2288 = vsel %vm2236, %v2159, %v2030
        %v2290 = vsel %vm2236, %v2161, %v2032
        %v2292 = vsel %vm2236, %v2163, %v2034
        %v2294 = vsel %vm2236, %v2165, %v2036
        %v2296 = vsel %vm2236, %v2167, %v2038
        %v2298 = vsel %vm2236, %v2169, %v2040
        %v2300 = vsel %vm2236, %v2171, %v2042
        %v2302 = vsel %vm2236, %v2173, %v2044
        %v2304 = vsel %vm2236, %v2175, %v2046
        %v2306 = vsel %vm2236, %v2177, %v2048
        %v2308 = vsel %vm2236, %v2179, %v2050
        %v2310 = vsel %vm2236, %v2181, %v2052
        %v2312 = vsel %vm2236, %v2183, %v2054
        %v2314 = vsel %vm2236, %v2185, %v2056
        %v2316 = vsel %vm2236, %v2187, %v2058
        %v2318 = vsel %vm2236, %v2189, %v2060
        %v2320 = vsel %vm2236, %v2191, %v2062
        %v2322 = vsel %vm2236, %v2193, %v2064
        %v2324 = vsel %vm2236, %v2195, %v2066
        %v2326 = vsel %vm2236, %v2197, %v2068
        %v2328 = vsel %vm2236, %v2199, %v2070
        %v2330 = vsel %vm2236, %v2201, %v2072
        %v2332 = vsel %vm2236, %v2203, %v2074
        %v2334 = vsel %vm2236, %v2205, %v2076
        %v2336 = vsel %vm2236, %v2207, %v2078
        %v2338 = vsel %vm2236, %v2209, %v2080
        %v2340 = vsel %vm2236, %v2211, %v2082
        %v2342 = vsel %vm2236, %v2213, %v2084
        %v2344 = vsel %vm2236, %v2215, %v2086
        %v2346 = vsel %vm2236, %v2217, %v2088
        %v2348 = vsel %vm2236, %v2219, %v2090
        %v2350 = vsel %vm2236, %v2221, %v2092
        %v2352 = vsel %vm2236, %v2223, %v2094
        %v2354 = vsel %vm2236, %v2225, %v2096
        %v2356 = vsel %vm2236, %v2227, %v2098
        %v2358 = vsel %vm2236, %v2229, %v2100
        %v2360 = vsel %vm2236, %v2231, %v2102
        %v2362 = vsel %vm2236, %v2233, %v2104
        %v2364 = vsel %vm2236, %v2235, %v2106
        %v2365 = vld [vmem:[%s1] sm:$0xf]
        %v2366 = vld [vmem:[%s1 + $0x4] sm:$0x1]
        %v2368 = vshrl.u32 %v951, 16
        %v2370 = vshll.u32 %v951, 16
        %v2372 = vrot.slane %v2370, 1
        %v2373 = vor.u32 %v2368, %v2372
        %v2375 = vshll.u32 %v850, 16
        %v2377 = vrot.slane %v2375, 1
        %v2378 = vsel %vm985, %v2373, %v2377
        %v2379 = vshrl.u32 %v850, 16
        %v2381 = vor.u32 %v2379, %v2377
        %v2383 = vshll.u32 %v984, 16
        %v2385 = vrot.slane %v2383, 1
        %v2386 = vsel %vm985, %v2381, %v2385
        %2387 = vrot.lane.b32.xlu0 %v2378, 3
        %v2388 = vpop.permute.xlu0 %2387
        %2389 = vrot.lane.b32.xlu0 %v2386, 3
        %v2390 = vpop.permute.xlu0 %2389
        %v2393 = vrot.slane %v951, 1
        %v2394 = vrot.slane %v850, 1
        %v2395 = vsel %vm1818, %v2393, %v2394
        %v2396 = vrot.slane %v984, 1
        %v2397 = vsel %vm1818, %v2394, %v2396
        %2398 = vrot.lane.b32.xlu0 %v2395, 6
        %v2399 = vpop.permute.xlu0 %2398
        %2400 = vrot.lane.b32.xlu0 %v2397, 6
        %v2401 = vpop.permute.xlu0 %2400
        %v2403 = vsel %vm2107, %v951, %v2388
        %v2405 = vsel %vm2107, %v850, %v2390
        %v2407 = vsel %vm2236, %v2403, %v2399
        %v2409 = vsel %vm2236, %v2405, %v2401
        %s2410 = scalar_lea.vmem %s1, 8
        %v2411 = vld [vmem:[%s2410] sm:$0xf]
        %v2412 = vld [vmem:[%s2410 + $0x4] sm:$0x1]
        %v2415 = vunpack.c.l.b16 %v2411
        %v2416 = vunpack.c.l.b16 %v2412
        %v2417 = vpack.c.b16 %v2416, %v2415
        %vm2418 = vcmask 72704
        %v2419 = vsel %vm2418, %v2242, 0
        %v2421 = vsel %vm2418, %v2244, 0
        %v2423 = vsel %vm2418, %v2246, 0
        %v2425 = vsel %vm2418, %v2248, 0
        %v2427 = vsel %vm2418, %v2250, 0
        %v2429 = vsel %vm2418, %v2252, 0
        %v2431 = vsel %vm2418, %v2254, 0
        %v2433 = vsel %vm2418, %v2256, 0
        %v2435 = vsel %vm2418, %v2258, 0
        %v2437 = vsel %vm2418, %v2260, 0
        %v2439 = vsel %vm2418, %v2262, 0
        %v2441 = vsel %vm2418, %v2264, 0
        %v2443 = vsel %vm2418, %v2266, 0
        %v2445 = vsel %vm2418, %v2268, 0
        %v2447 = vsel %vm2418, %v2270, 0
        %v2449 = vsel %vm2418, %v2272, 0
        %v2451 = vsel %vm2418, %v2274, 0
        %v2453 = vsel %vm2418, %v2276, 0
        %v2455 = vsel %vm2418, %v2278, 0
        %v2457 = vsel %vm2418, %v2280, 0
        %v2459 = vsel %vm2418, %v2282, 0
        %v2461 = vsel %vm2418, %v2284, 0
        %v2463 = vsel %vm2418, %v2286, 0
        %v2465 = vsel %vm2418, %v2288, 0
        %v2467 = vsel %vm2418, %v2290, 0
        %v2469 = vsel %vm2418, %v2292, 0
        %v2471 = vsel %vm2418, %v2294, 0
        %v2473 = vsel %vm2418, %v2296, 0
        %v2475 = vsel %vm2418, %v2298, 0
        %v2477 = vsel %vm2418, %v2300, 0
        %v2479 = vsel %vm2418, %v2302, 0
        %v2481 = vsel %vm2418, %v2304, 0
        %v2483 = vsel %vm2418, %v2306, 0
        %v2485 = vsel %vm2418, %v2308, 0
        %v2487 = vsel %vm2418, %v2310, 0
        %v2489 = vsel %vm2418, %v2312, 0
        %v2491 = vsel %vm2418, %v2314, 0
        %v2493 = vsel %vm2418, %v2316, 0
        %v2495 = vsel %vm2418, %v2318, 0
        %v2497 = vsel %vm2418, %v2320, 0
        %v2499 = vsel %vm2418, %v2322, 0
        %v2501 = vsel %vm2418, %v2324, 0
        %v2503 = vsel %vm2418, %v2326, 0
        %v2505 = vsel %vm2418, %v2328, 0
        %v2507 = vsel %vm2418, %v2330, 0
        %v2509 = vsel %vm2418, %v2332, 0
        %v2511 = vsel %vm2418, %v2334, 0
        %v2513 = vsel %vm2418, %v2336, 0
        %v2515 = vsel %vm2418, %v2338, 0
        %v2517 = vsel %vm2418, %v2340, 0
        %v2519 = vsel %vm2418, %v2342, 0
        %v2521 = vsel %vm2418, %v2344, 0
        %v2523 = vsel %vm2418, %v2346, 0
        %v2525 = vsel %vm2418, %v2348, 0
        %v2527 = vsel %vm2418, %v2350, 0
        %v2529 = vsel %vm2418, %v2352, 0
        %v2531 = vsel %vm2418, %v2354, 0
        %v2533 = vsel %vm2418, %v2356, 0
        %v2535 = vsel %vm2418, %v2358, 0
        %v2537 = vsel %vm2418, %v2360, 0
        %v2539 = vsel %vm2418, %v2362, 0
        %v2541 = vsel %vm2418, %v2364, 0
        %v2543 = vsel %vm2418, %v2407, 0
        %v2545 = vsel %vm2418, %v2409, 0
        %vm2547 = vcmask 1043456
        %vm2548 = vcmask 1044480
        %v2549 = vsel %vm2547, 4294967295, 65535
        %v2550 = vsel %vm2548, %v2549, 0
        %v2552 = vand.u32 %v2417, %v2550
        %2554 = vmatprep.subr.bf16.mxu0 0
        %2555 = vmatpush1.bf16.msra.mxu0 0
        %2556 = vmatprep.subr.bf16.mxu0 0
        %2557 = vmatpush1.bf16.msra.mxu0 0
        %2558 = vmatprep.subr.bf16.mxu0 0
        %2559 = vmatpush1.bf16.msra.mxu0 0
        %2560 = vmatprep.subr.bf16.mxu0 0
        %2561 = vmatpush1.bf16.msra.mxu0 0
        %2562 = vmatprep.subr.bf16.mxu0 0
        %2563 = vmatpush1.bf16.msra.mxu0 0
        %2564 = vmatprep.subr.bf16.mxu0 0
        %2565 = vmatpush1.bf16.msra.mxu0 0
        %2566 = vmatprep.subr.bf16.mxu0 0
        %2567 = vmatpush1.bf16.msra.mxu0 0
        %2568 = vmatprep.subr.bf16.mxu0 0
        %2569 = vmatpush1.bf16.msra.mxu0 %v2552
        %2570 = vmatprep.subr.bf16.mxu0 0
        %2571 = vmatpush2.bf16.msra.mxu0 0
        %2572 = vmatprep.subr.bf16.mxu0 0
        %2573 = vmatpush2.bf16.msra.mxu0 0
        %2574 = vmatprep.subr.bf16.mxu0 0
        %2575 = vmatpush2.bf16.msra.mxu0 0
        %2576 = vmatprep.subr.bf16.mxu0 0
        %2577 = vmatpush2.bf16.msra.mxu0 0
        %2578 = vmatprep.subr.bf16.mxu0 0
        %2579 = vmatpush2.bf16.msra.mxu0 0
        %2580 = vmatprep.subr.bf16.mxu0 0
        %2581 = vmatpush2.bf16.msra.mxu0 0
        %2582 = vmatprep.subr.bf16.mxu0 0
        %2583 = vmatpush2.bf16.msra.mxu0 0
        %2584 = vmatprep.subr.bf16.mxu0 0
        %2585 = vmatpush2.bf16.msra.mxu0 0
        %2586 = vmatprep.mubr.bf16.mxu0 0
        %2587 = vmatmul.mubr.bf16.gmra.mxu0 %v2419
        %v2588 = vpop.f32.mrf.mxu0
        %v2589 = vadd.f32 0.0, %v2588
        %v2590 = vpop.f32.mrf.mxu0
        %v2591 = vpop.f32.mrf.mxu0
        %v2592 = vadd.f32 0.0, %v2591
        %v2593 = vpop.f32.mrf.mxu0
        %2594 = vmatprep.mubr.bf16.mxu0 0
        %2595 = vmatmul.mubr.bf16.gmra.mxu0 %v2421
        %v2596 = vpop.f32.mrf.mxu0
        %v2597 = vadd.f32 0.0, %v2596
        %v2598 = vpop.f32.mrf.mxu0
        %v2599 = vpop.f32.mrf.mxu0
        %v2600 = vadd.f32 0.0, %v2599
        %v2601 = vpop.f32.mrf.mxu0
        %2602 = vmatprep.mubr.bf16.mxu0 0
        %2603 = vmatmul.mubr.bf16.gmra.mxu0 %v2423
        %v2604 = vpop.f32.mrf.mxu0
        %v2605 = vadd.f32 0.0, %v2604
        %v2606 = vpop.f32.mrf.mxu0
        %v2607 = vpop.f32.mrf.mxu0
        %v2608 = vadd.f32 0.0, %v2607
        %v2609 = vpop.f32.mrf.mxu0
        %2610 = vmatprep.mubr.bf16.mxu0 0
        %2611 = vmatmul.mubr.bf16.gmra.mxu0 %v2425
        %v2612 = vpop.f32.mrf.mxu0
        %v2613 = vadd.f32 0.0, %v2612
        %v2614 = vpop.f32.mrf.mxu0
        %v2615 = vpop.f32.mrf.mxu0
        %v2616 = vadd.f32 0.0, %v2615
        %v2617 = vpop.f32.mrf.mxu0
        %2618 = vmatprep.mubr.bf16.mxu0 0
        %2619 = vmatmul.mubr.bf16.gmra.mxu0 %v2427
        %v2620 = vpop.f32.mrf.mxu0
        %v2621 = vadd.f32 0.0, %v2620
        %v2622 = vpop.f32.mrf.mxu0
        %v2623 = vpop.f32.mrf.mxu0
        %v2624 = vadd.f32 0.0, %v2623
        %v2625 = vpop.f32.mrf.mxu0
        %2626 = vmatprep.mubr.bf16.mxu0 0
        %2627 = vmatmul.mubr.bf16.gmra.mxu0 %v2429
        %v2628 = vpop.f32.mrf.mxu0
        %v2629 = vadd.f32 0.0, %v2628
        %v2630 = vpop.f32.mrf.mxu0
        %v2631 = vpop.f32.mrf.mxu0
        %v2632 = vadd.f32 0.0, %v2631
        %v2633 = vpop.f32.mrf.mxu0
        %2634 = vmatprep.mubr.bf16.mxu0 0
        %2635 = vmatmul.mubr.bf16.gmra.mxu0 %v2431
        %v2636 = vpop.f32.mrf.mxu0
        %v2637 = vadd.f32 0.0, %v2636
        %v2638 = vpop.f32.mrf.mxu0
        %v2639 = vpop.f32.mrf.mxu0
        %v2640 = vadd.f32 0.0, %v2639
        %v2641 = vpop.f32.mrf.mxu0
        %2642 = vmatprep.mubr.bf16.mxu0 0
        %2643 = vmatmul.mubr.bf16.gmra.mxu0 %v2433
        %v2644 = vpop.f32.mrf.mxu0
        %v2645 = vadd.f32 0.0, %v2644
        %v2646 = vpop.f32.mrf.mxu0
        %v2647 = vpop.f32.mrf.mxu0
        %v2648 = vadd.f32 0.0, %v2647
        %v2649 = vpop.f32.mrf.mxu0
        %2650 = vmatprep.mubr.bf16.mxu0 0
        %2651 = vmatmul.mubr.bf16.gmra.mxu0 %v2435
        %v2652 = vpop.f32.mrf.mxu0
        %v2653 = vadd.f32 0.0, %v2652
        %v2654 = vpop.f32.mrf.mxu0
        %v2655 = vpop.f32.mrf.mxu0
        %v2656 = vadd.f32 0.0, %v2655
        %v2657 = vpop.f32.mrf.mxu0
        %2658 = vmatprep.mubr.bf16.mxu0 0
        %2659 = vmatmul.mubr.bf16.gmra.mxu0 %v2437
        %v2660 = vpop.f32.mrf.mxu0
        %v2661 = vadd.f32 0.0, %v2660
        %v2662 = vpop.f32.mrf.mxu0
        %v2663 = vpop.f32.mrf.mxu0
        %v2664 = vadd.f32 0.0, %v2663
        %v2665 = vpop.f32.mrf.mxu0
        %2666 = vmatprep.mubr.bf16.mxu0 0
        %2667 = vmatmul.mubr.bf16.gmra.mxu0 %v2439
        %v2668 = vpop.f32.mrf.mxu0
        %v2669 = vadd.f32 0.0, %v2668
        %v2670 = vpop.f32.mrf.mxu0
        %v2671 = vpop.f32.mrf.mxu0
        %v2672 = vadd.f32 0.0, %v2671
        %v2673 = vpop.f32.mrf.mxu0
        %2674 = vmatprep.mubr.bf16.mxu0 0
        %2675 = vmatmul.mubr.bf16.gmra.mxu0 %v2441
        %v2676 = vpop.f32.mrf.mxu0
        %v2677 = vadd.f32 0.0, %v2676
        %v2678 = vpop.f32.mrf.mxu0
        %v2679 = vpop.f32.mrf.mxu0
        %v2680 = vadd.f32 0.0, %v2679
        %v2681 = vpop.f32.mrf.mxu0
        %2682 = vmatprep.mubr.bf16.mxu0 0
        %2683 = vmatmul.mubr.bf16.gmra.mxu0 %v2443
        %v2684 = vpop.f32.mrf.mxu0
        %v2685 = vadd.f32 0.0, %v2684
        %v2686 = vpop.f32.mrf.mxu0
        %v2687 = vpop.f32.mrf.mxu0
        %v2688 = vadd.f32 0.0, %v2687
        %v2689 = vpop.f32.mrf.mxu0
        %2690 = vmatprep.mubr.bf16.mxu0 0
        %2691 = vmatmul.mubr.bf16.gmra.mxu0 %v2445
        %v2692 = vpop.f32.mrf.mxu0
        %v2693 = vadd.f32 0.0, %v2692
        %v2694 = vpop.f32.mrf.mxu0
        %v2695 = vpop.f32.mrf.mxu0
        %v2696 = vadd.f32 0.0, %v2695
        %v2697 = vpop.f32.mrf.mxu0
        %2698 = vmatprep.mubr.bf16.mxu0 0
        %2699 = vmatmul.mubr.bf16.gmra.mxu0 %v2447
        %v2700 = vpop.f32.mrf.mxu0
        %v2701 = vadd.f32 0.0, %v2700
        %v2702 = vpop.f32.mrf.mxu0
        %v2703 = vpop.f32.mrf.mxu0
        %v2704 = vadd.f32 0.0, %v2703
        %v2705 = vpop.f32.mrf.mxu0
        %2706 = vmatprep.mubr.bf16.mxu0 0
        %2707 = vmatmul.mubr.bf16.gmra.mxu0 %v2449
        %v2708 = vpop.f32.mrf.mxu0
        %v2709 = vadd.f32 0.0, %v2708
        %v2710 = vpop.f32.mrf.mxu0
        %v2711 = vpop.f32.mrf.mxu0
        %v2712 = vadd.f32 0.0, %v2711
        %v2713 = vpop.f32.mrf.mxu0
        %2714 = vmatprep.mubr.bf16.mxu0 0
        %2715 = vmatmul.mubr.bf16.gmra.mxu0 %v2451
        %v2716 = vpop.f32.mrf.mxu0
        %v2717 = vadd.f32 0.0, %v2716
        %v2718 = vpop.f32.mrf.mxu0
        %v2719 = vpop.f32.mrf.mxu0
        %v2720 = vadd.f32 0.0, %v2719
        %v2721 = vpop.f32.mrf.mxu0
        %2722 = vmatprep.mubr.bf16.mxu0 0
        %2723 = vmatmul.mubr.bf16.gmra.mxu0 %v2453
        %v2724 = vpop.f32.mrf.mxu0
        %v2725 = vadd.f32 0.0, %v2724
        %v2726 = vpop.f32.mrf.mxu0
        %v2727 = vpop.f32.mrf.mxu0
        %v2728 = vadd.f32 0.0, %v2727
        %v2729 = vpop.f32.mrf.mxu0
        %2730 = vmatprep.mubr.bf16.mxu0 0
        %2731 = vmatmul.mubr.bf16.gmra.mxu0 %v2455
        %v2732 = vpop.f32.mrf.mxu0
        %v2733 = vadd.f32 0.0, %v2732
        %v2734 = vpop.f32.mrf.mxu0
        %v2735 = vpop.f32.mrf.mxu0
        %v2736 = vadd.f32 0.0, %v2735
        %v2737 = vpop.f32.mrf.mxu0
        %2738 = vmatprep.mubr.bf16.mxu0 0
        %2739 = vmatmul.mubr.bf16.gmra.mxu0 %v2457
        %v2740 = vpop.f32.mrf.mxu0
        %v2741 = vadd.f32 0.0, %v2740
        %v2742 = vpop.f32.mrf.mxu0
        %v2743 = vpop.f32.mrf.mxu0
        %v2744 = vadd.f32 0.0, %v2743
        %v2745 = vpop.f32.mrf.mxu0
        %2746 = vmatprep.mubr.bf16.mxu0 0
        %2747 = vmatmul.mubr.bf16.gmra.mxu0 %v2459
        %v2748 = vpop.f32.mrf.mxu0
        %v2749 = vadd.f32 0.0, %v2748
        %v2750 = vpop.f32.mrf.mxu0
        %v2751 = vpop.f32.mrf.mxu0
        %v2752 = vadd.f32 0.0, %v2751
        %v2753 = vpop.f32.mrf.mxu0
        %2754 = vmatprep.mubr.bf16.mxu0 0
        %2755 = vmatmul.mubr.bf16.gmra.mxu0 %v2461
        %v2756 = vpop.f32.mrf.mxu0
        %v2757 = vadd.f32 0.0, %v2756
        %v2758 = vpop.f32.mrf.mxu0
        %v2759 = vpop.f32.mrf.mxu0
        %v2760 = vadd.f32 0.0, %v2759
        %v2761 = vpop.f32.mrf.mxu0
        %2762 = vmatprep.mubr.bf16.mxu0 0
        %2763 = vmatmul.mubr.bf16.gmra.mxu0 %v2463
        %v2764 = vpop.f32.mrf.mxu0
        %v2765 = vadd.f32 0.0, %v2764
        %v2766 = vpop.f32.mrf.mxu0
        %v2767 = vpop.f32.mrf.mxu0
        %v2768 = vadd.f32 0.0, %v2767
        %v2769 = vpop.f32.mrf.mxu0
        %2770 = vmatprep.mubr.bf16.mxu0 0
        %2771 = vmatmul.mubr.bf16.gmra.mxu0 %v2465
        %v2772 = vpop.f32.mrf.mxu0
        %v2773 = vadd.f32 0.0, %v2772
        %v2774 = vpop.f32.mrf.mxu0
        %v2775 = vpop.f32.mrf.mxu0
        %v2776 = vadd.f32 0.0, %v2775
        %v2777 = vpop.f32.mrf.mxu0
        %2778 = vmatprep.mubr.bf16.mxu0 0
        %2779 = vmatmul.mubr.bf16.gmra.mxu0 %v2467
        %v2780 = vpop.f32.mrf.mxu0
        %v2781 = vadd.f32 0.0, %v2780
        %v2782 = vpop.f32.mrf.mxu0
        %v2783 = vpop.f32.mrf.mxu0
        %v2784 = vadd.f32 0.0, %v2783
        %v2785 = vpop.f32.mrf.mxu0
        %2786 = vmatprep.mubr.bf16.mxu0 0
        %2787 = vmatmul.mubr.bf16.gmra.mxu0 %v2469
        %v2788 = vpop.f32.mrf.mxu0
        %v2789 = vadd.f32 0.0, %v2788
        %v2790 = vpop.f32.mrf.mxu0
        %v2791 = vpop.f32.mrf.mxu0
        %v2792 = vadd.f32 0.0, %v2791
        %v2793 = vpop.f32.mrf.mxu0
        %2794 = vmatprep.mubr.bf16.mxu0 0
        %2795 = vmatmul.mubr.bf16.gmra.mxu0 %v2471
        %v2796 = vpop.f32.mrf.mxu0
        %v2797 = vadd.f32 0.0, %v2796
        %v2798 = vpop.f32.mrf.mxu0
        %v2799 = vpop.f32.mrf.mxu0
        %v2800 = vadd.f32 0.0, %v2799
        %v2801 = vpop.f32.mrf.mxu0
        %2802 = vmatprep.mubr.bf16.mxu0 0
        %2803 = vmatmul.mubr.bf16.gmra.mxu0 %v2473
        %v2804 = vpop.f32.mrf.mxu0
        %v2805 = vadd.f32 0.0, %v2804
        %v2806 = vpop.f32.mrf.mxu0
        %v2807 = vpop.f32.mrf.mxu0
        %v2808 = vadd.f32 0.0, %v2807
        %v2809 = vpop.f32.mrf.mxu0
        %2810 = vmatprep.mubr.bf16.mxu0 0
        %2811 = vmatmul.mubr.bf16.gmra.mxu0 %v2475
        %v2812 = vpop.f32.mrf.mxu0
        %v2813 = vadd.f32 0.0, %v2812
        %v2814 = vpop.f32.mrf.mxu0
        %v2815 = vpop.f32.mrf.mxu0
        %v2816 = vadd.f32 0.0, %v2815
        %v2817 = vpop.f32.mrf.mxu0
        %2818 = vmatprep.mubr.bf16.mxu0 0
        %2819 = vmatmul.mubr.bf16.gmra.mxu0 %v2477
        %v2820 = vpop.f32.mrf.mxu0
        %v2821 = vadd.f32 0.0, %v2820
        %v2822 = vpop.f32.mrf.mxu0
        %v2823 = vpop.f32.mrf.mxu0
        %v2824 = vadd.f32 0.0, %v2823
        %v2825 = vpop.f32.mrf.mxu0
        %2826 = vmatprep.mubr.bf16.mxu0 0
        %2827 = vmatmul.mubr.bf16.gmra.mxu0 %v2479
        %v2828 = vpop.f32.mrf.mxu0
        %v2829 = vadd.f32 0.0, %v2828
        %v2830 = vpop.f32.mrf.mxu0
        %v2831 = vpop.f32.mrf.mxu0
        %v2832 = vadd.f32 0.0, %v2831
        %v2833 = vpop.f32.mrf.mxu0
        %2834 = vmatprep.mubr.bf16.mxu0 0
        %2835 = vmatmul.mubr.bf16.gmra.mxu0 %v2481
        %v2836 = vpop.f32.mrf.mxu0
        %v2837 = vadd.f32 0.0, %v2836
        %v2838 = vpop.f32.mrf.mxu0
        %v2839 = vpop.f32.mrf.mxu0
        %v2840 = vadd.f32 0.0, %v2839
        %v2841 = vpop.f32.mrf.mxu0
        %2842 = vmatprep.mubr.bf16.mxu0 0
        %2843 = vmatmul.mubr.bf16.gmra.mxu0 %v2483
        %v2844 = vpop.f32.mrf.mxu0
        %v2845 = vadd.f32 0.0, %v2844
        %v2846 = vpop.f32.mrf.mxu0
        %v2847 = vpop.f32.mrf.mxu0
        %v2848 = vadd.f32 0.0, %v2847
        %v2849 = vpop.f32.mrf.mxu0
        %2850 = vmatprep.mubr.bf16.mxu0 0
        %2851 = vmatmul.mubr.bf16.gmra.mxu0 %v2485
        %v2852 = vpop.f32.mrf.mxu0
        %v2853 = vadd.f32 0.0, %v2852
        %v2854 = vpop.f32.mrf.mxu0
        %v2855 = vpop.f32.mrf.mxu0
        %v2856 = vadd.f32 0.0, %v2855
        %v2857 = vpop.f32.mrf.mxu0
        %2858 = vmatprep.mubr.bf16.mxu0 0
        %2859 = vmatmul.mubr.bf16.gmra.mxu0 %v2487
        %v2860 = vpop.f32.mrf.mxu0
        %v2861 = vadd.f32 0.0, %v2860
        %v2862 = vpop.f32.mrf.mxu0
        %v2863 = vpop.f32.mrf.mxu0
        %v2864 = vadd.f32 0.0, %v2863
        %v2865 = vpop.f32.mrf.mxu0
        %2866 = vmatprep.mubr.bf16.mxu0 0
        %2867 = vmatmul.mubr.bf16.gmra.mxu0 %v2489
        %v2868 = vpop.f32.mrf.mxu0
        %v2869 = vadd.f32 0.0, %v2868
        %v2870 = vpop.f32.mrf.mxu0
        %v2871 = vpop.f32.mrf.mxu0
        %v2872 = vadd.f32 0.0, %v2871
        %v2873 = vpop.f32.mrf.mxu0
        %2874 = vmatprep.mubr.bf16.mxu0 0
        %2875 = vmatmul.mubr.bf16.gmra.mxu0 %v2491
        %v2876 = vpop.f32.mrf.mxu0
        %v2877 = vadd.f32 0.0, %v2876
        %v2878 = vpop.f32.mrf.mxu0
        %v2879 = vpop.f32.mrf.mxu0
        %v2880 = vadd.f32 0.0, %v2879
        %v2881 = vpop.f32.mrf.mxu0
        %2882 = vmatprep.mubr.bf16.mxu0 0
        %2883 = vmatmul.mubr.bf16.gmra.mxu0 %v2493
        %v2884 = vpop.f32.mrf.mxu0
        %v2885 = vadd.f32 0.0, %v2884
        %v2886 = vpop.f32.mrf.mxu0
        %v2887 = vpop.f32.mrf.mxu0
        %v2888 = vadd.f32 0.0, %v2887
        %v2889 = vpop.f32.mrf.mxu0
        %2890 = vmatprep.mubr.bf16.mxu0 0
        %2891 = vmatmul.mubr.bf16.gmra.mxu0 %v2495
        %v2892 = vpop.f32.mrf.mxu0
        %v2893 = vadd.f32 0.0, %v2892
        %v2894 = vpop.f32.mrf.mxu0
        %v2895 = vpop.f32.mrf.mxu0
        %v2896 = vadd.f32 0.0, %v2895
        %v2897 = vpop.f32.mrf.mxu0
        %2898 = vmatprep.mubr.bf16.mxu0 0
        %2899 = vmatmul.mubr.bf16.gmra.mxu0 %v2497
        %v2900 = vpop.f32.mrf.mxu0
        %v2901 = vadd.f32 0.0, %v2900
        %v2902 = vpop.f32.mrf.mxu0
        %v2903 = vpop.f32.mrf.mxu0
        %v2904 = vadd.f32 0.0, %v2903
        %v2905 = vpop.f32.mrf.mxu0
        %2906 = vmatprep.mubr.bf16.mxu0 0
        %2907 = vmatmul.mubr.bf16.gmra.mxu0 %v2499
        %v2908 = vpop.f32.mrf.mxu0
        %v2909 = vadd.f32 0.0, %v2908
        %v2910 = vpop.f32.mrf.mxu0
        %v2911 = vpop.f32.mrf.mxu0
        %v2912 = vadd.f32 0.0, %v2911
        %v2913 = vpop.f32.mrf.mxu0
        %2914 = vmatprep.mubr.bf16.mxu0 0
        %2915 = vmatmul.mubr.bf16.gmra.mxu0 %v2501
        %v2916 = vpop.f32.mrf.mxu0
        %v2917 = vadd.f32 0.0, %v2916
        %v2918 = vpop.f32.mrf.mxu0
        %v2919 = vpop.f32.mrf.mxu0
        %v2920 = vadd.f32 0.0, %v2919
        %v2921 = vpop.f32.mrf.mxu0
        %2922 = vmatprep.mubr.bf16.mxu0 0
        %2923 = vmatmul.mubr.bf16.gmra.mxu0 %v2503
        %v2924 = vpop.f32.mrf.mxu0
        %v2925 = vadd.f32 0.0, %v2924
        %v2926 = vpop.f32.mrf.mxu0
        %v2927 = vpop.f32.mrf.mxu0
        %v2928 = vadd.f32 0.0, %v2927
        %v2929 = vpop.f32.mrf.mxu0
        %2930 = vmatprep.mubr.bf16.mxu0 0
        %2931 = vmatmul.mubr.bf16.gmra.mxu0 %v2505
        %v2932 = vpop.f32.mrf.mxu0
        %v2933 = vadd.f32 0.0, %v2932
        %v2934 = vpop.f32.mrf.mxu0
        %v2935 = vpop.f32.mrf.mxu0
        %v2936 = vadd.f32 0.0, %v2935
        %v2937 = vpop.f32.mrf.mxu0
        %2938 = vmatprep.mubr.bf16.mxu0 0
        %2939 = vmatmul.mubr.bf16.gmra.mxu0 %v2507
        %v2940 = vpop.f32.mrf.mxu0
        %v2941 = vadd.f32 0.0, %v2940
        %v2942 = vpop.f32.mrf.mxu0
        %v2943 = vpop.f32.mrf.mxu0
        %v2944 = vadd.f32 0.0, %v2943
        %v2945 = vpop.f32.mrf.mxu0
        %2946 = vmatprep.mubr.bf16.mxu0 0
        %2947 = vmatmul.mubr.bf16.gmra.mxu0 %v2509
        %v2948 = vpop.f32.mrf.mxu0
        %v2949 = vadd.f32 0.0, %v2948
        %v2950 = vpop.f32.mrf.mxu0
        %v2951 = vpop.f32.mrf.mxu0
        %v2952 = vadd.f32 0.0, %v2951
        %v2953 = vpop.f32.mrf.mxu0
        %2954 = vmatprep.mubr.bf16.mxu0 0
        %2955 = vmatmul.mubr.bf16.gmra.mxu0 %v2511
        %v2956 = vpop.f32.mrf.mxu0
        %v2957 = vadd.f32 0.0, %v2956
        %v2958 = vpop.f32.mrf.mxu0
        %v2959 = vpop.f32.mrf.mxu0
        %v2960 = vadd.f32 0.0, %v2959
        %v2961 = vpop.f32.mrf.mxu0
        %2962 = vmatprep.mubr.bf16.mxu0 0
        %2963 = vmatmul.mubr.bf16.gmra.mxu0 %v2513
        %v2964 = vpop.f32.mrf.mxu0
        %v2965 = vadd.f32 0.0, %v2964
        %v2966 = vpop.f32.mrf.mxu0
        %v2967 = vpop.f32.mrf.mxu0
        %v2968 = vadd.f32 0.0, %v2967
        %v2969 = vpop.f32.mrf.mxu0
        %2970 = vmatprep.mubr.bf16.mxu0 0
        %2971 = vmatmul.mubr.bf16.gmra.mxu0 %v2515
        %v2972 = vpop.f32.mrf.mxu0
        %v2973 = vadd.f32 0.0, %v2972
        %v2974 = vpop.f32.mrf.mxu0
        %v2975 = vpop.f32.mrf.mxu0
        %v2976 = vadd.f32 0.0, %v2975
        %v2977 = vpop.f32.mrf.mxu0
        %2978 = vmatprep.mubr.bf16.mxu0 0
        %2979 = vmatmul.mubr.bf16.gmra.mxu0 %v2517
        %v2980 = vpop.f32.mrf.mxu0
        %v2981 = vadd.f32 0.0, %v2980
        %v2982 = vpop.f32.mrf.mxu0
        %v2983 = vpop.f32.mrf.mxu0
        %v2984 = vadd.f32 0.0, %v2983
        %v2985 = vpop.f32.mrf.mxu0
        %2986 = vmatprep.mubr.bf16.mxu0 0
        %2987 = vmatmul.mubr.bf16.gmra.mxu0 %v2519
        %v2988 = vpop.f32.mrf.mxu0
        %v2989 = vadd.f32 0.0, %v2988
        %v2990 = vpop.f32.mrf.mxu0
        %v2991 = vpop.f32.mrf.mxu0
        %v2992 = vadd.f32 0.0, %v2991
        %v2993 = vpop.f32.mrf.mxu0
        %2994 = vmatprep.mubr.bf16.mxu0 0
        %2995 = vmatmul.mubr.bf16.gmra.mxu0 %v2521
        %v2996 = vpop.f32.mrf.mxu0
        %v2997 = vadd.f32 0.0, %v2996
        %v2998 = vpop.f32.mrf.mxu0
        %v2999 = vpop.f32.mrf.mxu0
        %v3000 = vadd.f32 0.0, %v2999
        %v3001 = vpop.f32.mrf.mxu0
        %3002 = vmatprep.mubr.bf16.mxu0 0
        %3003 = vmatmul.mubr.bf16.gmra.mxu0 %v2523
        %v3004 = vpop.f32.mrf.mxu0
        %v3005 = vadd.f32 0.0, %v3004
        %v3006 = vpop.f32.mrf.mxu0
        %v3007 = vpop.f32.mrf.mxu0
        %v3008 = vadd.f32 0.0, %v3007
        %v3009 = vpop.f32.mrf.mxu0
        %3010 = vmatprep.mubr.bf16.mxu0 0
        %3011 = vmatmul.mubr.bf16.gmra.mxu0 %v2525
        %v3012 = vpop.f32.mrf.mxu0
        %v3013 = vadd.f32 0.0, %v3012
        %v3014 = vpop.f32.mrf.mxu0
        %v3015 = vpop.f32.mrf.mxu0
        %v3016 = vadd.f32 0.0, %v3015
        %v3017 = vpop.f32.mrf.mxu0
        %3018 = vmatprep.mubr.bf16.mxu0 0
        %3019 = vmatmul.mubr.bf16.gmra.mxu0 %v2527
        %v3020 = vpop.f32.mrf.mxu0
        %v3021 = vadd.f32 0.0, %v3020
        %v3022 = vpop.f32.mrf.mxu0
        %v3023 = vpop.f32.mrf.mxu0
        %v3024 = vadd.f32 0.0, %v3023
        %v3025 = vpop.f32.mrf.mxu0
        %3026 = vmatprep.mubr.bf16.mxu0 0
        %3027 = vmatmul.mubr.bf16.gmra.mxu0 %v2529
        %v3028 = vpop.f32.mrf.mxu0
        %v3029 = vadd.f32 0.0, %v3028
        %v3030 = vpop.f32.mrf.mxu0
        %v3031 = vpop.f32.mrf.mxu0
        %v3032 = vadd.f32 0.0, %v3031
        %v3033 = vpop.f32.mrf.mxu0
        %3034 = vmatprep.mubr.bf16.mxu0 0
        %3035 = vmatmul.mubr.bf16.gmra.mxu0 %v2531
        %v3036 = vpop.f32.mrf.mxu0
        %v3037 = vadd.f32 0.0, %v3036
        %v3038 = vpop.f32.mrf.mxu0
        %v3039 = vpop.f32.mrf.mxu0
        %v3040 = vadd.f32 0.0, %v3039
        %v3041 = vpop.f32.mrf.mxu0
        %3042 = vmatprep.mubr.bf16.mxu0 0
        %3043 = vmatmul.mubr.bf16.gmra.mxu0 %v2533
        %v3044 = vpop.f32.mrf.mxu0
        %v3045 = vadd.f32 0.0, %v3044
        %v3046 = vpop.f32.mrf.mxu0
        %v3047 = vpop.f32.mrf.mxu0
        %v3048 = vadd.f32 0.0, %v3047
        %v3049 = vpop.f32.mrf.mxu0
        %3050 = vmatprep.mubr.bf16.mxu0 0
        %3051 = vmatmul.mubr.bf16.gmra.mxu0 %v2535
        %v3052 = vpop.f32.mrf.mxu0
        %v3053 = vadd.f32 0.0, %v3052
        %v3054 = vpop.f32.mrf.mxu0
        %v3055 = vpop.f32.mrf.mxu0
        %v3056 = vadd.f32 0.0, %v3055
        %v3057 = vpop.f32.mrf.mxu0
        %3058 = vmatprep.mubr.bf16.mxu0 0
        %3059 = vmatmul.mubr.bf16.gmra.mxu0 %v2537
        %v3060 = vpop.f32.mrf.mxu0
        %v3061 = vadd.f32 0.0, %v3060
        %v3062 = vpop.f32.mrf.mxu0
        %v3063 = vpop.f32.mrf.mxu0
        %v3064 = vadd.f32 0.0, %v3063
        %v3065 = vpop.f32.mrf.mxu0
        %3066 = vmatprep.mubr.bf16.mxu0 0
        %3067 = vmatmul.mubr.bf16.gmra.mxu0 %v2539
        %v3068 = vpop.f32.mrf.mxu0
        %v3069 = vadd.f32 0.0, %v3068
        %v3070 = vpop.f32.mrf.mxu0
        %v3071 = vpop.f32.mrf.mxu0
        %v3072 = vadd.f32 0.0, %v3071
        %v3073 = vpop.f32.mrf.mxu0
        %3074 = vmatprep.mubr.bf16.mxu0 0
        %3075 = vmatmul.mubr.bf16.gmra.mxu0 %v2541
        %v3076 = vpop.f32.mrf.mxu0
        %v3077 = vadd.f32 0.0, %v3076
        %v3078 = vpop.f32.mrf.mxu0
        %v3079 = vpop.f32.mrf.mxu0
        %v3080 = vadd.f32 0.0, %v3079
        %v3081 = vpop.f32.mrf.mxu0
        %3082 = vmatprep.mubr.bf16.mxu0 0
        %3083 = vmatmul.mubr.bf16.gmra.mxu0 %v2543
        %v3084 = vpop.f32.mrf.mxu0
        %v3085 = vadd.f32 0.0, %v3084
        %v3086 = vpop.f32.mrf.mxu0
        %v3087 = vpop.f32.mrf.mxu0
        %v3088 = vadd.f32 0.0, %v3087
        %v3089 = vpop.f32.mrf.mxu0
        %3090 = vmatprep.mubr.bf16.mxu0 0
        %3091 = vmatmul.mubr.bf16.gmra.mxu0 %v2545
        %v3092 = vpop.f32.mrf.mxu0
        %v3093 = vadd.f32 0.0, %v3092
        %v3094 = vpop.f32.mrf.mxu0
        %v3095 = vpop.f32.mrf.mxu0
        %v3096 = vadd.f32 0.0, %v3095
        %v3097 = vpop.f32.mrf.mxu0
        %3098 = vdwg.mxu0
        %v3101 = vunpack.c.l.b16 %v2365
        %v3102 = vunpack.c.l.b16 %v2366
        %v3103 = vpack.c.b16 %v3102, %v3101
        %v3104 = vsel %vm2418, %v2238, 0
        %v3106 = vsel %vm2418, %v2240, 0
        %v3109 = vand.u32 %v3103, %v2550
        %3111 = vmatprep.subr.bf16.mxu0 0
        %3112 = vmatpush1.bf16.msra.mxu0 0
        %3113 = vmatprep.subr.bf16.mxu0 0
        %3114 = vmatpush1.bf16.msra.mxu0 0
        %3115 = vmatprep.subr.bf16.mxu0 0
        %3116 = vmatpush1.bf16.msra.mxu0 0
        %3117 = vmatprep.subr.bf16.mxu0 0
        %3118 = vmatpush1.bf16.msra.mxu0 0
        %3119 = vmatprep.subr.bf16.mxu0 0
        %3120 = vmatpush1.bf16.msra.mxu0 0
        %3121 = vmatprep.subr.bf16.mxu0 0
        %3122 = vmatpush1.bf16.msra.mxu0 0
        %3123 = vmatprep.subr.bf16.mxu0 0
        %3124 = vmatpush1.bf16.msra.mxu0 0
        %3125 = vmatprep.subr.bf16.mxu0 0
        %3126 = vmatpush1.bf16.msra.mxu0 %v3109
        %3127 = vmatprep.subr.bf16.mxu0 0
        %3128 = vmatpush2.bf16.msra.mxu0 0
        %3129 = vmatprep.subr.bf16.mxu0 0
        %3130 = vmatpush2.bf16.msra.mxu0 0
        %3131 = vmatprep.subr.bf16.mxu0 0
        %3132 = vmatpush2.bf16.msra.mxu0 0
        %3133 = vmatprep.subr.bf16.mxu0 0
        %3134 = vmatpush2.bf16.msra.mxu0 0
        %3135 = vmatprep.subr.bf16.mxu0 0
        %3136 = vmatpush2.bf16.msra.mxu0 0
        %3137 = vmatprep.subr.bf16.mxu0 0
        %3138 = vmatpush2.bf16.msra.mxu0 0
        %3139 = vmatprep.subr.bf16.mxu0 0
        %3140 = vmatpush2.bf16.msra.mxu0 0
        %3141 = vmatprep.subr.bf16.mxu0 0
        %3142 = vmatpush2.bf16.msra.mxu0 0
        %3143 = vmatprep.mubr.bf16.mxu0 0
        %3144 = vmatmul.mubr.bf16.gmra.mxu0 %v3104
        %v3145 = vpop.f32.mrf.mxu0
        %v3146 = vadd.f32 %v2589, %v3145
        %v3147 = vpop.f32.mrf.mxu0
        %v3148 = vpop.f32.mrf.mxu0
        %v3149 = vadd.f32 %v2592, %v3148
        %v3150 = vpop.f32.mrf.mxu0
        %3151 = vmatprep.mubr.bf16.mxu0 0
        %3152 = vmatmul.mubr.bf16.gmra.mxu0 %v3106
        %v3153 = vpop.f32.mrf.mxu0
        %v3154 = vadd.f32 %v2597, %v3153
        %v3155 = vpop.f32.mrf.mxu0
        %v3156 = vpop.f32.mrf.mxu0
        %v3157 = vadd.f32 %v2600, %v3156
        %v3158 = vpop.f32.mrf.mxu0
        %3159 = vmatprep.mubr.bf16.mxu0 0
        %3160 = vmatmul.mubr.bf16.gmra.mxu0 %v2419
        %v3161 = vpop.f32.mrf.mxu0
        %v3162 = vadd.f32 %v2605, %v3161
        %v3163 = vpop.f32.mrf.mxu0
        %v3164 = vpop.f32.mrf.mxu0
        %v3165 = vadd.f32 %v2608, %v3164
        %v3166 = vpop.f32.mrf.mxu0
        %3167 = vmatprep.mubr.bf16.mxu0 0
        %3168 = vmatmul.mubr.bf16.gmra.mxu0 %v2421
        %v3169 = vpop.f32.mrf.mxu0
        %v3170 = vadd.f32 %v2613, %v3169
        %v3171 = vpop.f32.mrf.mxu0
        %v3172 = vpop.f32.mrf.mxu0
        %v3173 = vadd.f32 %v2616, %v3172
        %v3174 = vpop.f32.mrf.mxu0
        %3175 = vmatprep.mubr.bf16.mxu0 0
        %3176 = vmatmul.mubr.bf16.gmra.mxu0 %v2423
        %v3177 = vpop.f32.mrf.mxu0
        %v3178 = vadd.f32 %v2621, %v3177
        %v3179 = vpop.f32.mrf.mxu0
        %v3180 = vpop.f32.mrf.mxu0
        %v3181 = vadd.f32 %v2624, %v3180
        %v3182 = vpop.f32.mrf.mxu0
        %3183 = vmatprep.mubr.bf16.mxu0 0
        %3184 = vmatmul.mubr.bf16.gmra.mxu0 %v2425
        %v3185 = vpop.f32.mrf.mxu0
        %v3186 = vadd.f32 %v2629, %v3185
        %v3187 = vpop.f32.mrf.mxu0
        %v3188 = vpop.f32.mrf.mxu0
        %v3189 = vadd.f32 %v2632, %v3188
        %v3190 = vpop.f32.mrf.mxu0
        %3191 = vmatprep.mubr.bf16.mxu0 0
        %3192 = vmatmul.mubr.bf16.gmra.mxu0 %v2427
        %v3193 = vpop.f32.mrf.mxu0
        %v3194 = vadd.f32 %v2637, %v3193
        %v3195 = vpop.f32.mrf.mxu0
        %v3196 = vpop.f32.mrf.mxu0
        %v3197 = vadd.f32 %v2640, %v3196
        %v3198 = vpop.f32.mrf.mxu0
        %3199 = vmatprep.mubr.bf16.mxu0 0
        %3200 = vmatmul.mubr.bf16.gmra.mxu0 %v2429
        %v3201 = vpop.f32.mrf.mxu0
        %v3202 = vadd.f32 %v2645, %v3201
        %v3203 = vpop.f32.mrf.mxu0
        %v3204 = vpop.f32.mrf.mxu0
        %v3205 = vadd.f32 %v2648, %v3204
        %v3206 = vpop.f32.mrf.mxu0
        %3207 = vmatprep.mubr.bf16.mxu0 0
        %3208 = vmatmul.mubr.bf16.gmra.mxu0 %v2431
        %v3209 = vpop.f32.mrf.mxu0
        %v3210 = vadd.f32 %v2653, %v3209
        %v3211 = vpop.f32.mrf.mxu0
        %v3212 = vpop.f32.mrf.mxu0
        %v3213 = vadd.f32 %v2656, %v3212
        %v3214 = vpop.f32.mrf.mxu0
        %3215 = vmatprep.mubr.bf16.mxu0 0
        %3216 = vmatmul.mubr.bf16.gmra.mxu0 %v2433
        %v3217 = vpop.f32.mrf.mxu0
        %v3218 = vadd.f32 %v2661, %v3217
        %v3219 = vpop.f32.mrf.mxu0
        %v3220 = vpop.f32.mrf.mxu0
        %v3221 = vadd.f32 %v2664, %v3220
        %v3222 = vpop.f32.mrf.mxu0
        %3223 = vmatprep.mubr.bf16.mxu0 0
        %3224 = vmatmul.mubr.bf16.gmra.mxu0 %v2435
        %v3225 = vpop.f32.mrf.mxu0
        %v3226 = vadd.f32 %v2669, %v3225
        %v3227 = vpop.f32.mrf.mxu0
        %v3228 = vpop.f32.mrf.mxu0
        %v3229 = vadd.f32 %v2672, %v3228
        %v3230 = vpop.f32.mrf.mxu0
        %3231 = vmatprep.mubr.bf16.mxu0 0
        %3232 = vmatmul.mubr.bf16.gmra.mxu0 %v2437
        %v3233 = vpop.f32.mrf.mxu0
        %v3234 = vadd.f32 %v2677, %v3233
        %v3235 = vpop.f32.mrf.mxu0
        %v3236 = vpop.f32.mrf.mxu0
        %v3237 = vadd.f32 %v2680, %v3236
        %v3238 = vpop.f32.mrf.mxu0
        %3239 = vmatprep.mubr.bf16.mxu0 0
        %3240 = vmatmul.mubr.bf16.gmra.mxu0 %v2439
        %v3241 = vpop.f32.mrf.mxu0
        %v3242 = vadd.f32 %v2685, %v3241
        %v3243 = vpop.f32.mrf.mxu0
        %v3244 = vpop.f32.mrf.mxu0
        %v3245 = vadd.f32 %v2688, %v3244
        %v3246 = vpop.f32.mrf.mxu0
        %3247 = vmatprep.mubr.bf16.mxu0 0
        %3248 = vmatmul.mubr.bf16.gmra.mxu0 %v2441
        %v3249 = vpop.f32.mrf.mxu0
        %v3250 = vadd.f32 %v2693, %v3249
        %v3251 = vpop.f32.mrf.mxu0
        %v3252 = vpop.f32.mrf.mxu0
        %v3253 = vadd.f32 %v2696, %v3252
        %v3254 = vpop.f32.mrf.mxu0
        %3255 = vmatprep.mubr.bf16.mxu0 0
        %3256 = vmatmul.mubr.bf16.gmra.mxu0 %v2443
        %v3257 = vpop.f32.mrf.mxu0
        %v3258 = vadd.f32 %v2701, %v3257
        %v3259 = vpop.f32.mrf.mxu0
        %v3260 = vpop.f32.mrf.mxu0
        %v3261 = vadd.f32 %v2704, %v3260
        %v3262 = vpop.f32.mrf.mxu0
        %3263 = vmatprep.mubr.bf16.mxu0 0
        %3264 = vmatmul.mubr.bf16.gmra.mxu0 %v2445
        %v3265 = vpop.f32.mrf.mxu0
        %v3266 = vadd.f32 %v2709, %v3265
        %v3267 = vpop.f32.mrf.mxu0
        %v3268 = vpop.f32.mrf.mxu0
        %v3269 = vadd.f32 %v2712, %v3268
        %v3270 = vpop.f32.mrf.mxu0
        %3271 = vmatprep.mubr.bf16.mxu0 0
        %3272 = vmatmul.mubr.bf16.gmra.mxu0 %v2447
        %v3273 = vpop.f32.mrf.mxu0
        %v3274 = vadd.f32 %v2717, %v3273
        %v3275 = vpop.f32.mrf.mxu0
        %v3276 = vpop.f32.mrf.mxu0
        %v3277 = vadd.f32 %v2720, %v3276
        %v3278 = vpop.f32.mrf.mxu0
        %3279 = vmatprep.mubr.bf16.mxu0 0
        %3280 = vmatmul.mubr.bf16.gmra.mxu0 %v2449
        %v3281 = vpop.f32.mrf.mxu0
        %v3282 = vadd.f32 %v2725, %v3281
        %v3283 = vpop.f32.mrf.mxu0
        %v3284 = vpop.f32.mrf.mxu0
        %v3285 = vadd.f32 %v2728, %v3284
        %v3286 = vpop.f32.mrf.mxu0
        %3287 = vmatprep.mubr.bf16.mxu0 0
        %3288 = vmatmul.mubr.bf16.gmra.mxu0 %v2451
        %v3289 = vpop.f32.mrf.mxu0
        %v3290 = vadd.f32 %v2733, %v3289
        %v3291 = vpop.f32.mrf.mxu0
        %v3292 = vpop.f32.mrf.mxu0
        %v3293 = vadd.f32 %v2736, %v3292
        %v3294 = vpop.f32.mrf.mxu0
        %3295 = vmatprep.mubr.bf16.mxu0 0
        %3296 = vmatmul.mubr.bf16.gmra.mxu0 %v2453
        %v3297 = vpop.f32.mrf.mxu0
        %v3298 = vadd.f32 %v2741, %v3297
        %v3299 = vpop.f32.mrf.mxu0
        %v3300 = vpop.f32.mrf.mxu0
        %v3301 = vadd.f32 %v2744, %v3300
        %v3302 = vpop.f32.mrf.mxu0
        %3303 = vmatprep.mubr.bf16.mxu0 0
        %3304 = vmatmul.mubr.bf16.gmra.mxu0 %v2455
        %v3305 = vpop.f32.mrf.mxu0
        %v3306 = vadd.f32 %v2749, %v3305
        %v3307 = vpop.f32.mrf.mxu0
        %v3308 = vpop.f32.mrf.mxu0
        %v3309 = vadd.f32 %v2752, %v3308
        %v3310 = vpop.f32.mrf.mxu0
        %3311 = vmatprep.mubr.bf16.mxu0 0
        %3312 = vmatmul.mubr.bf16.gmra.mxu0 %v2457
        %v3313 = vpop.f32.mrf.mxu0
        %v3314 = vadd.f32 %v2757, %v3313
        %v3315 = vpop.f32.mrf.mxu0
        %v3316 = vpop.f32.mrf.mxu0
        %v3317 = vadd.f32 %v2760, %v3316
        %v3318 = vpop.f32.mrf.mxu0
        %3319 = vmatprep.mubr.bf16.mxu0 0
        %3320 = vmatmul.mubr.bf16.gmra.mxu0 %v2459
        %v3321 = vpop.f32.mrf.mxu0
        %v3322 = vadd.f32 %v2765, %v3321
        %v3323 = vpop.f32.mrf.mxu0
        %v3324 = vpop.f32.mrf.mxu0
        %v3325 = vadd.f32 %v2768, %v3324
        %v3326 = vpop.f32.mrf.mxu0
        %3327 = vmatprep.mubr.bf16.mxu0 0
        %3328 = vmatmul.mubr.bf16.gmra.mxu0 %v2461
        %v3329 = vpop.f32.mrf.mxu0
        %v3330 = vadd.f32 %v2773, %v3329
        %v3331 = vpop.f32.mrf.mxu0
        %v3332 = vpop.f32.mrf.mxu0
        %v3333 = vadd.f32 %v2776, %v3332
        %v3334 = vpop.f32.mrf.mxu0
        %3335 = vmatprep.mubr.bf16.mxu0 0
        %3336 = vmatmul.mubr.bf16.gmra.mxu0 %v2463
        %v3337 = vpop.f32.mrf.mxu0
        %v3338 = vadd.f32 %v2781, %v3337
        %v3339 = vpop.f32.mrf.mxu0
        %v3340 = vpop.f32.mrf.mxu0
        %v3341 = vadd.f32 %v2784, %v3340
        %v3342 = vpop.f32.mrf.mxu0
        %3343 = vmatprep.mubr.bf16.mxu0 0
        %3344 = vmatmul.mubr.bf16.gmra.mxu0 %v2465
        %v3345 = vpop.f32.mrf.mxu0
        %v3346 = vadd.f32 %v2789, %v3345
        %v3347 = vpop.f32.mrf.mxu0
        %v3348 = vpop.f32.mrf.mxu0
        %v3349 = vadd.f32 %v2792, %v3348
        %v3350 = vpop.f32.mrf.mxu0
        %3351 = vmatprep.mubr.bf16.mxu0 0
        %3352 = vmatmul.mubr.bf16.gmra.mxu0 %v2467
        %v3353 = vpop.f32.mrf.mxu0
        %v3354 = vadd.f32 %v2797, %v3353
        %v3355 = vpop.f32.mrf.mxu0
        %v3356 = vpop.f32.mrf.mxu0
        %v3357 = vadd.f32 %v2800, %v3356
        %v3358 = vpop.f32.mrf.mxu0
        %3359 = vmatprep.mubr.bf16.mxu0 0
        %3360 = vmatmul.mubr.bf16.gmra.mxu0 %v2469
        %v3361 = vpop.f32.mrf.mxu0
        %v3362 = vadd.f32 %v2805, %v3361
        %v3363 = vpop.f32.mrf.mxu0
        %v3364 = vpop.f32.mrf.mxu0
        %v3365 = vadd.f32 %v2808, %v3364
        %v3366 = vpop.f32.mrf.mxu0
        %3367 = vmatprep.mubr.bf16.mxu0 0
        %3368 = vmatmul.mubr.bf16.gmra.mxu0 %v2471
        %v3369 = vpop.f32.mrf.mxu0
        %v3370 = vadd.f32 %v2813, %v3369
        %v3371 = vpop.f32.mrf.mxu0
        %v3372 = vpop.f32.mrf.mxu0
        %v3373 = vadd.f32 %v2816, %v3372
        %v3374 = vpop.f32.mrf.mxu0
        %3375 = vmatprep.mubr.bf16.mxu0 0
        %3376 = vmatmul.mubr.bf16.gmra.mxu0 %v2473
        %v3377 = vpop.f32.mrf.mxu0
        %v3378 = vadd.f32 %v2821, %v3377
        %v3379 = vpop.f32.mrf.mxu0
        %v3380 = vpop.f32.mrf.mxu0
        %v3381 = vadd.f32 %v2824, %v3380
        %v3382 = vpop.f32.mrf.mxu0
        %3383 = vmatprep.mubr.bf16.mxu0 0
        %3384 = vmatmul.mubr.bf16.gmra.mxu0 %v2475
        %v3385 = vpop.f32.mrf.mxu0
        %v3386 = vadd.f32 %v2829, %v3385
        %v3387 = vpop.f32.mrf.mxu0
        %v3388 = vpop.f32.mrf.mxu0
        %v3389 = vadd.f32 %v2832, %v3388
        %v3390 = vpop.f32.mrf.mxu0
        %3391 = vmatprep.mubr.bf16.mxu0 0
        %3392 = vmatmul.mubr.bf16.gmra.mxu0 %v2477
        %v3393 = vpop.f32.mrf.mxu0
        %v3394 = vadd.f32 %v2837, %v3393
        %v3395 = vpop.f32.mrf.mxu0
        %v3396 = vpop.f32.mrf.mxu0
        %v3397 = vadd.f32 %v2840, %v3396
        %v3398 = vpop.f32.mrf.mxu0
        %3399 = vmatprep.mubr.bf16.mxu0 0
        %3400 = vmatmul.mubr.bf16.gmra.mxu0 %v2479
        %v3401 = vpop.f32.mrf.mxu0
        %v3402 = vadd.f32 %v2845, %v3401
        %v3403 = vpop.f32.mrf.mxu0
        %v3404 = vpop.f32.mrf.mxu0
        %v3405 = vadd.f32 %v2848, %v3404
        %v3406 = vpop.f32.mrf.mxu0
        %3407 = vmatprep.mubr.bf16.mxu0 0
        %3408 = vmatmul.mubr.bf16.gmra.mxu0 %v2481
        %v3409 = vpop.f32.mrf.mxu0
        %v3410 = vadd.f32 %v2853, %v3409
        %v3411 = vpop.f32.mrf.mxu0
        %v3412 = vpop.f32.mrf.mxu0
        %v3413 = vadd.f32 %v2856, %v3412
        %v3414 = vpop.f32.mrf.mxu0
        %3415 = vmatprep.mubr.bf16.mxu0 0
        %3416 = vmatmul.mubr.bf16.gmra.mxu0 %v2483
        %v3417 = vpop.f32.mrf.mxu0
        %v3418 = vadd.f32 %v2861, %v3417
        %v3419 = vpop.f32.mrf.mxu0
        %v3420 = vpop.f32.mrf.mxu0
        %v3421 = vadd.f32 %v2864, %v3420
        %v3422 = vpop.f32.mrf.mxu0
        %3423 = vmatprep.mubr.bf16.mxu0 0
        %3424 = vmatmul.mubr.bf16.gmra.mxu0 %v2485
        %v3425 = vpop.f32.mrf.mxu0
        %v3426 = vadd.f32 %v2869, %v3425
        %v3427 = vpop.f32.mrf.mxu0
        %v3428 = vpop.f32.mrf.mxu0
        %v3429 = vadd.f32 %v2872, %v3428
        %v3430 = vpop.f32.mrf.mxu0
        %3431 = vmatprep.mubr.bf16.mxu0 0
        %3432 = vmatmul.mubr.bf16.gmra.mxu0 %v2487
        %v3433 = vpop.f32.mrf.mxu0
        %v3434 = vadd.f32 %v2877, %v3433
        %v3435 = vpop.f32.mrf.mxu0
        %v3436 = vpop.f32.mrf.mxu0
        %v3437 = vadd.f32 %v2880, %v3436
        %v3438 = vpop.f32.mrf.mxu0
        %3439 = vmatprep.mubr.bf16.mxu0 0
        %3440 = vmatmul.mubr.bf16.gmra.mxu0 %v2489
        %v3441 = vpop.f32.mrf.mxu0
        %v3442 = vadd.f32 %v2885, %v3441
        %v3443 = vpop.f32.mrf.mxu0
        %v3444 = vpop.f32.mrf.mxu0
        %v3445 = vadd.f32 %v2888, %v3444
        %v3446 = vpop.f32.mrf.mxu0
        %3447 = vmatprep.mubr.bf16.mxu0 0
        %3448 = vmatmul.mubr.bf16.gmra.mxu0 %v2491
        %v3449 = vpop.f32.mrf.mxu0
        %v3450 = vadd.f32 %v2893, %v3449
        %v3451 = vpop.f32.mrf.mxu0
        %v3452 = vpop.f32.mrf.mxu0
        %v3453 = vadd.f32 %v2896, %v3452
        %v3454 = vpop.f32.mrf.mxu0
        %3455 = vmatprep.mubr.bf16.mxu0 0
        %3456 = vmatmul.mubr.bf16.gmra.mxu0 %v2493
        %v3457 = vpop.f32.mrf.mxu0
        %v3458 = vadd.f32 %v2901, %v3457
        %v3459 = vpop.f32.mrf.mxu0
        %v3460 = vpop.f32.mrf.mxu0
        %v3461 = vadd.f32 %v2904, %v3460
        %v3462 = vpop.f32.mrf.mxu0
        %3463 = vmatprep.mubr.bf16.mxu0 0
        %3464 = vmatmul.mubr.bf16.gmra.mxu0 %v2495
        %v3465 = vpop.f32.mrf.mxu0
        %v3466 = vadd.f32 %v2909, %v3465
        %v3467 = vpop.f32.mrf.mxu0
        %v3468 = vpop.f32.mrf.mxu0
        %v3469 = vadd.f32 %v2912, %v3468
        %v3470 = vpop.f32.mrf.mxu0
        %3471 = vmatprep.mubr.bf16.mxu0 0
        %3472 = vmatmul.mubr.bf16.gmra.mxu0 %v2497
        %v3473 = vpop.f32.mrf.mxu0
        %v3474 = vadd.f32 %v2917, %v3473
        %v3475 = vpop.f32.mrf.mxu0
        %v3476 = vpop.f32.mrf.mxu0
        %v3477 = vadd.f32 %v2920, %v3476
        %v3478 = vpop.f32.mrf.mxu0
        %3479 = vmatprep.mubr.bf16.mxu0 0
        %3480 = vmatmul.mubr.bf16.gmra.mxu0 %v2499
        %v3481 = vpop.f32.mrf.mxu0
        %v3482 = vadd.f32 %v2925, %v3481
        %v3483 = vpop.f32.mrf.mxu0
        %v3484 = vpop.f32.mrf.mxu0
        %v3485 = vadd.f32 %v2928, %v3484
        %v3486 = vpop.f32.mrf.mxu0
        %3487 = vmatprep.mubr.bf16.mxu0 0
        %3488 = vmatmul.mubr.bf16.gmra.mxu0 %v2501
        %v3489 = vpop.f32.mrf.mxu0
        %v3490 = vadd.f32 %v2933, %v3489
        %v3491 = vpop.f32.mrf.mxu0
        %v3492 = vpop.f32.mrf.mxu0
        %v3493 = vadd.f32 %v2936, %v3492
        %v3494 = vpop.f32.mrf.mxu0
        %3495 = vmatprep.mubr.bf16.mxu0 0
        %3496 = vmatmul.mubr.bf16.gmra.mxu0 %v2503
        %v3497 = vpop.f32.mrf.mxu0
        %v3498 = vadd.f32 %v2941, %v3497
        %v3499 = vpop.f32.mrf.mxu0
        %v3500 = vpop.f32.mrf.mxu0
        %v3501 = vadd.f32 %v2944, %v3500
        %v3502 = vpop.f32.mrf.mxu0
        %3503 = vmatprep.mubr.bf16.mxu0 0
        %3504 = vmatmul.mubr.bf16.gmra.mxu0 %v2505
        %v3505 = vpop.f32.mrf.mxu0
        %v3506 = vadd.f32 %v2949, %v3505
        %v3507 = vpop.f32.mrf.mxu0
        %v3508 = vpop.f32.mrf.mxu0
        %v3509 = vadd.f32 %v2952, %v3508
        %v3510 = vpop.f32.mrf.mxu0
        %3511 = vmatprep.mubr.bf16.mxu0 0
        %3512 = vmatmul.mubr.bf16.gmra.mxu0 %v2507
        %v3513 = vpop.f32.mrf.mxu0
        %v3514 = vadd.f32 %v2957, %v3513
        %v3515 = vpop.f32.mrf.mxu0
        %v3516 = vpop.f32.mrf.mxu0
        %v3517 = vadd.f32 %v2960, %v3516
        %v3518 = vpop.f32.mrf.mxu0
        %3519 = vmatprep.mubr.bf16.mxu0 0
        %3520 = vmatmul.mubr.bf16.gmra.mxu0 %v2509
        %v3521 = vpop.f32.mrf.mxu0
        %v3522 = vadd.f32 %v2965, %v3521
        %v3523 = vpop.f32.mrf.mxu0
        %v3524 = vpop.f32.mrf.mxu0
        %v3525 = vadd.f32 %v2968, %v3524
        %v3526 = vpop.f32.mrf.mxu0
        %3527 = vmatprep.mubr.bf16.mxu0 0
        %3528 = vmatmul.mubr.bf16.gmra.mxu0 %v2511
        %v3529 = vpop.f32.mrf.mxu0
        %v3530 = vadd.f32 %v2973, %v3529
        %v3531 = vpop.f32.mrf.mxu0
        %v3532 = vpop.f32.mrf.mxu0
        %v3533 = vadd.f32 %v2976, %v3532
        %v3534 = vpop.f32.mrf.mxu0
        %3535 = vmatprep.mubr.bf16.mxu0 0
        %3536 = vmatmul.mubr.bf16.gmra.mxu0 %v2513
        %v3537 = vpop.f32.mrf.mxu0
        %v3538 = vadd.f32 %v2981, %v3537
        %v3539 = vpop.f32.mrf.mxu0
        %v3540 = vpop.f32.mrf.mxu0
        %v3541 = vadd.f32 %v2984, %v3540
        %v3542 = vpop.f32.mrf.mxu0
        %3543 = vmatprep.mubr.bf16.mxu0 0
        %3544 = vmatmul.mubr.bf16.gmra.mxu0 %v2515
        %v3545 = vpop.f32.mrf.mxu0
        %v3546 = vadd.f32 %v2989, %v3545
        %v3547 = vpop.f32.mrf.mxu0
        %v3548 = vpop.f32.mrf.mxu0
        %v3549 = vadd.f32 %v2992, %v3548
        %v3550 = vpop.f32.mrf.mxu0
        %3551 = vmatprep.mubr.bf16.mxu0 0
        %3552 = vmatmul.mubr.bf16.gmra.mxu0 %v2517
        %v3553 = vpop.f32.mrf.mxu0
        %v3554 = vadd.f32 %v2997, %v3553
        %v3555 = vpop.f32.mrf.mxu0
        %v3556 = vpop.f32.mrf.mxu0
        %v3557 = vadd.f32 %v3000, %v3556
        %v3558 = vpop.f32.mrf.mxu0
        %3559 = vmatprep.mubr.bf16.mxu0 0
        %3560 = vmatmul.mubr.bf16.gmra.mxu0 %v2519
        %v3561 = vpop.f32.mrf.mxu0
        %v3562 = vadd.f32 %v3005, %v3561
        %v3563 = vpop.f32.mrf.mxu0
        %v3564 = vpop.f32.mrf.mxu0
        %v3565 = vadd.f32 %v3008, %v3564
        %v3566 = vpop.f32.mrf.mxu0
        %3567 = vmatprep.mubr.bf16.mxu0 0
        %3568 = vmatmul.mubr.bf16.gmra.mxu0 %v2521
        %v3569 = vpop.f32.mrf.mxu0
        %v3570 = vadd.f32 %v3013, %v3569
        %v3571 = vpop.f32.mrf.mxu0
        %v3572 = vpop.f32.mrf.mxu0
        %v3573 = vadd.f32 %v3016, %v3572
        %v3574 = vpop.f32.mrf.mxu0
        %3575 = vmatprep.mubr.bf16.mxu0 0
        %3576 = vmatmul.mubr.bf16.gmra.mxu0 %v2523
        %v3577 = vpop.f32.mrf.mxu0
        %v3578 = vadd.f32 %v3021, %v3577
        %v3579 = vpop.f32.mrf.mxu0
        %v3580 = vpop.f32.mrf.mxu0
        %v3581 = vadd.f32 %v3024, %v3580
        %v3582 = vpop.f32.mrf.mxu0
        %3583 = vmatprep.mubr.bf16.mxu0 0
        %3584 = vmatmul.mubr.bf16.gmra.mxu0 %v2525
        %v3585 = vpop.f32.mrf.mxu0
        %v3586 = vadd.f32 %v3029, %v3585
        %v3587 = vpop.f32.mrf.mxu0
        %v3588 = vpop.f32.mrf.mxu0
        %v3589 = vadd.f32 %v3032, %v3588
        %v3590 = vpop.f32.mrf.mxu0
        %3591 = vmatprep.mubr.bf16.mxu0 0
        %3592 = vmatmul.mubr.bf16.gmra.mxu0 %v2527
        %v3593 = vpop.f32.mrf.mxu0
        %v3594 = vadd.f32 %v3037, %v3593
        %v3595 = vpop.f32.mrf.mxu0
        %v3596 = vpop.f32.mrf.mxu0
        %v3597 = vadd.f32 %v3040, %v3596
        %v3598 = vpop.f32.mrf.mxu0
        %3599 = vmatprep.mubr.bf16.mxu0 0
        %3600 = vmatmul.mubr.bf16.gmra.mxu0 %v2529
        %v3601 = vpop.f32.mrf.mxu0
        %v3602 = vadd.f32 %v3045, %v3601
        %v3603 = vpop.f32.mrf.mxu0
        %v3604 = vpop.f32.mrf.mxu0
        %v3605 = vadd.f32 %v3048, %v3604
        %v3606 = vpop.f32.mrf.mxu0
        %3607 = vmatprep.mubr.bf16.mxu0 0
        %3608 = vmatmul.mubr.bf16.gmra.mxu0 %v2531
        %v3609 = vpop.f32.mrf.mxu0
        %v3610 = vadd.f32 %v3053, %v3609
        %v3611 = vpop.f32.mrf.mxu0
        %v3612 = vpop.f32.mrf.mxu0
        %v3613 = vadd.f32 %v3056, %v3612
        %v3614 = vpop.f32.mrf.mxu0
        %3615 = vmatprep.mubr.bf16.mxu0 0
        %3616 = vmatmul.mubr.bf16.gmra.mxu0 %v2533
        %v3617 = vpop.f32.mrf.mxu0
        %v3618 = vadd.f32 %v3061, %v3617
        %v3619 = vpop.f32.mrf.mxu0
        %v3620 = vpop.f32.mrf.mxu0
        %v3621 = vadd.f32 %v3064, %v3620
        %v3622 = vpop.f32.mrf.mxu0
        %3623 = vmatprep.mubr.bf16.mxu0 0
        %3624 = vmatmul.mubr.bf16.gmra.mxu0 %v2535
        %v3625 = vpop.f32.mrf.mxu0
        %v3626 = vadd.f32 %v3069, %v3625
        %v3627 = vpop.f32.mrf.mxu0
        %v3628 = vpop.f32.mrf.mxu0
        %v3629 = vadd.f32 %v3072, %v3628
        %v3630 = vpop.f32.mrf.mxu0
        %3631 = vmatprep.mubr.bf16.mxu0 0
        %3632 = vmatmul.mubr.bf16.gmra.mxu0 %v2537
        %v3633 = vpop.f32.mrf.mxu0
        %v3634 = vadd.f32 %v3077, %v3633
        %v3635 = vpop.f32.mrf.mxu0
        %v3636 = vpop.f32.mrf.mxu0
        %v3637 = vadd.f32 %v3080, %v3636
        %v3638 = vpop.f32.mrf.mxu0
        %3639 = vmatprep.mubr.bf16.mxu0 0
        %3640 = vmatmul.mubr.bf16.gmra.mxu0 %v2539
        %v3641 = vpop.f32.mrf.mxu0
        %v3642 = vadd.f32 %v3085, %v3641
        %v3643 = vpop.f32.mrf.mxu0
        %v3644 = vpop.f32.mrf.mxu0
        %v3645 = vadd.f32 %v3088, %v3644
        %v3646 = vpop.f32.mrf.mxu0
        %3647 = vmatprep.mubr.bf16.mxu0 0
        %3648 = vmatmul.mubr.bf16.gmra.mxu0 %v2541
        %v3649 = vpop.f32.mrf.mxu0
        %v3650 = vadd.f32 %v3093, %v3649
        %v3651 = vpop.f32.mrf.mxu0
        %v3652 = vpop.f32.mrf.mxu0
        %v3653 = vadd.f32 %v3096, %v3652
        %v3654 = vpop.f32.mrf.mxu0
        %3655 = vdwg.mxu0
        %s3656 = scalar_lea.vmem %s1, 16
        %v3657 = vld [vmem:[%s3656] sm:$0xf]
        %v3658 = vld [vmem:[%s3656 + $0x4] sm:$0x1]
        %v3661 = vunpack.c.l.b16 %v3657
        %v3662 = vunpack.c.l.b16 %v3658
        %v3663 = vpack.c.b16 %v3662, %v3661
        %v3665 = vand.u32 %v3663, %v2550
        %3667 = vmatprep.subr.bf16.mxu0 0
        %3668 = vmatpush1.bf16.msra.mxu0 0
        %3669 = vmatprep.subr.bf16.mxu0 0
        %3670 = vmatpush1.bf16.msra.mxu0 0
        %3671 = vmatprep.subr.bf16.mxu0 0
        %3672 = vmatpush1.bf16.msra.mxu0 0
        %3673 = vmatprep.subr.bf16.mxu0 0
        %3674 = vmatpush1.bf16.msra.mxu0 0
        %3675 = vmatprep.subr.bf16.mxu0 0
        %3676 = vmatpush1.bf16.msra.mxu0 0
        %3677 = vmatprep.subr.bf16.mxu0 0
        %3678 = vmatpush1.bf16.msra.mxu0 0
        %3679 = vmatprep.subr.bf16.mxu0 0
        %3680 = vmatpush1.bf16.msra.mxu0 0
        %3681 = vmatprep.subr.bf16.mxu0 0
        %3682 = vmatpush1.bf16.msra.mxu0 %v3665
        %3683 = vmatprep.subr.bf16.mxu0 0
        %3684 = vmatpush2.bf16.msra.mxu0 0
        %3685 = vmatprep.subr.bf16.mxu0 0
        %3686 = vmatpush2.bf16.msra.mxu0 0
        %3687 = vmatprep.subr.bf16.mxu0 0
        %3688 = vmatpush2.bf16.msra.mxu0 0
        %3689 = vmatprep.subr.bf16.mxu0 0
        %3690 = vmatpush2.bf16.msra.mxu0 0
        %3691 = vmatprep.subr.bf16.mxu0 0
        %3692 = vmatpush2.bf16.msra.mxu0 0
        %3693 = vmatprep.subr.bf16.mxu0 0
        %3694 = vmatpush2.bf16.msra.mxu0 0
        %3695 = vmatprep.subr.bf16.mxu0 0
        %3696 = vmatpush2.bf16.msra.mxu0 0
        %3697 = vmatprep.subr.bf16.mxu0 0
        %3698 = vmatpush2.bf16.msra.mxu0 0
        %3699 = vmatprep.mubr.bf16.mxu0 0
        %3700 = vmatmul.mubr.bf16.gmra.mxu0 %v2423
        %v3701 = vpop.f32.mrf.mxu0
        %v3702 = vadd.f32 0.0, %v3701
        %v3703 = vpop.f32.mrf.mxu0
        %v3704 = vpop.f32.mrf.mxu0
        %v3705 = vadd.f32 0.0, %v3704
        %v3706 = vpop.f32.mrf.mxu0
        %3707 = vmatprep.mubr.bf16.mxu0 0
        %3708 = vmatmul.mubr.bf16.gmra.mxu0 %v2425
        %v3709 = vpop.f32.mrf.mxu0
        %v3710 = vadd.f32 0.0, %v3709
        %v3711 = vpop.f32.mrf.mxu0
        %v3712 = vpop.f32.mrf.mxu0
        %v3713 = vadd.f32 0.0, %v3712
        %v3714 = vpop.f32.mrf.mxu0
        %3715 = vmatprep.mubr.bf16.mxu0 0
        %3716 = vmatmul.mubr.bf16.gmra.mxu0 %v2427
        %v3717 = vpop.f32.mrf.mxu0
        %v3718 = vadd.f32 0.0, %v3717
        %v3719 = vpop.f32.mrf.mxu0
        %v3720 = vpop.f32.mrf.mxu0
        %v3721 = vadd.f32 0.0, %v3720
        %v3722 = vpop.f32.mrf.mxu0
        %3723 = vmatprep.mubr.bf16.mxu0 0
        %3724 = vmatmul.mubr.bf16.gmra.mxu0 %v2429
        %v3725 = vpop.f32.mrf.mxu0
        %v3726 = vadd.f32 0.0, %v3725
        %v3727 = vpop.f32.mrf.mxu0
        %v3728 = vpop.f32.mrf.mxu0
        %v3729 = vadd.f32 0.0, %v3728
        %v3730 = vpop.f32.mrf.mxu0
        %3731 = vmatprep.mubr.bf16.mxu0 0
        %3732 = vmatmul.mubr.bf16.gmra.mxu0 %v2431
        %v3733 = vpop.f32.mrf.mxu0
        %v3734 = vadd.f32 0.0, %v3733
        %v3735 = vpop.f32.mrf.mxu0
        %v3736 = vpop.f32.mrf.mxu0
        %v3737 = vadd.f32 0.0, %v3736
        %v3738 = vpop.f32.mrf.mxu0
        %3739 = vmatprep.mubr.bf16.mxu0 0
        %3740 = vmatmul.mubr.bf16.gmra.mxu0 %v2433
        %v3741 = vpop.f32.mrf.mxu0
        %v3742 = vadd.f32 0.0, %v3741
        %v3743 = vpop.f32.mrf.mxu0
        %v3744 = vpop.f32.mrf.mxu0
        %v3745 = vadd.f32 0.0, %v3744
        %v3746 = vpop.f32.mrf.mxu0
        %3747 = vmatprep.mubr.bf16.mxu0 0
        %3748 = vmatmul.mubr.bf16.gmra.mxu0 %v2435
        %v3749 = vpop.f32.mrf.mxu0
        %v3750 = vadd.f32 0.0, %v3749
        %v3751 = vpop.f32.mrf.mxu0
        %v3752 = vpop.f32.mrf.mxu0
        %v3753 = vadd.f32 0.0, %v3752
        %v3754 = vpop.f32.mrf.mxu0
        %3755 = vmatprep.mubr.bf16.mxu0 0
        %3756 = vmatmul.mubr.bf16.gmra.mxu0 %v2437
        %v3757 = vpop.f32.mrf.mxu0
        %v3758 = vadd.f32 0.0, %v3757
        %v3759 = vpop.f32.mrf.mxu0
        %v3760 = vpop.f32.mrf.mxu0
        %v3761 = vadd.f32 0.0, %v3760
        %v3762 = vpop.f32.mrf.mxu0
        %3763 = vmatprep.mubr.bf16.mxu0 0
        %3764 = vmatmul.mubr.bf16.gmra.mxu0 %v2439
        %v3765 = vpop.f32.mrf.mxu0
        %v3766 = vadd.f32 0.0, %v3765
        %v3767 = vpop.f32.mrf.mxu0
        %v3768 = vpop.f32.mrf.mxu0
        %v3769 = vadd.f32 0.0, %v3768
        %v3770 = vpop.f32.mrf.mxu0
        %3771 = vmatprep.mubr.bf16.mxu0 0
        %3772 = vmatmul.mubr.bf16.gmra.mxu0 %v2441
        %v3773 = vpop.f32.mrf.mxu0
        %v3774 = vadd.f32 0.0, %v3773
        %v3775 = vpop.f32.mrf.mxu0
        %v3776 = vpop.f32.mrf.mxu0
        %v3777 = vadd.f32 0.0, %v3776
        %v3778 = vpop.f32.mrf.mxu0
        %3779 = vmatprep.mubr.bf16.mxu0 0
        %3780 = vmatmul.mubr.bf16.gmra.mxu0 %v2443
        %v3781 = vpop.f32.mrf.mxu0
        %v3782 = vadd.f32 0.0, %v3781
        %v3783 = vpop.f32.mrf.mxu0
        %v3784 = vpop.f32.mrf.mxu0
        %v3785 = vadd.f32 0.0, %v3784
        %v3786 = vpop.f32.mrf.mxu0
        %3787 = vmatprep.mubr.bf16.mxu0 0
        %3788 = vmatmul.mubr.bf16.gmra.mxu0 %v2445
        %v3789 = vpop.f32.mrf.mxu0
        %v3790 = vadd.f32 0.0, %v3789
        %v3791 = vpop.f32.mrf.mxu0
        %v3792 = vpop.f32.mrf.mxu0
        %v3793 = vadd.f32 0.0, %v3792
        %v3794 = vpop.f32.mrf.mxu0
        %3795 = vmatprep.mubr.bf16.mxu0 0
        %3796 = vmatmul.mubr.bf16.gmra.mxu0 %v2447
        %v3797 = vpop.f32.mrf.mxu0
        %v3798 = vadd.f32 0.0, %v3797
        %v3799 = vpop.f32.mrf.mxu0
        %v3800 = vpop.f32.mrf.mxu0
        %v3801 = vadd.f32 0.0, %v3800
        %v3802 = vpop.f32.mrf.mxu0
        %3803 = vmatprep.mubr.bf16.mxu0 0
        %3804 = vmatmul.mubr.bf16.gmra.mxu0 %v2449
        %v3805 = vpop.f32.mrf.mxu0
        %v3806 = vadd.f32 0.0, %v3805
        %v3807 = vpop.f32.mrf.mxu0
        %v3808 = vpop.f32.mrf.mxu0
        %v3809 = vadd.f32 0.0, %v3808
        %v3810 = vpop.f32.mrf.mxu0
        %3811 = vmatprep.mubr.bf16.mxu0 0
        %3812 = vmatmul.mubr.bf16.gmra.mxu0 %v2451
        %v3813 = vpop.f32.mrf.mxu0
        %v3814 = vadd.f32 0.0, %v3813
        %v3815 = vpop.f32.mrf.mxu0
        %v3816 = vpop.f32.mrf.mxu0
        %v3817 = vadd.f32 0.0, %v3816
        %v3818 = vpop.f32.mrf.mxu0
        %3819 = vmatprep.mubr.bf16.mxu0 0
        %3820 = vmatmul.mubr.bf16.gmra.mxu0 %v2453
        %v3821 = vpop.f32.mrf.mxu0
        %v3822 = vadd.f32 0.0, %v3821
        %v3823 = vpop.f32.mrf.mxu0
        %v3824 = vpop.f32.mrf.mxu0
        %v3825 = vadd.f32 0.0, %v3824
        %v3826 = vpop.f32.mrf.mxu0
        %3827 = vmatprep.mubr.bf16.mxu0 0
        %3828 = vmatmul.mubr.bf16.gmra.mxu0 %v2455
        %v3829 = vpop.f32.mrf.mxu0
        %v3830 = vadd.f32 0.0, %v3829
        %v3831 = vpop.f32.mrf.mxu0
        %v3832 = vpop.f32.mrf.mxu0
        %v3833 = vadd.f32 0.0, %v3832
        %v3834 = vpop.f32.mrf.mxu0
        %3835 = vmatprep.mubr.bf16.mxu0 0
        %3836 = vmatmul.mubr.bf16.gmra.mxu0 %v2457
        %v3837 = vpop.f32.mrf.mxu0
        %v3838 = vadd.f32 0.0, %v3837
        %v3839 = vpop.f32.mrf.mxu0
        %v3840 = vpop.f32.mrf.mxu0
        %v3841 = vadd.f32 0.0, %v3840
        %v3842 = vpop.f32.mrf.mxu0
        %3843 = vmatprep.mubr.bf16.mxu0 0
        %3844 = vmatmul.mubr.bf16.gmra.mxu0 %v2459
        %v3845 = vpop.f32.mrf.mxu0
        %v3846 = vadd.f32 0.0, %v3845
        %v3847 = vpop.f32.mrf.mxu0
        %v3848 = vpop.f32.mrf.mxu0
        %v3849 = vadd.f32 0.0, %v3848
        %v3850 = vpop.f32.mrf.mxu0
        %3851 = vmatprep.mubr.bf16.mxu0 0
        %3852 = vmatmul.mubr.bf16.gmra.mxu0 %v2461
        %v3853 = vpop.f32.mrf.mxu0
        %v3854 = vadd.f32 0.0, %v3853
        %v3855 = vpop.f32.mrf.mxu0
        %v3856 = vpop.f32.mrf.mxu0
        %v3857 = vadd.f32 0.0, %v3856
        %v3858 = vpop.f32.mrf.mxu0
        %3859 = vmatprep.mubr.bf16.mxu0 0
        %3860 = vmatmul.mubr.bf16.gmra.mxu0 %v2463
        %v3861 = vpop.f32.mrf.mxu0
        %v3862 = vadd.f32 0.0, %v3861
        %v3863 = vpop.f32.mrf.mxu0
        %v3864 = vpop.f32.mrf.mxu0
        %v3865 = vadd.f32 0.0, %v3864
        %v3866 = vpop.f32.mrf.mxu0
        %3867 = vmatprep.mubr.bf16.mxu0 0
        %3868 = vmatmul.mubr.bf16.gmra.mxu0 %v2465
        %v3869 = vpop.f32.mrf.mxu0
        %v3870 = vadd.f32 0.0, %v3869
        %v3871 = vpop.f32.mrf.mxu0
        %v3872 = vpop.f32.mrf.mxu0
        %v3873 = vadd.f32 0.0, %v3872
        %v3874 = vpop.f32.mrf.mxu0
        %3875 = vmatprep.mubr.bf16.mxu0 0
        %3876 = vmatmul.mubr.bf16.gmra.mxu0 %v2467
        %v3877 = vpop.f32.mrf.mxu0
        %v3878 = vadd.f32 0.0, %v3877
        %v3879 = vpop.f32.mrf.mxu0
        %v3880 = vpop.f32.mrf.mxu0
        %v3881 = vadd.f32 0.0, %v3880
        %v3882 = vpop.f32.mrf.mxu0
        %3883 = vmatprep.mubr.bf16.mxu0 0
        %3884 = vmatmul.mubr.bf16.gmra.mxu0 %v2469
        %v3885 = vpop.f32.mrf.mxu0
        %v3886 = vadd.f32 0.0, %v3885
        %v3887 = vpop.f32.mrf.mxu0
        %v3888 = vpop.f32.mrf.mxu0
        %v3889 = vadd.f32 0.0, %v3888
        %v3890 = vpop.f32.mrf.mxu0
        %3891 = vmatprep.mubr.bf16.mxu0 0
        %3892 = vmatmul.mubr.bf16.gmra.mxu0 %v2471
        %v3893 = vpop.f32.mrf.mxu0
        %v3894 = vadd.f32 0.0, %v3893
        %v3895 = vpop.f32.mrf.mxu0
        %v3896 = vpop.f32.mrf.mxu0
        %v3897 = vadd.f32 0.0, %v3896
        %v3898 = vpop.f32.mrf.mxu0
        %3899 = vmatprep.mubr.bf16.mxu0 0
        %3900 = vmatmul.mubr.bf16.gmra.mxu0 %v2473
        %v3901 = vpop.f32.mrf.mxu0
        %v3902 = vadd.f32 0.0, %v3901
        %v3903 = vpop.f32.mrf.mxu0
        %v3904 = vpop.f32.mrf.mxu0
        %v3905 = vadd.f32 0.0, %v3904
        %v3906 = vpop.f32.mrf.mxu0
        %3907 = vmatprep.mubr.bf16.mxu0 0
        %3908 = vmatmul.mubr.bf16.gmra.mxu0 %v2475
        %v3909 = vpop.f32.mrf.mxu0
        %v3910 = vadd.f32 0.0, %v3909
        %v3911 = vpop.f32.mrf.mxu0
        %v3912 = vpop.f32.mrf.mxu0
        %v3913 = vadd.f32 0.0, %v3912
        %v3914 = vpop.f32.mrf.mxu0
        %3915 = vmatprep.mubr.bf16.mxu0 0
        %3916 = vmatmul.mubr.bf16.gmra.mxu0 %v2477
        %v3917 = vpop.f32.mrf.mxu0
        %v3918 = vadd.f32 0.0, %v3917
        %v3919 = vpop.f32.mrf.mxu0
        %v3920 = vpop.f32.mrf.mxu0
        %v3921 = vadd.f32 0.0, %v3920
        %v3922 = vpop.f32.mrf.mxu0
        %3923 = vmatprep.mubr.bf16.mxu0 0
        %3924 = vmatmul.mubr.bf16.gmra.mxu0 %v2479
        %v3925 = vpop.f32.mrf.mxu0
        %v3926 = vadd.f32 0.0, %v3925
        %v3927 = vpop.f32.mrf.mxu0
        %v3928 = vpop.f32.mrf.mxu0
        %v3929 = vadd.f32 0.0, %v3928
        %v3930 = vpop.f32.mrf.mxu0
        %3931 = vmatprep.mubr.bf16.mxu0 0
        %3932 = vmatmul.mubr.bf16.gmra.mxu0 %v2481
        %v3933 = vpop.f32.mrf.mxu0
        %v3934 = vadd.f32 0.0, %v3933
        %v3935 = vpop.f32.mrf.mxu0
        %v3936 = vpop.f32.mrf.mxu0
        %v3937 = vadd.f32 0.0, %v3936
        %v3938 = vpop.f32.mrf.mxu0
        %3939 = vmatprep.mubr.bf16.mxu0 0
        %3940 = vmatmul.mubr.bf16.gmra.mxu0 %v2483
        %v3941 = vpop.f32.mrf.mxu0
        %v3942 = vadd.f32 0.0, %v3941
        %v3943 = vpop.f32.mrf.mxu0
        %v3944 = vpop.f32.mrf.mxu0
        %v3945 = vadd.f32 0.0, %v3944
        %v3946 = vpop.f32.mrf.mxu0
        %3947 = vmatprep.mubr.bf16.mxu0 0
        %3948 = vmatmul.mubr.bf16.gmra.mxu0 %v2485
        %v3949 = vpop.f32.mrf.mxu0
        %v3950 = vadd.f32 0.0, %v3949
        %v3951 = vpop.f32.mrf.mxu0
        %v3952 = vpop.f32.mrf.mxu0
        %v3953 = vadd.f32 0.0, %v3952
        %v3954 = vpop.f32.mrf.mxu0
        %3955 = vmatprep.mubr.bf16.mxu0 0
        %3956 = vmatmul.mubr.bf16.gmra.mxu0 %v2487
        %v3957 = vpop.f32.mrf.mxu0
        %v3958 = vadd.f32 0.0, %v3957
        %v3959 = vpop.f32.mrf.mxu0
        %v3960 = vpop.f32.mrf.mxu0
        %v3961 = vadd.f32 0.0, %v3960
        %v3962 = vpop.f32.mrf.mxu0
        %3963 = vmatprep.mubr.bf16.mxu0 0
        %3964 = vmatmul.mubr.bf16.gmra.mxu0 %v2489
        %v3965 = vpop.f32.mrf.mxu0
        %v3966 = vadd.f32 0.0, %v3965
        %v3967 = vpop.f32.mrf.mxu0
        %v3968 = vpop.f32.mrf.mxu0
        %v3969 = vadd.f32 0.0, %v3968
        %v3970 = vpop.f32.mrf.mxu0
        %3971 = vmatprep.mubr.bf16.mxu0 0
        %3972 = vmatmul.mubr.bf16.gmra.mxu0 %v2491
        %v3973 = vpop.f32.mrf.mxu0
        %v3974 = vadd.f32 0.0, %v3973
        %v3975 = vpop.f32.mrf.mxu0
        %v3976 = vpop.f32.mrf.mxu0
        %v3977 = vadd.f32 0.0, %v3976
        %v3978 = vpop.f32.mrf.mxu0
        %3979 = vmatprep.mubr.bf16.mxu0 0
        %3980 = vmatmul.mubr.bf16.gmra.mxu0 %v2493
        %v3981 = vpop.f32.mrf.mxu0
        %v3982 = vadd.f32 0.0, %v3981
        %v3983 = vpop.f32.mrf.mxu0
        %v3984 = vpop.f32.mrf.mxu0
        %v3985 = vadd.f32 0.0, %v3984
        %v3986 = vpop.f32.mrf.mxu0
        %3987 = vmatprep.mubr.bf16.mxu0 0
        %3988 = vmatmul.mubr.bf16.gmra.mxu0 %v2495
        %v3989 = vpop.f32.mrf.mxu0
        %v3990 = vadd.f32 0.0, %v3989
        %v3991 = vpop.f32.mrf.mxu0
        %v3992 = vpop.f32.mrf.mxu0
        %v3993 = vadd.f32 0.0, %v3992
        %v3994 = vpop.f32.mrf.mxu0
        %3995 = vmatprep.mubr.bf16.mxu0 0
        %3996 = vmatmul.mubr.bf16.gmra.mxu0 %v2497
        %v3997 = vpop.f32.mrf.mxu0
        %v3998 = vadd.f32 0.0, %v3997
        %v3999 = vpop.f32.mrf.mxu0
        %v4000 = vpop.f32.mrf.mxu0
        %v4001 = vadd.f32 0.0, %v4000
        %v4002 = vpop.f32.mrf.mxu0
        %4003 = vmatprep.mubr.bf16.mxu0 0
        %4004 = vmatmul.mubr.bf16.gmra.mxu0 %v2499
        %v4005 = vpop.f32.mrf.mxu0
        %v4006 = vadd.f32 0.0, %v4005
        %v4007 = vpop.f32.mrf.mxu0
        %v4008 = vpop.f32.mrf.mxu0
        %v4009 = vadd.f32 0.0, %v4008
        %v4010 = vpop.f32.mrf.mxu0
        %4011 = vmatprep.mubr.bf16.mxu0 0
        %4012 = vmatmul.mubr.bf16.gmra.mxu0 %v2501
        %v4013 = vpop.f32.mrf.mxu0
        %v4014 = vadd.f32 0.0, %v4013
        %v4015 = vpop.f32.mrf.mxu0
        %v4016 = vpop.f32.mrf.mxu0
        %v4017 = vadd.f32 0.0, %v4016
        %v4018 = vpop.f32.mrf.mxu0
        %4019 = vmatprep.mubr.bf16.mxu0 0
        %4020 = vmatmul.mubr.bf16.gmra.mxu0 %v2503
        %v4021 = vpop.f32.mrf.mxu0
        %v4022 = vadd.f32 0.0, %v4021
        %v4023 = vpop.f32.mrf.mxu0
        %v4024 = vpop.f32.mrf.mxu0
        %v4025 = vadd.f32 0.0, %v4024
        %v4026 = vpop.f32.mrf.mxu0
        %4027 = vmatprep.mubr.bf16.mxu0 0
        %4028 = vmatmul.mubr.bf16.gmra.mxu0 %v2505
        %v4029 = vpop.f32.mrf.mxu0
        %v4030 = vadd.f32 0.0, %v4029
        %v4031 = vpop.f32.mrf.mxu0
        %v4032 = vpop.f32.mrf.mxu0
        %v4033 = vadd.f32 0.0, %v4032
        %v4034 = vpop.f32.mrf.mxu0
        %4035 = vmatprep.mubr.bf16.mxu0 0
        %4036 = vmatmul.mubr.bf16.gmra.mxu0 %v2507
        %v4037 = vpop.f32.mrf.mxu0
        %v4038 = vadd.f32 0.0, %v4037
        %v4039 = vpop.f32.mrf.mxu0
        %v4040 = vpop.f32.mrf.mxu0
        %v4041 = vadd.f32 0.0, %v4040
        %v4042 = vpop.f32.mrf.mxu0
        %4043 = vmatprep.mubr.bf16.mxu0 0
        %4044 = vmatmul.mubr.bf16.gmra.mxu0 %v2509
        %v4045 = vpop.f32.mrf.mxu0
        %v4046 = vadd.f32 0.0, %v4045
        %v4047 = vpop.f32.mrf.mxu0
        %v4048 = vpop.f32.mrf.mxu0
        %v4049 = vadd.f32 0.0, %v4048
        %v4050 = vpop.f32.mrf.mxu0
        %4051 = vmatprep.mubr.bf16.mxu0 0
        %4052 = vmatmul.mubr.bf16.gmra.mxu0 %v2511
        %v4053 = vpop.f32.mrf.mxu0
        %v4054 = vadd.f32 0.0, %v4053
        %v4055 = vpop.f32.mrf.mxu0
        %v4056 = vpop.f32.mrf.mxu0
        %v4057 = vadd.f32 0.0, %v4056
        %v4058 = vpop.f32.mrf.mxu0
        %4059 = vmatprep.mubr.bf16.mxu0 0
        %4060 = vmatmul.mubr.bf16.gmra.mxu0 %v2513
        %v4061 = vpop.f32.mrf.mxu0
        %v4062 = vadd.f32 0.0, %v4061
        %v4063 = vpop.f32.mrf.mxu0
        %v4064 = vpop.f32.mrf.mxu0
        %v4065 = vadd.f32 0.0, %v4064
        %v4066 = vpop.f32.mrf.mxu0
        %4067 = vmatprep.mubr.bf16.mxu0 0
        %4068 = vmatmul.mubr.bf16.gmra.mxu0 %v2515
        %v4069 = vpop.f32.mrf.mxu0
        %v4070 = vadd.f32 0.0, %v4069
        %v4071 = vpop.f32.mrf.mxu0
        %v4072 = vpop.f32.mrf.mxu0
        %v4073 = vadd.f32 0.0, %v4072
        %v4074 = vpop.f32.mrf.mxu0
        %4075 = vmatprep.mubr.bf16.mxu0 0
        %4076 = vmatmul.mubr.bf16.gmra.mxu0 %v2517
        %v4077 = vpop.f32.mrf.mxu0
        %v4078 = vadd.f32 0.0, %v4077
        %v4079 = vpop.f32.mrf.mxu0
        %v4080 = vpop.f32.mrf.mxu0
        %v4081 = vadd.f32 0.0, %v4080
        %v4082 = vpop.f32.mrf.mxu0
        %4083 = vmatprep.mubr.bf16.mxu0 0
        %4084 = vmatmul.mubr.bf16.gmra.mxu0 %v2519
        %v4085 = vpop.f32.mrf.mxu0
        %v4086 = vadd.f32 0.0, %v4085
        %v4087 = vpop.f32.mrf.mxu0
        %v4088 = vpop.f32.mrf.mxu0
        %v4089 = vadd.f32 0.0, %v4088
        %v4090 = vpop.f32.mrf.mxu0
        %4091 = vmatprep.mubr.bf16.mxu0 0
        %4092 = vmatmul.mubr.bf16.gmra.mxu0 %v2521
        %v4093 = vpop.f32.mrf.mxu0
        %v4094 = vadd.f32 0.0, %v4093
        %v4095 = vpop.f32.mrf.mxu0
        %v4096 = vpop.f32.mrf.mxu0
        %v4097 = vadd.f32 0.0, %v4096
        %v4098 = vpop.f32.mrf.mxu0
        %4099 = vmatprep.mubr.bf16.mxu0 0
        %4100 = vmatmul.mubr.bf16.gmra.mxu0 %v2523
        %v4101 = vpop.f32.mrf.mxu0
        %v4102 = vadd.f32 0.0, %v4101
        %v4103 = vpop.f32.mrf.mxu0
        %v4104 = vpop.f32.mrf.mxu0
        %v4105 = vadd.f32 0.0, %v4104
        %v4106 = vpop.f32.mrf.mxu0
        %4107 = vmatprep.mubr.bf16.mxu0 0
        %4108 = vmatmul.mubr.bf16.gmra.mxu0 %v2525
        %v4109 = vpop.f32.mrf.mxu0
        %v4110 = vadd.f32 0.0, %v4109
        %v4111 = vpop.f32.mrf.mxu0
        %v4112 = vpop.f32.mrf.mxu0
        %v4113 = vadd.f32 0.0, %v4112
        %v4114 = vpop.f32.mrf.mxu0
        %4115 = vmatprep.mubr.bf16.mxu0 0
        %4116 = vmatmul.mubr.bf16.gmra.mxu0 %v2527
        %v4117 = vpop.f32.mrf.mxu0
        %v4118 = vadd.f32 0.0, %v4117
        %v4119 = vpop.f32.mrf.mxu0
        %v4120 = vpop.f32.mrf.mxu0
        %v4121 = vadd.f32 0.0, %v4120
        %v4122 = vpop.f32.mrf.mxu0
        %4123 = vmatprep.mubr.bf16.mxu0 0
        %4124 = vmatmul.mubr.bf16.gmra.mxu0 %v2529
        %v4125 = vpop.f32.mrf.mxu0
        %v4126 = vadd.f32 0.0, %v4125
        %v4127 = vpop.f32.mrf.mxu0
        %v4128 = vpop.f32.mrf.mxu0
        %v4129 = vadd.f32 0.0, %v4128
        %v4130 = vpop.f32.mrf.mxu0
        %4131 = vmatprep.mubr.bf16.mxu0 0
        %4132 = vmatmul.mubr.bf16.gmra.mxu0 %v2531
        %v4133 = vpop.f32.mrf.mxu0
        %v4134 = vadd.f32 0.0, %v4133
        %v4135 = vpop.f32.mrf.mxu0
        %v4136 = vpop.f32.mrf.mxu0
        %v4137 = vadd.f32 0.0, %v4136
        %v4138 = vpop.f32.mrf.mxu0
        %4139 = vmatprep.mubr.bf16.mxu0 0
        %4140 = vmatmul.mubr.bf16.gmra.mxu0 %v2533
        %v4141 = vpop.f32.mrf.mxu0
        %v4142 = vadd.f32 0.0, %v4141
        %v4143 = vpop.f32.mrf.mxu0
        %v4144 = vpop.f32.mrf.mxu0
        %v4145 = vadd.f32 0.0, %v4144
        %v4146 = vpop.f32.mrf.mxu0
        %4147 = vmatprep.mubr.bf16.mxu0 0
        %4148 = vmatmul.mubr.bf16.gmra.mxu0 %v2535
        %v4149 = vpop.f32.mrf.mxu0
        %v4150 = vadd.f32 0.0, %v4149
        %v4151 = vpop.f32.mrf.mxu0
        %v4152 = vpop.f32.mrf.mxu0
        %v4153 = vadd.f32 0.0, %v4152
        %v4154 = vpop.f32.mrf.mxu0
        %4155 = vmatprep.mubr.bf16.mxu0 0
        %4156 = vmatmul.mubr.bf16.gmra.mxu0 %v2537
        %v4157 = vpop.f32.mrf.mxu0
        %v4158 = vadd.f32 0.0, %v4157
        %v4159 = vpop.f32.mrf.mxu0
        %v4160 = vpop.f32.mrf.mxu0
        %v4161 = vadd.f32 0.0, %v4160
        %v4162 = vpop.f32.mrf.mxu0
        %4163 = vmatprep.mubr.bf16.mxu0 0
        %4164 = vmatmul.mubr.bf16.gmra.mxu0 %v2539
        %v4165 = vpop.f32.mrf.mxu0
        %v4166 = vadd.f32 0.0, %v4165
        %v4167 = vpop.f32.mrf.mxu0
        %v4168 = vpop.f32.mrf.mxu0
        %v4169 = vadd.f32 0.0, %v4168
        %v4170 = vpop.f32.mrf.mxu0
        %4171 = vmatprep.mubr.bf16.mxu0 0
        %4172 = vmatmul.mubr.bf16.gmra.mxu0 %v2541
        %v4173 = vpop.f32.mrf.mxu0
        %v4174 = vadd.f32 0.0, %v4173
        %v4175 = vpop.f32.mrf.mxu0
        %v4176 = vpop.f32.mrf.mxu0
        %v4177 = vadd.f32 0.0, %v4176
        %v4178 = vpop.f32.mrf.mxu0
        %4179 = vmatprep.mubr.bf16.mxu0 0
        %4180 = vmatmul.mubr.bf16.gmra.mxu0 %v2543
        %v4181 = vpop.f32.mrf.mxu0
        %v4182 = vadd.f32 0.0, %v4181
        %v4183 = vpop.f32.mrf.mxu0
        %v4184 = vpop.f32.mrf.mxu0
        %v4185 = vadd.f32 0.0, %v4184
        %v4186 = vpop.f32.mrf.mxu0
        %4187 = vmatprep.mubr.bf16.mxu0 0
        %4188 = vmatmul.mubr.bf16.gmra.mxu0 %v2545
        %v4189 = vpop.f32.mrf.mxu0
        %v4190 = vadd.f32 0.0, %v4189
        %v4191 = vpop.f32.mrf.mxu0
        %v4192 = vpop.f32.mrf.mxu0
        %v4193 = vadd.f32 0.0, %v4192
        %v4194 = vpop.f32.mrf.mxu0
        %4195 = vmatprep.mubr.bf16.mxu0 0
        %4196 = vmatmul.mubr.bf16.gmra.mxu0 %v3104
        %v4197 = vpop.f32.mrf.mxu0
        %v4198 = vadd.f32 0.0, %v4197
        %v4199 = vpop.f32.mrf.mxu0
        %v4200 = vpop.f32.mrf.mxu0
        %v4201 = vadd.f32 0.0, %v4200
        %v4202 = vpop.f32.mrf.mxu0
        %4203 = vmatprep.mubr.bf16.mxu0 0
        %4204 = vmatmul.mubr.bf16.gmra.mxu0 %v3106
        %v4205 = vpop.f32.mrf.mxu0
        %v4206 = vadd.f32 0.0, %v4205
        %v4207 = vpop.f32.mrf.mxu0
        %v4208 = vpop.f32.mrf.mxu0
        %v4209 = vadd.f32 0.0, %v4208
        %v4210 = vpop.f32.mrf.mxu0
        %4211 = vdwg.mxu0
        %v4212 = vadd.f32 %v3146, %v3702
        %v4213 = vadd.f32 %v3149, %v3705
        %v4214 = vadd.f32 %v3154, %v3710
        %v4215 = vadd.f32 %v3157, %v3713
        %v4216 = vadd.f32 %v3162, %v3718
        %v4217 = vadd.f32 %v3165, %v3721
        %v4218 = vadd.f32 %v3170, %v3726
        %v4219 = vadd.f32 %v3173, %v3729
        %v4220 = vadd.f32 %v3178, %v3734
        %v4221 = vadd.f32 %v3181, %v3737
        %v4222 = vadd.f32 %v3186, %v3742
        %v4223 = vadd.f32 %v3189, %v3745
        %v4224 = vadd.f32 %v3194, %v3750
        %v4225 = vadd.f32 %v3197, %v3753
        %v4226 = vadd.f32 %v3202, %v3758
        %v4227 = vadd.f32 %v3205, %v3761
        %v4228 = vadd.f32 %v3210, %v3766
        %v4229 = vadd.f32 %v3213, %v3769
        %v4230 = vadd.f32 %v3218, %v3774
        %v4231 = vadd.f32 %v3221, %v3777
        %v4232 = vadd.f32 %v3226, %v3782
        %v4233 = vadd.f32 %v3229, %v3785
        %v4234 = vadd.f32 %v3234, %v3790
        %v4235 = vadd.f32 %v3237, %v3793
        %v4236 = vadd.f32 %v3242, %v3798
        %v4237 = vadd.f32 %v3245, %v3801
        %v4238 = vadd.f32 %v3250, %v3806
        %v4239 = vadd.f32 %v3253, %v3809
        %v4240 = vadd.f32 %v3258, %v3814
        %v4241 = vadd.f32 %v3261, %v3817
        %v4242 = vadd.f32 %v3266, %v3822
        %v4243 = vadd.f32 %v3269, %v3825
        %v4244 = vadd.f32 %v3274, %v3830
        %v4245 = vadd.f32 %v3277, %v3833
        %v4246 = vadd.f32 %v3282, %v3838
        %v4247 = vadd.f32 %v3285, %v3841
        %v4248 = vadd.f32 %v3290, %v3846
        %v4249 = vadd.f32 %v3293, %v3849
        %v4250 = vadd.f32 %v3298, %v3854
        %v4251 = vadd.f32 %v3301, %v3857
        %v4252 = vadd.f32 %v3306, %v3862
        %v4253 = vadd.f32 %v3309, %v3865
        %v4254 = vadd.f32 %v3314, %v3870
        %v4255 = vadd.f32 %v3317, %v3873
        %v4256 = vadd.f32 %v3322, %v3878
        %v4257 = vadd.f32 %v3325, %v3881
        %v4258 = vadd.f32 %v3330, %v3886
        %v4259 = vadd.f32 %v3333, %v3889
        %v4260 = vadd.f32 %v3338, %v3894
        %v4261 = vadd.f32 %v3341, %v3897
        %v4262 = vadd.f32 %v3346, %v3902
        %v4263 = vadd.f32 %v3349, %v3905
        %v4264 = vadd.f32 %v3354, %v3910
        %v4265 = vadd.f32 %v3357, %v3913
        %v4266 = vadd.f32 %v3362, %v3918
        %v4267 = vadd.f32 %v3365, %v3921
        %v4268 = vadd.f32 %v3370, %v3926
        %v4269 = vadd.f32 %v3373, %v3929
        %v4270 = vadd.f32 %v3378, %v3934
        %v4271 = vadd.f32 %v3381, %v3937
        %v4272 = vadd.f32 %v3386, %v3942
        %v4273 = vadd.f32 %v3389, %v3945
        %v4274 = vadd.f32 %v3394, %v3950
        %v4275 = vadd.f32 %v3397, %v3953
        %v4276 = vadd.f32 %v3402, %v3958
        %v4277 = vadd.f32 %v3405, %v3961
        %v4278 = vadd.f32 %v3410, %v3966
        %v4279 = vadd.f32 %v3413, %v3969
        %v4280 = vadd.f32 %v3418, %v3974
        %v4281 = vadd.f32 %v3421, %v3977
        %v4282 = vadd.f32 %v3426, %v3982
        %v4283 = vadd.f32 %v3429, %v3985
        %v4284 = vadd.f32 %v3434, %v3990
        %v4285 = vadd.f32 %v3437, %v3993
        %v4286 = vadd.f32 %v3442, %v3998
        %v4287 = vadd.f32 %v3445, %v4001
        %v4288 = vadd.f32 %v3450, %v4006
        %v4289 = vadd.f32 %v3453, %v4009
        %v4290 = vadd.f32 %v3458, %v4014
        %v4291 = vadd.f32 %v3461, %v4017
        %v4292 = vadd.f32 %v3466, %v4022
        %v4293 = vadd.f32 %v3469, %v4025
        %v4294 = vadd.f32 %v3474, %v4030
        %v4295 = vadd.f32 %v3477, %v4033
        %v4296 = vadd.f32 %v3482, %v4038
        %v4297 = vadd.f32 %v3485, %v4041
        %v4298 = vadd.f32 %v3490, %v4046
        %v4299 = vadd.f32 %v3493, %v4049
        %v4300 = vadd.f32 %v3498, %v4054
        %v4301 = vadd.f32 %v3501, %v4057
        %v4302 = vadd.f32 %v3506, %v4062
        %v4303 = vadd.f32 %v3509, %v4065
        %v4304 = vadd.f32 %v3514, %v4070
        %v4305 = vadd.f32 %v3517, %v4073
        %v4306 = vadd.f32 %v3522, %v4078
        %v4307 = vadd.f32 %v3525, %v4081
        %v4308 = vadd.f32 %v3530, %v4086
        %v4309 = vadd.f32 %v3533, %v4089
        %v4310 = vadd.f32 %v3538, %v4094
        %v4311 = vadd.f32 %v3541, %v4097
        %v4312 = vadd.f32 %v3546, %v4102
        %v4313 = vadd.f32 %v3549, %v4105
        %v4314 = vadd.f32 %v3554, %v4110
        %v4315 = vadd.f32 %v3557, %v4113
        %v4316 = vadd.f32 %v3562, %v4118
        %v4317 = vadd.f32 %v3565, %v4121
        %v4318 = vadd.f32 %v3570, %v4126
        %v4319 = vadd.f32 %v3573, %v4129
        %v4320 = vadd.f32 %v3578, %v4134
        %v4321 = vadd.f32 %v3581, %v4137
        %v4322 = vadd.f32 %v3586, %v4142
        %v4323 = vadd.f32 %v3589, %v4145
        %v4324 = vadd.f32 %v3594, %v4150
        %v4325 = vadd.f32 %v3597, %v4153
        %v4326 = vadd.f32 %v3602, %v4158
        %v4327 = vadd.f32 %v3605, %v4161
        %v4328 = vadd.f32 %v3610, %v4166
        %v4329 = vadd.f32 %v3613, %v4169
        %v4330 = vadd.f32 %v3618, %v4174
        %v4331 = vadd.f32 %v3621, %v4177
        %v4332 = vadd.f32 %v3626, %v4182
        %v4333 = vadd.f32 %v3629, %v4185
        %v4334 = vadd.f32 %v3634, %v4190
        %v4335 = vadd.f32 %v3637, %v4193
        %v4336 = vadd.f32 %v3642, %v4198
        %v4337 = vadd.f32 %v3645, %v4201
        %v4338 = vadd.f32 %v3650, %v4206
        %v4339 = vadd.f32 %v3653, %v4209
        %v4340 = vld [vmem:[%s2] sm:$0x1]
        %v4342 = vlaneseq
        %v4343 = vshrl.u32 %v4342, 7
        %v4344 = vsub.s32 0, %v4343
        %v4345 = vrot.slane %v4340, %v4344
        %v4347 = vadd.f32 %v4212, %v4345
        %v4348 = vadd.f32 %v4213, %v4345
        %v4349 = vadd.f32 %v4214, %v4345
        %v4350 = vadd.f32 %v4215, %v4345
        %v4351 = vadd.f32 %v4216, %v4345
        %v4352 = vadd.f32 %v4217, %v4345
        %v4353 = vadd.f32 %v4218, %v4345
        %v4354 = vadd.f32 %v4219, %v4345
        %v4355 = vadd.f32 %v4220, %v4345
        %v4356 = vadd.f32 %v4221, %v4345
        %v4357 = vadd.f32 %v4222, %v4345
        %v4358 = vadd.f32 %v4223, %v4345
        %v4359 = vadd.f32 %v4224, %v4345
        %v4360 = vadd.f32 %v4225, %v4345
        %v4361 = vadd.f32 %v4226, %v4345
        %v4362 = vadd.f32 %v4227, %v4345
        %v4363 = vadd.f32 %v4228, %v4345
        %v4364 = vadd.f32 %v4229, %v4345
        %v4365 = vadd.f32 %v4230, %v4345
        %v4366 = vadd.f32 %v4231, %v4345
        %v4367 = vadd.f32 %v4232, %v4345
        %v4368 = vadd.f32 %v4233, %v4345
        %v4369 = vadd.f32 %v4234, %v4345
        %v4370 = vadd.f32 %v4235, %v4345
        %v4371 = vadd.f32 %v4236, %v4345
        %v4372 = vadd.f32 %v4237, %v4345
        %v4373 = vadd.f32 %v4238, %v4345
        %v4374 = vadd.f32 %v4239, %v4345
        %v4375 = vadd.f32 %v4240, %v4345
        %v4376 = vadd.f32 %v4241, %v4345
        %v4377 = vadd.f32 %v4242, %v4345
        %v4378 = vadd.f32 %v4243, %v4345
        %v4379 = vadd.f32 %v4244, %v4345
        %v4380 = vadd.f32 %v4245, %v4345
        %v4381 = vadd.f32 %v4246, %v4345
        %v4382 = vadd.f32 %v4247, %v4345
        %v4383 = vadd.f32 %v4248, %v4345
        %v4384 = vadd.f32 %v4249, %v4345
        %v4385 = vadd.f32 %v4250, %v4345
        %v4386 = vadd.f32 %v4251, %v4345
        %v4387 = vadd.f32 %v4252, %v4345
        %v4388 = vadd.f32 %v4253, %v4345
        %v4389 = vadd.f32 %v4254, %v4345
        %v4390 = vadd.f32 %v4255, %v4345
        %v4391 = vadd.f32 %v4256, %v4345
        %v4392 = vadd.f32 %v4257, %v4345
        %v4393 = vadd.f32 %v4258, %v4345
        %v4394 = vadd.f32 %v4259, %v4345
        %v4395 = vadd.f32 %v4260, %v4345
        %v4396 = vadd.f32 %v4261, %v4345
        %v4397 = vadd.f32 %v4262, %v4345
        %v4398 = vadd.f32 %v4263, %v4345
        %v4399 = vadd.f32 %v4264, %v4345
        %v4400 = vadd.f32 %v4265, %v4345
        %v4401 = vadd.f32 %v4266, %v4345
        %v4402 = vadd.f32 %v4267, %v4345
        %v4403 = vadd.f32 %v4268, %v4345
        %v4404 = vadd.f32 %v4269, %v4345
        %v4405 = vadd.f32 %v4270, %v4345
        %v4406 = vadd.f32 %v4271, %v4345
        %v4407 = vadd.f32 %v4272, %v4345
        %v4408 = vadd.f32 %v4273, %v4345
        %v4409 = vadd.f32 %v4274, %v4345
        %v4410 = vadd.f32 %v4275, %v4345
        %v4411 = vadd.f32 %v4276, %v4345
        %v4412 = vadd.f32 %v4277, %v4345
        %v4413 = vadd.f32 %v4278, %v4345
        %v4414 = vadd.f32 %v4279, %v4345
        %v4415 = vadd.f32 %v4280, %v4345
        %v4416 = vadd.f32 %v4281, %v4345
        %v4417 = vadd.f32 %v4282, %v4345
        %v4418 = vadd.f32 %v4283, %v4345
        %v4419 = vadd.f32 %v4284, %v4345
        %v4420 = vadd.f32 %v4285, %v4345
        %v4421 = vadd.f32 %v4286, %v4345
        %v4422 = vadd.f32 %v4287, %v4345
        %v4423 = vadd.f32 %v4288, %v4345
        %v4424 = vadd.f32 %v4289, %v4345
        %v4425 = vadd.f32 %v4290, %v4345
        %v4426 = vadd.f32 %v4291, %v4345
        %v4427 = vadd.f32 %v4292, %v4345
        %v4428 = vadd.f32 %v4293, %v4345
        %v4429 = vadd.f32 %v4294, %v4345
        %v4430 = vadd.f32 %v4295, %v4345
        %v4431 = vadd.f32 %v4296, %v4345
        %v4432 = vadd.f32 %v4297, %v4345
        %v4433 = vadd.f32 %v4298, %v4345
        %v4434 = vadd.f32 %v4299, %v4345
        %v4435 = vadd.f32 %v4300, %v4345
        %v4436 = vadd.f32 %v4301, %v4345
        %v4437 = vadd.f32 %v4302, %v4345
        %v4438 = vadd.f32 %v4303, %v4345
        %v4439 = vadd.f32 %v4304, %v4345
        %v4440 = vadd.f32 %v4305, %v4345
        %v4441 = vadd.f32 %v4306, %v4345
        %v4442 = vadd.f32 %v4307, %v4345
        %v4443 = vadd.f32 %v4308, %v4345
        %v4444 = vadd.f32 %v4309, %v4345
        %v4445 = vadd.f32 %v4310, %v4345
        %v4446 = vadd.f32 %v4311, %v4345
        %v4447 = vadd.f32 %v4312, %v4345
        %v4448 = vadd.f32 %v4313, %v4345
        %v4449 = vadd.f32 %v4314, %v4345
        %v4450 = vadd.f32 %v4315, %v4345
        %v4451 = vadd.f32 %v4316, %v4345
        %v4452 = vadd.f32 %v4317, %v4345
        %v4453 = vadd.f32 %v4318, %v4345
        %v4454 = vadd.f32 %v4319, %v4345
        %v4455 = vadd.f32 %v4320, %v4345
        %v4456 = vadd.f32 %v4321, %v4345
        %v4457 = vadd.f32 %v4322, %v4345
        %v4458 = vadd.f32 %v4323, %v4345
        %v4459 = vadd.f32 %v4324, %v4345
        %v4460 = vadd.f32 %v4325, %v4345
        %v4461 = vadd.f32 %v4326, %v4345
        %v4462 = vadd.f32 %v4327, %v4345
        %v4463 = vadd.f32 %v4328, %v4345
        %v4464 = vadd.f32 %v4329, %v4345
        %v4465 = vadd.f32 %v4330, %v4345
        %v4466 = vadd.f32 %v4331, %v4345
        %v4467 = vadd.f32 %v4332, %v4345
        %v4468 = vadd.f32 %v4333, %v4345
        %v4469 = vadd.f32 %v4334, %v4345
        %v4470 = vadd.f32 %v4335, %v4345
        %v4471 = vadd.f32 %v4336, %v4345
        %v4472 = vadd.f32 %v4337, %v4345
        %v4473 = vadd.f32 %v4338, %v4345
        %v4474 = vadd.f32 %v4339, %v4345
        %v4475 = vpack.c.bf16 %v4348, %v4347
        %v4476 = vpack.c.bf16 %v4350, %v4349
        %v4477 = vpack.c.bf16 %v4352, %v4351
        %v4478 = vpack.c.bf16 %v4354, %v4353
        %v4479 = vpack.c.bf16 %v4356, %v4355
        %v4480 = vpack.c.bf16 %v4358, %v4357
        %v4481 = vpack.c.bf16 %v4360, %v4359
        %v4482 = vpack.c.bf16 %v4362, %v4361
        %v4483 = vpack.c.bf16 %v4364, %v4363
        %v4484 = vpack.c.bf16 %v4366, %v4365
        %v4485 = vpack.c.bf16 %v4368, %v4367
        %v4486 = vpack.c.bf16 %v4370, %v4369
        %v4487 = vpack.c.bf16 %v4372, %v4371
        %v4488 = vpack.c.bf16 %v4374, %v4373
        %v4489 = vpack.c.bf16 %v4376, %v4375
        %v4490 = vpack.c.bf16 %v4378, %v4377
        %v4491 = vpack.c.bf16 %v4380, %v4379
        %v4492 = vpack.c.bf16 %v4382, %v4381
        %v4493 = vpack.c.bf16 %v4384, %v4383
        %v4494 = vpack.c.bf16 %v4386, %v4385
        %v4495 = vpack.c.bf16 %v4388, %v4387
        %v4496 = vpack.c.bf16 %v4390, %v4389
        %v4497 = vpack.c.bf16 %v4392, %v4391
        %v4498 = vpack.c.bf16 %v4394, %v4393
        %v4499 = vpack.c.bf16 %v4396, %v4395
        %v4500 = vpack.c.bf16 %v4398, %v4397
        %v4501 = vpack.c.bf16 %v4400, %v4399
        %v4502 = vpack.c.bf16 %v4402, %v4401
        %v4503 = vpack.c.bf16 %v4404, %v4403
        %v4504 = vpack.c.bf16 %v4406, %v4405
        %v4505 = vpack.c.bf16 %v4408, %v4407
        %v4506 = vpack.c.bf16 %v4410, %v4409
        %v4507 = vpack.c.bf16 %v4412, %v4411
        %v4508 = vpack.c.bf16 %v4414, %v4413
        %v4509 = vpack.c.bf16 %v4416, %v4415
        %v4510 = vpack.c.bf16 %v4418, %v4417
        %v4511 = vpack.c.bf16 %v4420, %v4419
        %v4512 = vpack.c.bf16 %v4422, %v4421
        %v4513 = vpack.c.bf16 %v4424, %v4423
        %v4514 = vpack.c.bf16 %v4426, %v4425
        %v4515 = vpack.c.bf16 %v4428, %v4427
        %v4516 = vpack.c.bf16 %v4430, %v4429
        %v4517 = vpack.c.bf16 %v4432, %v4431
        %v4518 = vpack.c.bf16 %v4434, %v4433
        %v4519 = vpack.c.bf16 %v4436, %v4435
        %v4520 = vpack.c.bf16 %v4438, %v4437
        %v4521 = vpack.c.bf16 %v4440, %v4439
        %v4522 = vpack.c.bf16 %v4442, %v4441
        %v4523 = vpack.c.bf16 %v4444, %v4443
        %v4524 = vpack.c.bf16 %v4446, %v4445
        %v4525 = vpack.c.bf16 %v4448, %v4447
        %v4526 = vpack.c.bf16 %v4450, %v4449
        %v4527 = vpack.c.bf16 %v4452, %v4451
        %v4528 = vpack.c.bf16 %v4454, %v4453
        %v4529 = vpack.c.bf16 %v4456, %v4455
        %v4530 = vpack.c.bf16 %v4458, %v4457
        %v4531 = vpack.c.bf16 %v4460, %v4459
        %v4532 = vpack.c.bf16 %v4462, %v4461
        %v4533 = vpack.c.bf16 %v4464, %v4463
        %v4534 = vpack.c.bf16 %v4466, %v4465
        %v4535 = vpack.c.bf16 %v4468, %v4467
        %v4536 = vpack.c.bf16 %v4470, %v4469
        %v4537 = vpack.c.bf16 %v4472, %v4471
        %v4538 = vpack.c.bf16 %v4474, %v4473
        %v4603 = vunpack.c.l.b16 %v4475
        %v4604 = vunpack.c.h.b16 %v4475
        %v4605 = vunpack.c.l.b16 %v4476
        %v4606 = vunpack.c.h.b16 %v4476
        %v4607 = vunpack.c.l.b16 %v4477
        %v4608 = vunpack.c.h.b16 %v4477
        %v4609 = vunpack.c.l.b16 %v4478
        %v4610 = vunpack.c.h.b16 %v4478
        %v4611 = vunpack.c.l.b16 %v4479
        %v4612 = vunpack.c.h.b16 %v4479
        %v4613 = vunpack.c.l.b16 %v4480
        %v4614 = vunpack.c.h.b16 %v4480
        %v4615 = vunpack.c.l.b16 %v4481
        %v4616 = vunpack.c.h.b16 %v4481
        %v4617 = vunpack.c.l.b16 %v4482
        %v4618 = vunpack.c.h.b16 %v4482
        %v4619 = vunpack.c.l.b16 %v4483
        %v4620 = vunpack.c.h.b16 %v4483
        %v4621 = vunpack.c.l.b16 %v4484
        %v4622 = vunpack.c.h.b16 %v4484
        %v4623 = vunpack.c.l.b16 %v4485
        %v4624 = vunpack.c.h.b16 %v4485
        %v4625 = vunpack.c.l.b16 %v4486
        %v4626 = vunpack.c.h.b16 %v4486
        %v4627 = vunpack.c.l.b16 %v4487
        %v4628 = vunpack.c.h.b16 %v4487
        %v4629 = vunpack.c.l.b16 %v4488
        %v4630 = vunpack.c.h.b16 %v4488
        %v4631 = vunpack.c.l.b16 %v4489
        %v4632 = vunpack.c.h.b16 %v4489
        %v4633 = vunpack.c.l.b16 %v4490
        %v4634 = vunpack.c.h.b16 %v4490
        %v4635 = vunpack.c.l.b16 %v4491
        %v4636 = vunpack.c.h.b16 %v4491
        %v4637 = vunpack.c.l.b16 %v4492
        %v4638 = vunpack.c.h.b16 %v4492
        %v4639 = vunpack.c.l.b16 %v4493
        %v4640 = vunpack.c.h.b16 %v4493
        %v4641 = vunpack.c.l.b16 %v4494
        %v4642 = vunpack.c.h.b16 %v4494
        %v4643 = vunpack.c.l.b16 %v4495
        %v4644 = vunpack.c.h.b16 %v4495
        %v4645 = vunpack.c.l.b16 %v4496
        %v4646 = vunpack.c.h.b16 %v4496
        %v4647 = vunpack.c.l.b16 %v4497
        %v4648 = vunpack.c.h.b16 %v4497
        %v4649 = vunpack.c.l.b16 %v4498
        %v4650 = vunpack.c.h.b16 %v4498
        %v4651 = vunpack.c.l.b16 %v4499
        %v4652 = vunpack.c.h.b16 %v4499
        %v4653 = vunpack.c.l.b16 %v4500
        %v4654 = vunpack.c.h.b16 %v4500
        %v4655 = vunpack.c.l.b16 %v4501
        %v4656 = vunpack.c.h.b16 %v4501
        %v4657 = vunpack.c.l.b16 %v4502
        %v4658 = vunpack.c.h.b16 %v4502
        %v4659 = vunpack.c.l.b16 %v4503
        %v4660 = vunpack.c.h.b16 %v4503
        %v4661 = vunpack.c.l.b16 %v4504
        %v4662 = vunpack.c.h.b16 %v4504
        %v4663 = vunpack.c.l.b16 %v4505
        %v4664 = vunpack.c.h.b16 %v4505
        %v4665 = vunpack.c.l.b16 %v4506
        %v4666 = vunpack.c.h.b16 %v4506
        %v4667 = vunpack.c.l.b16 %v4507
        %v4668 = vunpack.c.h.b16 %v4507
        %v4669 = vunpack.c.l.b16 %v4508
        %v4670 = vunpack.c.h.b16 %v4508
        %v4671 = vunpack.c.l.b16 %v4509
        %v4672 = vunpack.c.h.b16 %v4509
        %v4673 = vunpack.c.l.b16 %v4510
        %v4674 = vunpack.c.h.b16 %v4510
        %v4675 = vunpack.c.l.b16 %v4511
        %v4676 = vunpack.c.h.b16 %v4511
        %v4677 = vunpack.c.l.b16 %v4512
        %v4678 = vunpack.c.h.b16 %v4512
        %v4679 = vunpack.c.l.b16 %v4513
        %v4680 = vunpack.c.h.b16 %v4513
        %v4681 = vunpack.c.l.b16 %v4514
        %v4682 = vunpack.c.h.b16 %v4514
        %v4683 = vunpack.c.l.b16 %v4515
        %v4684 = vunpack.c.h.b16 %v4515
        %v4685 = vunpack.c.l.b16 %v4516
        %v4686 = vunpack.c.h.b16 %v4516
        %v4687 = vunpack.c.l.b16 %v4517
        %v4688 = vunpack.c.h.b16 %v4517
        %v4689 = vunpack.c.l.b16 %v4518
        %v4690 = vunpack.c.h.b16 %v4518
        %v4691 = vunpack.c.l.b16 %v4519
        %v4692 = vunpack.c.h.b16 %v4519
        %v4693 = vunpack.c.l.b16 %v4520
        %v4694 = vunpack.c.h.b16 %v4520
        %v4695 = vunpack.c.l.b16 %v4521
        %v4696 = vunpack.c.h.b16 %v4521
        %v4697 = vunpack.c.l.b16 %v4522
        %v4698 = vunpack.c.h.b16 %v4522
        %v4699 = vunpack.c.l.b16 %v4523
        %v4700 = vunpack.c.h.b16 %v4523
        %v4701 = vunpack.c.l.b16 %v4524
        %v4702 = vunpack.c.h.b16 %v4524
        %v4703 = vunpack.c.l.b16 %v4525
        %v4704 = vunpack.c.h.b16 %v4525
        %v4705 = vunpack.c.l.b16 %v4526
        %v4706 = vunpack.c.h.b16 %v4526
        %v4707 = vunpack.c.l.b16 %v4527
        %v4708 = vunpack.c.h.b16 %v4527
        %v4709 = vunpack.c.l.b16 %v4528
        %v4710 = vunpack.c.h.b16 %v4528
        %v4711 = vunpack.c.l.b16 %v4529
        %v4712 = vunpack.c.h.b16 %v4529
        %v4713 = vunpack.c.l.b16 %v4530
        %v4714 = vunpack.c.h.b16 %v4530
        %v4715 = vunpack.c.l.b16 %v4531
        %v4716 = vunpack.c.h.b16 %v4531
        %v4717 = vunpack.c.l.b16 %v4532
        %v4718 = vunpack.c.h.b16 %v4532
        %v4719 = vunpack.c.l.b16 %v4533
        %v4720 = vunpack.c.h.b16 %v4533
        %v4721 = vunpack.c.l.b16 %v4534
        %v4722 = vunpack.c.h.b16 %v4534
        %v4723 = vunpack.c.l.b16 %v4535
        %v4724 = vunpack.c.h.b16 %v4535
        %v4725 = vunpack.c.l.b16 %v4536
        %v4726 = vunpack.c.h.b16 %v4536
        %v4727 = vunpack.c.l.b16 %v4537
        %v4728 = vunpack.c.h.b16 %v4537
        %v4729 = vunpack.c.l.b16 %v4538
        %v4730 = vunpack.c.h.b16 %v4538
        %v4731 = vpack.c.b16 %v4603, %v4603
        %v4732 = vpack.c.b16 %v4604, %v4604
        %v4733 = vpack.c.b16 %v4605, %v4605
        %v4734 = vpack.c.b16 %v4606, %v4606
        %v4735 = vpack.c.b16 %v4607, %v4607
        %v4736 = vpack.c.b16 %v4608, %v4608
        %v4737 = vpack.c.b16 %v4609, %v4609
        %v4738 = vpack.c.b16 %v4610, %v4610
        %v4739 = vpack.c.b16 %v4611, %v4611
        %v4740 = vpack.c.b16 %v4612, %v4612
        %v4741 = vpack.c.b16 %v4613, %v4613
        %v4742 = vpack.c.b16 %v4614, %v4614
        %v4743 = vpack.c.b16 %v4615, %v4615
        %v4744 = vpack.c.b16 %v4616, %v4616
        %v4745 = vpack.c.b16 %v4617, %v4617
        %v4746 = vpack.c.b16 %v4618, %v4618
        %v4747 = vpack.c.b16 %v4619, %v4619
        %v4748 = vpack.c.b16 %v4620, %v4620
        %v4749 = vpack.c.b16 %v4621, %v4621
        %v4750 = vpack.c.b16 %v4622, %v4622
        %v4751 = vpack.c.b16 %v4623, %v4623
        %v4752 = vpack.c.b16 %v4624, %v4624
        %v4753 = vpack.c.b16 %v4625, %v4625
        %v4754 = vpack.c.b16 %v4626, %v4626
        %v4755 = vpack.c.b16 %v4627, %v4627
        %v4756 = vpack.c.b16 %v4628, %v4628
        %v4757 = vpack.c.b16 %v4629, %v4629
        %v4758 = vpack.c.b16 %v4630, %v4630
        %v4759 = vpack.c.b16 %v4631, %v4631
        %v4760 = vpack.c.b16 %v4632, %v4632
        %v4761 = vpack.c.b16 %v4633, %v4633
        %v4762 = vpack.c.b16 %v4634, %v4634
        %v4763 = vpack.c.b16 %v4635, %v4635
        %v4764 = vpack.c.b16 %v4636, %v4636
        %v4765 = vpack.c.b16 %v4637, %v4637
        %v4766 = vpack.c.b16 %v4638, %v4638
        %v4767 = vpack.c.b16 %v4639, %v4639
        %v4768 = vpack.c.b16 %v4640, %v4640
        %v4769 = vpack.c.b16 %v4641, %v4641
        %v4770 = vpack.c.b16 %v4642, %v4642
        %v4771 = vpack.c.b16 %v4643, %v4643
        %v4772 = vpack.c.b16 %v4644, %v4644
        %v4773 = vpack.c.b16 %v4645, %v4645
        %v4774 = vpack.c.b16 %v4646, %v4646
        %v4775 = vpack.c.b16 %v4647, %v4647
        %v4776 = vpack.c.b16 %v4648, %v4648
        %v4777 = vpack.c.b16 %v4649, %v4649
        %v4778 = vpack.c.b16 %v4650, %v4650
        %v4779 = vpack.c.b16 %v4651, %v4651
        %v4780 = vpack.c.b16 %v4652, %v4652
        %v4781 = vpack.c.b16 %v4653, %v4653
        %v4782 = vpack.c.b16 %v4654, %v4654
        %v4783 = vpack.c.b16 %v4655, %v4655
        %v4784 = vpack.c.b16 %v4656, %v4656
        %v4785 = vpack.c.b16 %v4657, %v4657
        %v4786 = vpack.c.b16 %v4658, %v4658
        %v4787 = vpack.c.b16 %v4659, %v4659
        %v4788 = vpack.c.b16 %v4660, %v4660
        %v4789 = vpack.c.b16 %v4661, %v4661
        %v4790 = vpack.c.b16 %v4662, %v4662
        %v4791 = vpack.c.b16 %v4663, %v4663
        %v4792 = vpack.c.b16 %v4664, %v4664
        %v4793 = vpack.c.b16 %v4665, %v4665
        %v4794 = vpack.c.b16 %v4666, %v4666
        %v4795 = vpack.c.b16 %v4667, %v4667
        %v4796 = vpack.c.b16 %v4668, %v4668
        %v4797 = vpack.c.b16 %v4669, %v4669
        %v4798 = vpack.c.b16 %v4670, %v4670
        %v4799 = vpack.c.b16 %v4671, %v4671
        %v4800 = vpack.c.b16 %v4672, %v4672
        %v4801 = vpack.c.b16 %v4673, %v4673
        %v4802 = vpack.c.b16 %v4674, %v4674
        %v4803 = vpack.c.b16 %v4675, %v4675
        %v4804 = vpack.c.b16 %v4676, %v4676
        %v4805 = vpack.c.b16 %v4677, %v4677
        %v4806 = vpack.c.b16 %v4678, %v4678
        %v4807 = vpack.c.b16 %v4679, %v4679
        %v4808 = vpack.c.b16 %v4680, %v4680
        %v4809 = vpack.c.b16 %v4681, %v4681
        %v4810 = vpack.c.b16 %v4682, %v4682
        %v4811 = vpack.c.b16 %v4683, %v4683
        %v4812 = vpack.c.b16 %v4684, %v4684
        %v4813 = vpack.c.b16 %v4685, %v4685
        %v4814 = vpack.c.b16 %v4686, %v4686
        %v4815 = vpack.c.b16 %v4687, %v4687
        %v4816 = vpack.c.b16 %v4688, %v4688
        %v4817 = vpack.c.b16 %v4689, %v4689
        %v4818 = vpack.c.b16 %v4690, %v4690
        %v4819 = vpack.c.b16 %v4691, %v4691
        %v4820 = vpack.c.b16 %v4692, %v4692
        %v4821 = vpack.c.b16 %v4693, %v4693
        %v4822 = vpack.c.b16 %v4694, %v4694
        %v4823 = vpack.c.b16 %v4695, %v4695
        %v4824 = vpack.c.b16 %v4696, %v4696
        %v4825 = vpack.c.b16 %v4697, %v4697
        %v4826 = vpack.c.b16 %v4698, %v4698
        %v4827 = vpack.c.b16 %v4699, %v4699
        %v4828 = vpack.c.b16 %v4700, %v4700
        %v4829 = vpack.c.b16 %v4701, %v4701
        %v4830 = vpack.c.b16 %v4702, %v4702
        %v4831 = vpack.c.b16 %v4703, %v4703
        %v4832 = vpack.c.b16 %v4704, %v4704
        %v4833 = vpack.c.b16 %v4705, %v4705
        %v4834 = vpack.c.b16 %v4706, %v4706
        %v4835 = vpack.c.b16 %v4707, %v4707
        %v4836 = vpack.c.b16 %v4708, %v4708
        %v4837 = vpack.c.b16 %v4709, %v4709
        %v4838 = vpack.c.b16 %v4710, %v4710
        %v4839 = vpack.c.b16 %v4711, %v4711
        %v4840 = vpack.c.b16 %v4712, %v4712
        %v4841 = vpack.c.b16 %v4713, %v4713
        %v4842 = vpack.c.b16 %v4714, %v4714
        %v4843 = vpack.c.b16 %v4715, %v4715
        %v4844 = vpack.c.b16 %v4716, %v4716
        %v4845 = vpack.c.b16 %v4717, %v4717
        %v4846 = vpack.c.b16 %v4718, %v4718
        %v4847 = vpack.c.b16 %v4719, %v4719
        %v4848 = vpack.c.b16 %v4720, %v4720
        %v4849 = vpack.c.b16 %v4721, %v4721
        %v4850 = vpack.c.b16 %v4722, %v4722
        %v4851 = vpack.c.b16 %v4723, %v4723
        %v4852 = vpack.c.b16 %v4724, %v4724
        %v4853 = vpack.c.b16 %v4725, %v4725
        %v4854 = vpack.c.b16 %v4726, %v4726
        %v4855 = vpack.c.b16 %v4727, %v4727
        %v4856 = vpack.c.b16 %v4728, %v4728
        %v4857 = vpack.c.b16 %v4729, %v4729
        %v4858 = vpack.c.b16 %v4730, %v4730
        %vm4987 = vcmask 257024
        %4988 = vst.msk [vmem:[%s163] sm:$0xf] %vm4987, %v4731
        %4989 = vst.msk [vmem:[%s163 + $0x4] sm:$0xf] %vm4987, %v4732
        %4990 = vst.msk [vmem:[%s163 + $0x8] sm:$0xf] %vm4987, %v4733
        %4991 = vst.msk [vmem:[%s163 + $0xc] sm:$0xf] %vm4987, %v4734
        %4992 = vst.msk [vmem:[%s163 + $0x10] sm:$0xf] %vm4987, %v4735
        %4993 = vst.msk [vmem:[%s163 + $0x14] sm:$0xf] %vm4987, %v4736
        %4994 = vst.msk [vmem:[%s163 + $0x18] sm:$0xf] %vm4987, %v4737
        %4995 = vst.msk [vmem:[%s163 + $0x1c] sm:$0xf] %vm4987, %v4738
        %4996 = vst.msk [vmem:[%s163 + $0x20] sm:$0xf] %vm4987, %v4739
        %4997 = vst.msk [vmem:[%s163 + $0x24] sm:$0xf] %vm4987, %v4740
        %4998 = vst.msk [vmem:[%s163 + $0x28] sm:$0xf] %vm4987, %v4741
        %4999 = vst.msk [vmem:[%s163 + $0x2c] sm:$0xf] %vm4987, %v4742
        %5000 = vst.msk [vmem:[%s163 + $0x30] sm:$0xf] %vm4987, %v4743
        %5001 = vst.msk [vmem:[%s163 + $0x34] sm:$0xf] %vm4987, %v4744
        %5002 = vst.msk [vmem:[%s163 + $0x38] sm:$0xf] %vm4987, %v4745
        %5003 = vst.msk [vmem:[%s163 + $0x3c] sm:$0xf] %vm4987, %v4746
        %5004 = vst.msk [vmem:[%s163 + $0x40] sm:$0xf] %vm4987, %v4747
        %5005 = vst.msk [vmem:[%s163 + $0x44] sm:$0xf] %vm4987, %v4748
        %5006 = vst.msk [vmem:[%s163 + $0x48] sm:$0xf] %vm4987, %v4749
        %5007 = vst.msk [vmem:[%s163 + $0x4c] sm:$0xf] %vm4987, %v4750
        %5008 = vst.msk [vmem:[%s163 + $0x50] sm:$0xf] %vm4987, %v4751
        %5009 = vst.msk [vmem:[%s163 + $0x54] sm:$0xf] %vm4987, %v4752
        %5010 = vst.msk [vmem:[%s163 + $0x58] sm:$0xf] %vm4987, %v4753
        %5011 = vst.msk [vmem:[%s163 + $0x5c] sm:$0xf] %vm4987, %v4754
        %5012 = vst.msk [vmem:[%s163 + $0x60] sm:$0xf] %vm4987, %v4755
        %5013 = vst.msk [vmem:[%s163 + $0x64] sm:$0xf] %vm4987, %v4756
        %5014 = vst.msk [vmem:[%s163 + $0x68] sm:$0xf] %vm4987, %v4757
        %5015 = vst.msk [vmem:[%s163 + $0x6c] sm:$0xf] %vm4987, %v4758
        %5016 = vst.msk [vmem:[%s163 + $0x70] sm:$0xf] %vm4987, %v4759
        %5017 = vst.msk [vmem:[%s163 + $0x74] sm:$0xf] %vm4987, %v4760
        %5018 = vst.msk [vmem:[%s163 + $0x78] sm:$0xf] %vm4987, %v4761
        %5019 = vst.msk [vmem:[%s163 + $0x7c] sm:$0xf] %vm4987, %v4762
        %5020 = vst.msk [vmem:[%s163 + $0x80] sm:$0xf] %vm4987, %v4763
        %5021 = vst.msk [vmem:[%s163 + $0x84] sm:$0xf] %vm4987, %v4764
        %5022 = vst.msk [vmem:[%s163 + $0x88] sm:$0xf] %vm4987, %v4765
        %5023 = vst.msk [vmem:[%s163 + $0x8c] sm:$0xf] %vm4987, %v4766
        %5024 = vst.msk [vmem:[%s163 + $0x90] sm:$0xf] %vm4987, %v4767
        %5025 = vst.msk [vmem:[%s163 + $0x94] sm:$0xf] %vm4987, %v4768
        %5026 = vst.msk [vmem:[%s163 + $0x98] sm:$0xf] %vm4987, %v4769
        %5027 = vst.msk [vmem:[%s163 + $0x9c] sm:$0xf] %vm4987, %v4770
        %5028 = vst.msk [vmem:[%s163 + $0xa0] sm:$0xf] %vm4987, %v4771
        %5029 = vst.msk [vmem:[%s163 + $0xa4] sm:$0xf] %vm4987, %v4772
        %5030 = vst.msk [vmem:[%s163 + $0xa8] sm:$0xf] %vm4987, %v4773
        %5031 = vst.msk [vmem:[%s163 + $0xac] sm:$0xf] %vm4987, %v4774
        %5032 = vst.msk [vmem:[%s163 + $0xb0] sm:$0xf] %vm4987, %v4775
        %5033 = vst.msk [vmem:[%s163 + $0xb4] sm:$0xf] %vm4987, %v4776
        %5034 = vst.msk [vmem:[%s163 + $0xb8] sm:$0xf] %vm4987, %v4777
        %5035 = vst.msk [vmem:[%s163 + $0xbc] sm:$0xf] %vm4987, %v4778
        %5036 = vst.msk [vmem:[%s163 + $0xc0] sm:$0xf] %vm4987, %v4779
        %5037 = vst.msk [vmem:[%s163 + $0xc4] sm:$0xf] %vm4987, %v4780
        %5038 = vst.msk [vmem:[%s163 + $0xc8] sm:$0xf] %vm4987, %v4781
        %5039 = vst.msk [vmem:[%s163 + $0xcc] sm:$0xf] %vm4987, %v4782
        %5040 = vst.msk [vmem:[%s163 + $0xd0] sm:$0xf] %vm4987, %v4783
        %5041 = vst.msk [vmem:[%s163 + $0xd4] sm:$0xf] %vm4987, %v4784
        %5042 = vst.msk [vmem:[%s163 + $0xd8] sm:$0xf] %vm4987, %v4785
        %5043 = vst.msk [vmem:[%s163 + $0xdc] sm:$0xf] %vm4987, %v4786
        %5044 = vst.msk [vmem:[%s163 + $0xe0] sm:$0xf] %vm4987, %v4787
        %5045 = vst.msk [vmem:[%s163 + $0xe4] sm:$0xf] %vm4987, %v4788
        %5046 = vst.msk [vmem:[%s163 + $0xe8] sm:$0xf] %vm4987, %v4789
        %5047 = vst.msk [vmem:[%s163 + $0xec] sm:$0xf] %vm4987, %v4790
        %5048 = vst.msk [vmem:[%s163 + $0xf0] sm:$0xf] %vm4987, %v4791
        %5049 = vst.msk [vmem:[%s163 + $0xf4] sm:$0xf] %vm4987, %v4792
        %5050 = vst.msk [vmem:[%s163 + $0xf8] sm:$0xf] %vm4987, %v4793
        %5051 = vst.msk [vmem:[%s163 + $0xfc] sm:$0xf] %vm4987, %v4794
        %5052 = vst.msk [vmem:[%s163 + $0x100] sm:$0xf] %vm4987, %v4795
        %5053 = vst.msk [vmem:[%s163 + $0x104] sm:$0xf] %vm4987, %v4796
        %5054 = vst.msk [vmem:[%s163 + $0x108] sm:$0xf] %vm4987, %v4797
        %5055 = vst.msk [vmem:[%s163 + $0x10c] sm:$0xf] %vm4987, %v4798
        %5056 = vst.msk [vmem:[%s163 + $0x110] sm:$0xf] %vm4987, %v4799
        %5057 = vst.msk [vmem:[%s163 + $0x114] sm:$0xf] %vm4987, %v4800
        %5058 = vst.msk [vmem:[%s163 + $0x118] sm:$0xf] %vm4987, %v4801
        %5059 = vst.msk [vmem:[%s163 + $0x11c] sm:$0xf] %vm4987, %v4802
        %5060 = vst.msk [vmem:[%s163 + $0x120] sm:$0xf] %vm4987, %v4803
        %5061 = vst.msk [vmem:[%s163 + $0x124] sm:$0xf] %vm4987, %v4804
        %5062 = vst.msk [vmem:[%s163 + $0x128] sm:$0xf] %vm4987, %v4805
        %5063 = vst.msk [vmem:[%s163 + $0x12c] sm:$0xf] %vm4987, %v4806
        %5064 = vst.msk [vmem:[%s163 + $0x130] sm:$0xf] %vm4987, %v4807
        %5065 = vst.msk [vmem:[%s163 + $0x134] sm:$0xf] %vm4987, %v4808
        %5066 = vst.msk [vmem:[%s163 + $0x138] sm:$0xf] %vm4987, %v4809
        %5067 = vst.msk [vmem:[%s163 + $0x13c] sm:$0xf] %vm4987, %v4810
        %5068 = vst.msk [vmem:[%s163 + $0x140] sm:$0xf] %vm4987, %v4811
        %5069 = vst.msk [vmem:[%s163 + $0x144] sm:$0xf] %vm4987, %v4812
        %5070 = vst.msk [vmem:[%s163 + $0x148] sm:$0xf] %vm4987, %v4813
        %5071 = vst.msk [vmem:[%s163 + $0x14c] sm:$0xf] %vm4987, %v4814
        %5072 = vst.msk [vmem:[%s163 + $0x150] sm:$0xf] %vm4987, %v4815
        %5073 = vst.msk [vmem:[%s163 + $0x154] sm:$0xf] %vm4987, %v4816
        %5074 = vst.msk [vmem:[%s163 + $0x158] sm:$0xf] %vm4987, %v4817
        %5075 = vst.msk [vmem:[%s163 + $0x15c] sm:$0xf] %vm4987, %v4818
        %5076 = vst.msk [vmem:[%s163 + $0x160] sm:$0xf] %vm4987, %v4819
        %5077 = vst.msk [vmem:[%s163 + $0x164] sm:$0xf] %vm4987, %v4820
        %5078 = vst.msk [vmem:[%s163 + $0x168] sm:$0xf] %vm4987, %v4821
        %5079 = vst.msk [vmem:[%s163 + $0x16c] sm:$0xf] %vm4987, %v4822
        %5080 = vst.msk [vmem:[%s163 + $0x170] sm:$0xf] %vm4987, %v4823
        %5081 = vst.msk [vmem:[%s163 + $0x174] sm:$0xf] %vm4987, %v4824
        %5082 = vst.msk [vmem:[%s163 + $0x178] sm:$0xf] %vm4987, %v4825
        %5083 = vst.msk [vmem:[%s163 + $0x17c] sm:$0xf] %vm4987, %v4826
        %5084 = vst.msk [vmem:[%s163 + $0x180] sm:$0xf] %vm4987, %v4827
        %5085 = vst.msk [vmem:[%s163 + $0x184] sm:$0xf] %vm4987, %v4828
        %5086 = vst.msk [vmem:[%s163 + $0x188] sm:$0xf] %vm4987, %v4829
        %5087 = vst.msk [vmem:[%s163 + $0x18c] sm:$0xf] %vm4987, %v4830
        %5088 = vst.msk [vmem:[%s163 + $0x190] sm:$0xf] %vm4987, %v4831
        %5089 = vst.msk [vmem:[%s163 + $0x194] sm:$0xf] %vm4987, %v4832
        %5090 = vst.msk [vmem:[%s163 + $0x198] sm:$0xf] %vm4987, %v4833
        %5091 = vst.msk [vmem:[%s163 + $0x19c] sm:$0xf] %vm4987, %v4834
        %5092 = vst.msk [vmem:[%s163 + $0x1a0] sm:$0xf] %vm4987, %v4835
        %5093 = vst.msk [vmem:[%s163 + $0x1a4] sm:$0xf] %vm4987, %v4836
        %5094 = vst.msk [vmem:[%s163 + $0x1a8] sm:$0xf] %vm4987, %v4837
        %5095 = vst.msk [vmem:[%s163 + $0x1ac] sm:$0xf] %vm4987, %v4838
        %5096 = vst.msk [vmem:[%s163 + $0x1b0] sm:$0xf] %vm4987, %v4839
        %5097 = vst.msk [vmem:[%s163 + $0x1b4] sm:$0xf] %vm4987, %v4840
        %5098 = vst.msk [vmem:[%s163 + $0x1b8] sm:$0xf] %vm4987, %v4841
        %5099 = vst.msk [vmem:[%s163 + $0x1bc] sm:$0xf] %vm4987, %v4842
        %5100 = vst.msk [vmem:[%s163 + $0x1c0] sm:$0xf] %vm4987, %v4843
        %5101 = vst.msk [vmem:[%s163 + $0x1c4] sm:$0xf] %vm4987, %v4844
        %5102 = vst.msk [vmem:[%s163 + $0x1c8] sm:$0xf] %vm4987, %v4845
        %5103 = vst.msk [vmem:[%s163 + $0x1cc] sm:$0xf] %vm4987, %v4846
        %5104 = vst.msk [vmem:[%s163 + $0x1d0] sm:$0xf] %vm4987, %v4847
        %5105 = vst.msk [vmem:[%s163 + $0x1d4] sm:$0xf] %vm4987, %v4848
        %5106 = vst.msk [vmem:[%s163 + $0x1d8] sm:$0xf] %vm4987, %v4849
        %5107 = vst.msk [vmem:[%s163 + $0x1dc] sm:$0xf] %vm4987, %v4850
        %5108 = vst.msk [vmem:[%s163 + $0x1e0] sm:$0xf] %vm4987, %v4851
        %5109 = vst.msk [vmem:[%s163 + $0x1e4] sm:$0xf] %vm4987, %v4852
        %5110 = vst.msk [vmem:[%s163 + $0x1e8] sm:$0xf] %vm4987, %v4853
        %5111 = vst.msk [vmem:[%s163 + $0x1ec] sm:$0xf] %vm4987, %v4854
        %5112 = vst.msk [vmem:[%s163 + $0x1f0] sm:$0xf] %vm4987, %v4855
        %5113 = vst.msk [vmem:[%s163 + $0x1f4] sm:$0xf] %vm4987, %v4856
        %5114 = vst.msk [vmem:[%s163 + $0x1f8] sm:$0xf] %vm4987, %v4857
        %5115 = vst.msk [vmem:[%s163 + $0x1fc] sm:$0xf] %vm4987, %v4858
        %s5116 = sand.u32 %s93, 1
        %s5117 = scalar_lea.sflag [#allocation3], %s5116
        %s5118 = sand.u32 %s93, 1
        %s5119 = smul.addr %s5118, 512
        %s5120 = scalar_lea.vmem [#allocation2], %s5119
        // Predicated region
        $region33: #{tpu_custom_call.1} parent=31 // pred_check
          %p5121 = pneg %p103
        $region34: #{tpu_custom_call.1} parent=31 // pred_check_branch
          %5123 = sbr.rel (%p5121) target = $region36
        $region35: #{tpu_custom_call.1} parent=31 // pred_region
          %s5125 = ssub.s32 8192, 8192
          %5126 = vsyncadd %s5117, %s5125
          %s5127 = smul.addr %s17, 128
          %s5128 = smul.addr %s5127, 64
          %s5129 = scalar_lea.hbm %s3, %s5128
          %s5130 = sshll.u32 %s5120, 4
          %s5131 = int_to_ptr.vmem [resolvable:$true] %s5130
          %5136 = dma.vmem_to_hbm [thread:$0]  %s5131, 8192, %s5129, %s5117, 64, 64, 4
        $region36: #{tpu_custom_call.1} parent=31 // pred_fallthru
          _
      $region32: #{tpu_custom_call.1} parent=5 // pred_fallthru
        _
      %p5137 = scmp.le.s32.totalorder 2, %s12
      // Predicated region
      $region37: #{tpu_custom_call.1} parent=5 // pred_check
        %p5138 = pneg %p5137
      $region38: #{tpu_custom_call.1} parent=5 // pred_check_branch
        %5140 = sbr.rel (%p5138) target = $region40
      $region39: #{tpu_custom_call.1} parent=5 // pred_region
        %s5141 = ssub.s32 %s12, 2
        // Predicated region
        $region41: #{tpu_custom_call.1} parent=39 // pred_check
          %p5142 = pneg %p109
        $region42: #{tpu_custom_call.1} parent=39 // pred_check_branch
          %5144 = sbr.rel (%p5142) target = $region44
        $region43: #{tpu_custom_call.1} parent=39 // pred_region
          %s5145 = sand.u32 %s94, 1
          %s5146 = scalar_lea.sflag [#allocation3], %s5145
          %s5147 = sand.u32 %s94, 1
          %s5148 = smul.addr %s5147, 512
          %s5149 = scalar_lea.vmem [#allocation2], %s5148
          %5150 = dma.done %s5146, 8192
        $region44: #{tpu_custom_call.1} parent=39 // pred_fallthru
          _
      $region40: #{tpu_custom_call.1} parent=5 // pred_fallthru
        _
    $region6: #{tpu_custom_call.1} parent=1 // loop_footer
      %s16 = sadd.s32 1, %s12
    $region7: #{tpu_custom_call.1} parent=1 // loop_footer_branch
      %11 = sbr.rel target = $region3
    $region8: #{tpu_custom_call.1} parent=1 // loop_exit
      _
    %5151 = vsyncpa [#allocation3], 1
    %s5152 = scalar_lea.sflag [#allocation3], 1
    %5153 = vsyncpa %s5152, 1

</llo_original>
